<compile_context>
chip_gen: v7x
topology: tpu7x:2x2x1
jax: 0.10.0
libtpu: 0.0.40
codegen_flags: <defaults>
</compile_context>

<pallas_src>
import functools

import jax
import jax.numpy as jnp
from jax.experimental import pallas as pl
from jax.experimental.pallas import tpu as pltpu

NUM_CLASSES = 3
C_PAD = 8          # classes padded to a sublane multiple for aligned stores
BN_EPS = 1e-5


def _mm(w_ref, h):
    """MXU matmul (Cout, Cin) @ (Cin, TN): bf16 inputs, f32 accumulation."""
    w = w_ref[...]
    return jnp.dot(w, h.astype(w.dtype), preferred_element_type=jnp.float32)


def _lin_relu(w_ref, b_ref, h):
    return jnp.maximum(_mm(w_ref, h) + b_ref[...], 0.0)


# --------------------------- pass A: global max pool --------------------------
def pool_kernel(x_ref, w1_ref, b1_ref, w2_ref, b2_ref, w3_ref, b3_ref, g_ref):
    t = pl.program_id(1)

    @pl.when(t == 0)
    def _():
        # running-max accumulator lives in the resident output block
        g_ref[...] = jnp.full(g_ref.shape, -jnp.inf, dtype=g_ref.dtype)

    x = x_ref[...]                                     # (3, TN) f32
    x1 = _lin_relu(w1_ref, b1_ref, x)                  # (64, TN)
    x2 = _lin_relu(w2_ref, b2_ref, x1)                 # (128, TN)
    x3 = _lin_relu(w3_ref, b3_ref, x2)                 # (1024, TN)

    g_ref[...] = jnp.maximum(g_ref[...], jnp.max(x3, axis=1, keepdims=True))


# ----------------------- pass B: per-point segmentation head ------------------
def seg_kernel(x_ref, gv_ref, w1_ref, b1_ref, w4a_ref,
               w5_ref, b5_ref, w6_ref, b6_ref, w7_ref, b7_ref, out_ref):
    x = x_ref[...]                                     # (3, TN)
    x1 = _lin_relu(w1_ref, b1_ref, x)                  # (64, TN)   recomputed, ~free
    # conv4(concat([x1, g])) == W4a @ x1 + gv   with  gv = W4b @ g + b4 (precomputed)
    x4 = jnp.maximum(_mm(w4a_ref, x1) + gv_ref[...], 0.0)   # (512, TN)
    x5 = _lin_relu(w5_ref, b5_ref, x4)                 # (256, TN)
    x6 = _lin_relu(w6_ref, b6_ref, x5)                 # (128, TN)
    out = _mm(w7_ref, x6) + b7_ref[...]                # (C_PAD, TN)
    out_ref[...] = out.astype(out_ref.dtype)


def pointnet_seg_forward(x_bcn, params, *, tn=512):
    """x_bcn: (B, 3, N) float32.  Returns (B, NUM_CLASSES, N) float32."""
    B, C, N = x_bcn.shape
    assert C == 3
    tn = min(tn, N)
    # TODO(synk): ragged N (pad points + mask them out of the max) is not handled;
    # N must be an exact multiple of the point tile.
    assert N % tn == 0, (N, tn)
    assert tn == N or tn % 128 == 0, tn
    nt = N // tn
    p = params

    def wspec(name):
        return pl.BlockSpec(p[name].shape, lambda b, t: (0, 0))

    # ---- pass A: g[b, c] = max_n relu(bn3(conv3(...)))  ->  (B, 1024, 1) -----
    g = pl.pallas_call(
        pool_kernel,
        out_shape=jax.ShapeDtypeStruct((B, 1024, 1), jnp.float32),
        grid_spec=pltpu.PrefetchScalarGridSpec(
            num_scalar_prefetch=0,
            grid=(B, nt),
            in_specs=[pl.BlockSpec((None, 3, tn), lambda b, t: (b, 0, t)),
                      wspec('w1'), wspec('b1'), wspec('w2'), wspec('b2'),
                      wspec('w3'), wspec('b3')],
            out_specs=pl.BlockSpec((None, 1024, 1), lambda b, t: (b, 0, 0)),
        ),
        compiler_params=pltpu.CompilerParams(
            dimension_semantics=("parallel", "arbitrary")),
    )(x_bcn, p['w1'], p['b1'], p['w2'], p['b2'], p['w3'], p['b3'])

    # g-branch of conv4, hoisted out of the per-tile loop: one tiny matvec per
    # batch element, done in XLA between the two kernels.
    gv = jnp.einsum('oc,bcx->box', p['w4b'], g,
                    preferred_element_type=jnp.float32) + p['b4']     # (B, 512, 1)

    # ---- pass B: segmentation head, fully parallel over (B, N tiles) ---------
    out_pad = pl.pallas_call(
        seg_kernel,
        out_shape=jax.ShapeDtypeStruct((B, C_PAD, N), jnp.float32),
        grid_spec=pltpu.PrefetchScalarGridSpec(
            num_scalar_prefetch=0,
            grid=(B, nt),
            in_specs=[pl.BlockSpec((None, 3, tn), lambda b, t: (b, 0, t)),
                      pl.BlockSpec((None, 512, 1), lambda b, t: (b, 0, 0)),
                      wspec('w1'), wspec('b1'), wspec('w4a'),
                      wspec('w5'), wspec('b5'), wspec('w6'), wspec('b6'),
                      wspec('w7'), wspec('b7')],
            out_specs=pl.BlockSpec((None, C_PAD, tn), lambda b, t: (b, 0, t)),
        ),
        compiler_params=pltpu.CompilerParams(
            dimension_semantics=("parallel", "parallel")),
    )(x_bcn, gv, p['w1'], p['b1'], p['w4a'], p['w5'], p['b5'],
      p['w6'], p['b6'], p['w7'], p['b7'])

    return out_pad[:, :NUM_CLASSES, :]


# ------------------------------------------------------------------------------
# Deterministic parameter construction (synthetic weights, eval-mode BN folded).
# ------------------------------------------------------------------------------
def make_params(key):
    dims = [(3, 64), (64, 128), (128, 1024), (1088, 512),
            (512, 256), (256, 128), (128, NUM_CLASSES)]
    keys = jax.random.split(key, len(dims) * 6)
    folded = []
    ki = 0
    for li, (cin, cout) in enumerate(dims):
        w = jax.random.normal(keys[ki], (cout, cin), jnp.float32) * 0.05; ki += 1
        b = jax.random.normal(keys[ki], (cout,), jnp.float32) * 0.05;     ki += 1
        if li < 6:  # conv1..conv6 are followed by BatchNorm1d (eval mode)
            gamma = 0.5 + jax.random.uniform(keys[ki], (cout,), jnp.float32); ki += 1
            beta = jax.random.normal(keys[ki], (cout,), jnp.float32) * 0.1;  ki += 1
            mean = jax.random.normal(keys[ki], (cout,), jnp.float32) * 0.1;  ki += 1
            var = 0.5 + jax.random.uniform(keys[ki], (cout,), jnp.float32);  ki += 1
            scale = gamma / jnp.sqrt(var + BN_EPS)
            w_eff = w * scale[:, None]
            b_eff = scale * (b - mean) + beta
        else:       # conv7: no BatchNorm
            ki += 4
            w_eff, b_eff = w, b
        folded.append((w_eff.astype(jnp.float32), b_eff[:, None].astype(jnp.float32)))

    (w1, b1), (w2, b2), (w3, b3), (w4, b4), (w5, b5), (w6, b6), (w7, b7) = folded
    # conv4 acts on concat([x1, g]): first 64 input channels -> x1, rest -> g
    w4a, w4b = w4[:, :64], w4[:, 64:]
    # pad the class dim to a sublane multiple (aligned final matmul + dense store)
    w7p = jnp.zeros((C_PAD, w7.shape[1]), jnp.float32).at[:NUM_CLASSES].set(w7)
    b7p = jnp.zeros((C_PAD, 1), jnp.float32).at[:NUM_CLASSES].set(b7)

    bf16 = jnp.bfloat16
    return dict(
        w1=w1.astype(bf16), b1=b1,
        w2=w2.astype(bf16), b2=b2,
        w3=w3.astype(bf16), b3=b3,
        w4a=w4a.astype(bf16), w4b=w4b, b4=b4,   # w4b stays f32 (used outside kernel)
        w5=w5.astype(bf16), b5=b5,
        w6=w6.astype(bf16), b6=b6,
        w7=w7p.astype(bf16), b7=b7p,
    )


def reference_forward(x_bcn, params):
    """Pure-JAX reference with the same bf16-matmul / f32-accumulate math."""
    p = params
    r = jax.nn.relu

    def mm(w, h):
        return jnp.einsum('oc,bcn->bon', w, h.astype(w.dtype),
                          preferred_element_type=jnp.float32)

    x1 = r(mm(p['w1'], x_bcn) + p['b1'])
    x2 = r(mm(p['w2'], x1) + p['b2'])
    x3 = r(mm(p['w3'], x2) + p['b3'])
    g = jnp.max(x3, axis=2, keepdims=True)                         # (B, 1024, 1)
    gv = jnp.einsum('oc,bcx->box', p['w4b'], g,
                    preferred_element_type=jnp.float32) + p['b4']  # (B, 512, 1)
    x4 = r(mm(p['w4a'], x1) + gv)
    x5 = r(mm(p['w5'], x4) + p['b5'])
    x6 = r(mm(p['w6'], x5) + p['b6'])
    out = mm(p['w7'], x6) + p['b7']                                # (B, C_PAD, N)
    return out[:, :NUM_CLASSES, :]


if __name__ == "__main__":
    key = jax.random.PRNGKey(0)
    k_x, k_p = jax.random.split(key)

    B, N, TN = 2, 512, 128          # 4 point tiles per batch element
    x = jax.random.normal(k_x, (B, 3, N), jnp.float32)
    params = make_params(k_p)

    fwd = jax.jit(functools.partial(pointnet_seg_forward, tn=TN))
    out = jax.block_until_ready(fwd(x, params))
    assert out.shape == (B, NUM_CLASSES, N), out.shape

    ref = reference_forward(x, params)
    err = float(jnp.max(jnp.abs(out - ref)))
    assert jnp.allclose(out, ref, atol=2e-2, rtol=2e-2), err
    print("KERNEL_OK")
</pallas_src>

<mosaic_0001>
module attributes {stable_mosaic.version = 11 : i64} {
  func.func @seg_kernel(%arg0: i32, %arg1: i32, %arg2: memref<1x3x128xf32, #tpu.memory_space<vmem>>, %arg3: memref<1x512x1xf32, #tpu.memory_space<vmem>>, %arg4: memref<64x3xbf16, #tpu.memory_space<vmem>>, %arg5: memref<64x1xf32, #tpu.memory_space<vmem>>, %arg6: memref<512x64xbf16, #tpu.memory_space<vmem>>, %arg7: memref<256x512xbf16, #tpu.memory_space<vmem>>, %arg8: memref<256x1xf32, #tpu.memory_space<vmem>>, %arg9: memref<128x256xbf16, #tpu.memory_space<vmem>>, %arg10: memref<128x1xf32, #tpu.memory_space<vmem>>, %arg11: memref<8x128xbf16, #tpu.memory_space<vmem>>, %arg12: memref<8x1xf32, #tpu.memory_space<vmem>>, %arg13: memref<1x8x128xf32, #tpu.memory_space<vmem>>) attributes {dimension_semantics = [#tpu.dimension_semantics<parallel>, #tpu.dimension_semantics<parallel>], iteration_bounds = array<i64: 2, 4>, scalar_prefetch = 0 : i64, scratch_operands = 0 : i64, tpu.core_type = #tpu.core_type<tc>, window_params = [{transform_indices = @transform_0, window_bounds = array<i64: 1, 3, 128>}, {transform_indices = @transform_1, window_bounds = array<i64: 1, 512, 1>}, {pipeline_mode = #tpu.pipeline_mode<synchronous>, transform_indices = @transform_2, window_bounds = array<i64: 64, 3>}, {pipeline_mode = #tpu.pipeline_mode<synchronous>, transform_indices = @transform_3, window_bounds = array<i64: 64, 1>}, {pipeline_mode = #tpu.pipeline_mode<synchronous>, transform_indices = @transform_4, window_bounds = array<i64: 512, 64>}, {pipeline_mode = #tpu.pipeline_mode<synchronous>, transform_indices = @transform_5, window_bounds = array<i64: 256, 512>}, {pipeline_mode = #tpu.pipeline_mode<synchronous>, transform_indices = @transform_6, window_bounds = array<i64: 256, 1>}, {pipeline_mode = #tpu.pipeline_mode<synchronous>, transform_indices = @transform_7, window_bounds = array<i64: 128, 256>}, {pipeline_mode = #tpu.pipeline_mode<synchronous>, transform_indices = @transform_8, window_bounds = array<i64: 128, 1>}, {pipeline_mode = #tpu.pipeline_mode<synchronous>, transform_indices = @transform_9, window_bounds = array<i64: 8, 128>}, {pipeline_mode = #tpu.pipeline_mode<synchronous>, transform_indices = @transform_10, window_bounds = array<i64: 8, 1>}, {transform_indices = @transform_11, window_bounds = array<i64: 1, 8, 128>}]} {
    %c0 = arith.constant 0 : index
    %c0_0 = arith.constant 0 : index
    %c0_1 = arith.constant 0 : index
    %0 = vector.load %arg2[%c0, %c0_0, %c0_1] : memref<1x3x128xf32, #tpu.memory_space<vmem>>, vector<1x3x128xf32>
    %1 = vector.shape_cast %0 : vector<1x3x128xf32> to vector<3x128xf32>
    %c0_2 = arith.constant 0 : index
    %c0_3 = arith.constant 0 : index
    %2 = vector.load %arg4[%c0_2, %c0_3] : memref<64x3xbf16, #tpu.memory_space<vmem>>, vector<64x3xbf16>
    %3 = arith.truncf %1 : vector<3x128xf32> to vector<3x128xbf16>
    %cst = arith.constant dense<0.000000e+00> : vector<64x128xf32>
    %4 = tpu.matmul %2, %3, %cst {dimension_numbers = #tpu.dot_dimension_numbers<[1], [0], [0], [1], [0, 0, 1, 1], [], []>} : vector<64x3xbf16>, vector<3x128xbf16>, vector<64x128xf32> -> vector<64x128xf32>
    %c0_4 = arith.constant 0 : index
    %c0_5 = arith.constant 0 : index
    %5 = vector.load %arg5[%c0_4, %c0_5] : memref<64x1xf32, #tpu.memory_space<vmem>>, vector<64x1xf32>
    %6 = vector.broadcast %5 : vector<64x1xf32> to vector<64x128xf32>
    %7 = arith.addf %4, %6 : vector<64x128xf32>
    %cst_6 = arith.constant 0.000000e+00 : f32
    %8 = vector.broadcast %cst_6 : f32 to vector<64x128xf32>
    %9 = arith.maximumf %7, %8 : vector<64x128xf32>
    %c0_7 = arith.constant 0 : index
    %c0_8 = arith.constant 0 : index
    %10 = vector.load %arg6[%c0_7, %c0_8] : memref<512x64xbf16, #tpu.memory_space<vmem>>, vector<512x64xbf16>
    %11 = arith.truncf %9 : vector<64x128xf32> to vector<64x128xbf16>
    %cst_9 = arith.constant dense<0.000000e+00> : vector<512x128xf32>
    %12 = tpu.matmul %10, %11, %cst_9 {dimension_numbers = #tpu.dot_dimension_numbers<[1], [0], [0], [1], [0, 0, 1, 1], [], []>} : vector<512x64xbf16>, vector<64x128xbf16>, vector<512x128xf32> -> vector<512x128xf32>
    %c0_10 = arith.constant 0 : index
    %c0_11 = arith.constant 0 : index
    %c0_12 = arith.constant 0 : index
    %13 = vector.load %arg3[%c0_10, %c0_11, %c0_12] : memref<1x512x1xf32, #tpu.memory_space<vmem>>, vector<1x512x1xf32>
    %14 = vector.shape_cast %13 : vector<1x512x1xf32> to vector<512x1xf32>
    %15 = vector.broadcast %14 : vector<512x1xf32> to vector<512x128xf32>
    %16 = arith.addf %12, %15 : vector<512x128xf32>
    %cst_13 = arith.constant 0.000000e+00 : f32
    %17 = vector.broadcast %cst_13 : f32 to vector<512x128xf32>
    %18 = arith.maximumf %16, %17 : vector<512x128xf32>
    %c0_14 = arith.constant 0 : index
    %c0_15 = arith.constant 0 : index
    %19 = vector.load %arg7[%c0_14, %c0_15] : memref<256x512xbf16, #tpu.memory_space<vmem>>, vector<256x512xbf16>
    %20 = arith.truncf %18 : vector<512x128xf32> to vector<512x128xbf16>
    %cst_16 = arith.constant dense<0.000000e+00> : vector<256x128xf32>
    %21 = tpu.matmul %19, %20, %cst_16 {dimension_numbers = #tpu.dot_dimension_numbers<[1], [0], [0], [1], [0, 0, 1, 1], [], []>} : vector<256x512xbf16>, vector<512x128xbf16>, vector<256x128xf32> -> vector<256x128xf32>
    %c0_17 = arith.constant 0 : index
    %c0_18 = arith.constant 0 : index
    %22 = vector.load %arg8[%c0_17, %c0_18] : memref<256x1xf32, #tpu.memory_space<vmem>>, vector<256x1xf32>
    %23 = vector.broadcast %22 : vector<256x1xf32> to vector<256x128xf32>
    %24 = arith.addf %21, %23 : vector<256x128xf32>
    %cst_19 = arith.constant 0.000000e+00 : f32
    %25 = vector.broadcast %cst_19 : f32 to vector<256x128xf32>
    %26 = arith.maximumf %24, %25 : vector<256x128xf32>
    %c0_20 = arith.constant 0 : index
    %c0_21 = arith.constant 0 : index
    %27 = vector.load %arg9[%c0_20, %c0_21] : memref<128x256xbf16, #tpu.memory_space<vmem>>, vector<128x256xbf16>
    %28 = arith.truncf %26 : vector<256x128xf32> to vector<256x128xbf16>
    %cst_22 = arith.constant dense<0.000000e+00> : vector<128x128xf32>
    %29 = tpu.matmul %27, %28, %cst_22 {dimension_numbers = #tpu.dot_dimension_numbers<[1], [0], [0], [1], [0, 0, 1, 1], [], []>} : vector<128x256xbf16>, vector<256x128xbf16>, vector<128x128xf32> -> vector<128x128xf32>
    %c0_23 = arith.constant 0 : index
    %c0_24 = arith.constant 0 : index
    %30 = vector.load %arg10[%c0_23, %c0_24] : memref<128x1xf32, #tpu.memory_space<vmem>>, vector<128x1xf32>
    %31 = vector.broadcast %30 : vector<128x1xf32> to vector<128x128xf32>
    %32 = arith.addf %29, %31 : vector<128x128xf32>
    %cst_25 = arith.constant 0.000000e+00 : f32
    %33 = vector.broadcast %cst_25 : f32 to vector<128x128xf32>
    %34 = arith.maximumf %32, %33 : vector<128x128xf32>
    %c0_26 = arith.constant 0 : index
    %c0_27 = arith.constant 0 : index
    %35 = vector.load %arg11[%c0_26, %c0_27] : memref<8x128xbf16, #tpu.memory_space<vmem>>, vector<8x128xbf16>
    %36 = arith.truncf %34 : vector<128x128xf32> to vector<128x128xbf16>
    %cst_28 = arith.constant dense<0.000000e+00> : vector<8x128xf32>
    %37 = tpu.matmul %35, %36, %cst_28 {dimension_numbers = #tpu.dot_dimension_numbers<[1], [0], [0], [1], [0, 0, 1, 1], [], []>} : vector<8x128xbf16>, vector<128x128xbf16>, vector<8x128xf32> -> vector<8x128xf32>
    %c0_29 = arith.constant 0 : index
    %c0_30 = arith.constant 0 : index
    %38 = vector.load %arg12[%c0_29, %c0_30] : memref<8x1xf32, #tpu.memory_space<vmem>>, vector<8x1xf32>
    %39 = vector.broadcast %38 : vector<8x1xf32> to vector<8x128xf32>
    %40 = arith.addf %37, %39 : vector<8x128xf32>
    %c0_31 = arith.constant 0 : index
    %c0_32 = arith.constant 0 : index
    %c0_33 = arith.constant 0 : index
    %41 = vector.load %arg13[%c0_31, %c0_32, %c0_33] : memref<1x8x128xf32, #tpu.memory_space<vmem>>, vector<1x8x128xf32>
    %42 = vector.shape_cast %41 : vector<1x8x128xf32> to vector<8x128xf32>
    %43 = vector.shape_cast %40 : vector<8x128xf32> to vector<1x8x128xf32>
    tpu.vector_store %arg13[%c0_31, %c0_32, %c0_33], %43 {strides = array<i32>} : memref<1x8x128xf32, #tpu.memory_space<vmem>>, vector<1x8x128xf32>,
    return
  }
  func.func @transform_0(%arg0: i32, %arg1: i32) -> (i32, i32, i32) {
    %c0_i32 = arith.constant 0 : i32
    %c0_i32_0 = arith.constant 0 : i32
    return %arg0, %c0_i32, %arg1 : i32, i32, i32
  }
  func.func @transform_1(%arg0: i32, %arg1: i32) -> (i32, i32, i32) {
    %c0_i32 = arith.constant 0 : i32
    %c0_i32_0 = arith.constant 0 : i32
    %c0_i32_1 = arith.constant 0 : i32
    return %arg0, %c0_i32, %c0_i32_0 : i32, i32, i32
  }
  func.func @transform_2(%arg0: i32, %arg1: i32) -> (i32, i32) {
    %c0_i32 = arith.constant 0 : i32
    %c0_i32_0 = arith.constant 0 : i32
    %c0_i32_1 = arith.constant 0 : i32
    return %c0_i32, %c0_i32_0 : i32, i32
  }
  func.func @transform_3(%arg0: i32, %arg1: i32) -> (i32, i32) {
    %c0_i32 = arith.constant 0 : i32
    %c0_i32_0 = arith.constant 0 : i32
    %c0_i32_1 = arith.constant 0 : i32
    return %c0_i32, %c0_i32_0 : i32, i32
  }
  func.func @transform_4(%arg0: i32, %arg1: i32) -> (i32, i32) {
    %c0_i32 = arith.constant 0 : i32
    %c0_i32_0 = arith.constant 0 : i32
    %c0_i32_1 = arith.constant 0 : i32
    return %c0_i32, %c0_i32_0 : i32, i32
  }
  func.func @transform_5(%arg0: i32, %arg1: i32) -> (i32, i32) {
    %c0_i32 = arith.constant 0 : i32
    %c0_i32_0 = arith.constant 0 : i32
    %c0_i32_1 = arith.constant 0 : i32
    return %c0_i32, %c0_i32_0 : i32, i32
  }
  func.func @transform_6(%arg0: i32, %arg1: i32) -> (i32, i32) {
    %c0_i32 = arith.constant 0 : i32
    %c0_i32_0 = arith.constant 0 : i32
    %c0_i32_1 = arith.constant 0 : i32
    return %c0_i32, %c0_i32_0 : i32, i32
  }
  func.func @transform_7(%arg0: i32, %arg1: i32) -> (i32, i32) {
    %c0_i32 = arith.constant 0 : i32
    %c0_i32_0 = arith.constant 0 : i32
    %c0_i32_1 = arith.constant 0 : i32
    return %c0_i32, %c0_i32_0 : i32, i32
  }
  func.func @transform_8(%arg0: i32, %arg1: i32) -> (i32, i32) {
    %c0_i32 = arith.constant 0 : i32
    %c0_i32_0 = arith.constant 0 : i32
    %c0_i32_1 = arith.constant 0 : i32
    return %c0_i32, %c0_i32_0 : i32, i32
  }
  func.func @transform_9(%arg0: i32, %arg1: i32) -> (i32, i32) {
    %c0_i32 = arith.constant 0 : i32
    %c0_i32_0 = arith.constant 0 : i32
    %c0_i32_1 = arith.constant 0 : i32
    return %c0_i32, %c0_i32_0 : i32, i32
  }
  func.func @transform_10(%arg0: i32, %arg1: i32) -> (i32, i32) {
    %c0_i32 = arith.constant 0 : i32
    %c0_i32_0 = arith.constant 0 : i32
    %c0_i32_1 = arith.constant 0 : i32
    return %c0_i32, %c0_i32_0 : i32, i32
  }
  func.func @transform_11(%arg0: i32, %arg1: i32) -> (i32, i32, i32) {
    %c0_i32 = arith.constant 0 : i32
    %c0_i32_0 = arith.constant 0 : i32
    return %arg0, %c0_i32, %arg1 : i32, i32, i32
  }
}

module attributes {stable_mosaic.version = 11 : i64} {
  func.func @pool_kernel(%arg0: i32, %arg1: i32, %arg2: memref<1x3x128xf32, #tpu.memory_space<vmem>>, %arg3: memref<64x3xbf16, #tpu.memory_space<vmem>>, %arg4: memref<64x1xf32, #tpu.memory_space<vmem>>, %arg5: memref<128x64xbf16, #tpu.memory_space<vmem>>, %arg6: memref<128x1xf32, #tpu.memory_space<vmem>>, %arg7: memref<1024x128xbf16, #tpu.memory_space<vmem>>, %arg8: memref<1024x1xf32, #tpu.memory_space<vmem>>, %arg9: memref<1x1024x1xf32, #tpu.memory_space<vmem>>) attributes {dimension_semantics = [#tpu.dimension_semantics<parallel>, #tpu.dimension_semantics<arbitrary>], iteration_bounds = array<i64: 2, 4>, scalar_prefetch = 0 : i64, scratch_operands = 0 : i64, tpu.core_type = #tpu.core_type<tc>, window_params = [{transform_indices = @transform_0, window_bounds = array<i64: 1, 3, 128>}, {pipeline_mode = #tpu.pipeline_mode<synchronous>, transform_indices = @transform_1, window_bounds = array<i64: 64, 3>}, {pipeline_mode = #tpu.pipeline_mode<synchronous>, transform_indices = @transform_2, window_bounds = array<i64: 64, 1>}, {pipeline_mode = #tpu.pipeline_mode<synchronous>, transform_indices = @transform_3, window_bounds = array<i64: 128, 64>}, {pipeline_mode = #tpu.pipeline_mode<synchronous>, transform_indices = @transform_4, window_bounds = array<i64: 128, 1>}, {pipeline_mode = #tpu.pipeline_mode<synchronous>, transform_indices = @transform_5, window_bounds = array<i64: 1024, 128>}, {pipeline_mode = #tpu.pipeline_mode<synchronous>, transform_indices = @transform_6, window_bounds = array<i64: 1024, 1>}, {transform_indices = @transform_7, window_bounds = array<i64: 1, 1024, 1>}]} {
    %c0_i32 = arith.constant 0 : i32
    %0 = arith.cmpi eq, %arg1, %c0_i32 : i32
    %1 = arith.extui %0 : i1 to i32
    %c0_i32_0 = arith.constant 0 : i32
    %2 = arith.cmpi ne, %1, %c0_i32_0 : i32
    scf.if %2 {
      %cst_27 = arith.constant 0xFF800000 : f32
      %37 = vector.broadcast %cst_27 : f32 to vector<1024x1xf32>
      %c0_28 = arith.constant 0 : index
      %c0_29 = arith.constant 0 : index
      %c0_30 = arith.constant 0 : index
      %38 = vector.load %arg9[%c0_28, %c0_29, %c0_30] : memref<1x1024x1xf32, #tpu.memory_space<vmem>>, vector<1x1024x1xf32>
      %39 = vector.shape_cast %38 : vector<1x1024x1xf32> to vector<1024x1xf32>
      %40 = vector.shape_cast %37 : vector<1024x1xf32> to vector<1x1024x1xf32>
      tpu.vector_store %arg9[%c0_28, %c0_29, %c0_30], %40 {strides = array<i32>} : memref<1x1024x1xf32, #tpu.memory_space<vmem>>, vector<1x1024x1xf32>,
    } else {
    }
    %c0 = arith.constant 0 : index
    %c0_1 = arith.constant 0 : index
    %c0_2 = arith.constant 0 : index
    %3 = vector.load %arg2[%c0, %c0_1, %c0_2] : memref<1x3x128xf32, #tpu.memory_space<vmem>>, vector<1x3x128xf32>
    %4 = vector.shape_cast %3 : vector<1x3x128xf32> to vector<3x128xf32>
    %c0_3 = arith.constant 0 : index
    %c0_4 = arith.constant 0 : index
    %5 = vector.load %arg3[%c0_3, %c0_4] : memref<64x3xbf16, #tpu.memory_space<vmem>>, vector<64x3xbf16>
    %6 = arith.truncf %4 : vector<3x128xf32> to vector<3x128xbf16>
    %cst = arith.constant dense<0.000000e+00> : vector<64x128xf32>
    %7 = tpu.matmul %5, %6, %cst {dimension_numbers = #tpu.dot_dimension_numbers<[1], [0], [0], [1], [0, 0, 1, 1], [], []>} : vector<64x3xbf16>, vector<3x128xbf16>, vector<64x128xf32> -> vector<64x128xf32>
    %c0_5 = arith.constant 0 : index
    %c0_6 = arith.constant 0 : index
    %8 = vector.load %arg4[%c0_5, %c0_6] : memref<64x1xf32, #tpu.memory_space<vmem>>, vector<64x1xf32>
    %9 = vector.broadcast %8 : vector<64x1xf32> to vector<64x128xf32>
    %10 = arith.addf %7, %9 : vector<64x128xf32>
    %cst_7 = arith.constant 0.000000e+00 : f32
    %11 = vector.broadcast %cst_7 : f32 to vector<64x128xf32>
    %12 = arith.maximumf %10, %11 : vector<64x128xf32>
    %c0_8 = arith.constant 0 : index
    %c0_9 = arith.constant 0 : index
    %13 = vector.load %arg5[%c0_8, %c0_9] : memref<128x64xbf16, #tpu.memory_space<vmem>>, vector<128x64xbf16>
    %14 = arith.truncf %12 : vector<64x128xf32> to vector<64x128xbf16>
    %cst_10 = arith.constant dense<0.000000e+00> : vector<128x128xf32>
    %15 = tpu.matmul %13, %14, %cst_10 {dimension_numbers = #tpu.dot_dimension_numbers<[1], [0], [0], [1], [0, 0, 1, 1], [], []>} : vector<128x64xbf16>, vector<64x128xbf16>, vector<128x128xf32> -> vector<128x128xf32>
    %c0_11 = arith.constant 0 : index
    %c0_12 = arith.constant 0 : index
    %16 = vector.load %arg6[%c0_11, %c0_12] : memref<128x1xf32, #tpu.memory_space<vmem>>, vector<128x1xf32>
    %17 = vector.broadcast %16 : vector<128x1xf32> to vector<128x128xf32>
    %18 = arith.addf %15, %17 : vector<128x128xf32>
    %cst_13 = arith.constant 0.000000e+00 : f32
    %19 = vector.broadcast %cst_13 : f32 to vector<128x128xf32>
    %20 = arith.maximumf %18, %19 : vector<128x128xf32>
    %c0_14 = arith.constant 0 : index
    %c0_15 = arith.constant 0 : index
    %21 = vector.load %arg7[%c0_14, %c0_15] : memref<1024x128xbf16, #tpu.memory_space<vmem>>, vector<1024x128xbf16>
    %22 = arith.truncf %20 : vector<128x128xf32> to vector<128x128xbf16>
    %cst_16 = arith.constant dense<0.000000e+00> : vector<1024x128xf32>
    %23 = tpu.matmul %21, %22, %cst_16 {dimension_numbers = #tpu.dot_dimension_numbers<[1], [0], [0], [1], [0, 0, 1, 1], [], []>} : vector<1024x128xbf16>, vector<128x128xbf16>, vector<1024x128xf32> -> vector<1024x128xf32>
    %c0_17 = arith.constant 0 : index
    %c0_18 = arith.constant 0 : index
    %24 = vector.load %arg8[%c0_17, %c0_18] : memref<1024x1xf32, #tpu.memory_space<vmem>>, vector<1024x1xf32>
    %25 = vector.broadcast %24 : vector<1024x1xf32> to vector<1024x128xf32>
    %26 = arith.addf %23, %25 : vector<1024x128xf32>
    %cst_19 = arith.constant 0.000000e+00 : f32
    %27 = vector.broadcast %cst_19 : f32 to vector<1024x128xf32>
    %28 = arith.maximumf %26, %27 : vector<1024x128xf32>
    %c0_20 = arith.constant 0 : index
    %c0_21 = arith.constant 0 : index
    %c0_22 = arith.constant 0 : index
    %29 = vector.load %arg9[%c0_20, %c0_21, %c0_22] : memref<1x1024x1xf32, #tpu.memory_space<vmem>>, vector<1x1024x1xf32>
    %30 = vector.shape_cast %29 : vector<1x1024x1xf32> to vector<1024x1xf32>
    %cst_23 = arith.constant dense<0xFF800000> : vector<1024xf32>
    %31 = vector.multi_reduction <maximumf>, %28, %cst_23 [1] : vector<1024x128xf32> to vector<1024xf32>
    %32 = vector.shape_cast %31 : vector<1024xf32> to vector<1024x1xf32>
    %33 = arith.maximumf %30, %32 : vector<1024x1xf32>
    %c0_24 = arith.constant 0 : index
    %c0_25 = arith.constant 0 : index
    %c0_26 = arith.constant 0 : index
    %34 = vector.load %arg9[%c0_24, %c0_25, %c0_26] : memref<1x1024x1xf32, #tpu.memory_space<vmem>>, vector<1x1024x1xf32>
    %35 = vector.shape_cast %34 : vector<1x1024x1xf32> to vector<1024x1xf32>
    %36 = vector.shape_cast %33 : vector<1024x1xf32> to vector<1x1024x1xf32>
    tpu.vector_store %arg9[%c0_24, %c0_25, %c0_26], %36 {strides = array<i32>} : memref<1x1024x1xf32, #tpu.memory_space<vmem>>, vector<1x1024x1xf32>,
    return
  }
  func.func @transform_0(%arg0: i32, %arg1: i32) -> (i32, i32, i32) {
    %c0_i32 = arith.constant 0 : i32
    %c0_i32_0 = arith.constant 0 : i32
    return %arg0, %c0_i32, %arg1 : i32, i32, i32
  }
  func.func @transform_1(%arg0: i32, %arg1: i32) -> (i32, i32) {
    %c0_i32 = arith.constant 0 : i32
    %c0_i32_0 = arith.constant 0 : i32
    %c0_i32_1 = arith.constant 0 : i32
    return %c0_i32, %c0_i32_0 : i32, i32
  }
  func.func @transform_2(%arg0: i32, %arg1: i32) -> (i32, i32) {
    %c0_i32 = arith.constant 0 : i32
    %c0_i32_0 = arith.constant 0 : i32
    %c0_i32_1 = arith.constant 0 : i32
    return %c0_i32, %c0_i32_0 : i32, i32
  }
  func.func @transform_3(%arg0: i32, %arg1: i32) -> (i32, i32) {
    %c0_i32 = arith.constant 0 : i32
    %c0_i32_0 = arith.constant 0 : i32
    %c0_i32_1 = arith.constant 0 : i32
    return %c0_i32, %c0_i32_0 : i32, i32
  }
  func.func @transform_4(%arg0: i32, %arg1: i32) -> (i32, i32) {
    %c0_i32 = arith.constant 0 : i32
    %c0_i32_0 = arith.constant 0 : i32
    %c0_i32_1 = arith.constant 0 : i32
    return %c0_i32, %c0_i32_0 : i32, i32
  }
  func.func @transform_5(%arg0: i32, %arg1: i32) -> (i32, i32) {
    %c0_i32 = arith.constant 0 : i32
    %c0_i32_0 = arith.constant 0 : i32
    %c0_i32_1 = arith.constant 0 : i32
    return %c0_i32, %c0_i32_0 : i32, i32
  }
  func.func @transform_6(%arg0: i32, %arg1: i32) -> (i32, i32) {
    %c0_i32 = arith.constant 0 : i32
    %c0_i32_0 = arith.constant 0 : i32
    %c0_i32_1 = arith.constant 0 : i32
    return %c0_i32, %c0_i32_0 : i32, i32
  }
  func.func @transform_7(%arg0: i32, %arg1: i32) -> (i32, i32, i32) {
    %c0_i32 = arith.constant 0 : i32
    %c0_i32_0 = arith.constant 0 : i32
    %c0_i32_1 = arith.constant 0 : i32
    return %arg0, %c0_i32, %c0_i32_0 : i32, i32, i32
  }
}

</mosaic_0001>

<llo_original>
// kernel: pointnet_seg_forward.3
$region0: #{pointnet_seg_forward.3}
  #allocation0 [shape = 'u32[]', space=smem, size = 0x4, offset = 0x4, fixed_abs, tag = 'smem constant byte address 0x4 - core index']
  #allocation1 [shape = 'u32[144,128]{1,0:T(1,128)}', space=vmem, size = 0x12000, scoped, tag = 'internal scratch']
  %s0 = inlined_call_operand.vmem [shape: f32[2,3,512], index: 0, kind: input, shape index: {}]
  %s1 = inlined_call_operand.vmem [shape: f32[2,512,1], index: 1, kind: input, shape index: {}]
  %s2 = inlined_call_operand.vmem [shape: bf16[64,3], index: 2, kind: input, shape index: {}]
  %s3 = inlined_call_operand.vmem [shape: f32[64,1], index: 3, kind: input, shape index: {}]
  %s4 = inlined_call_operand.vmem [shape: bf16[512,64], index: 4, kind: input, shape index: {}]
  %s5 = inlined_call_operand.vmem [shape: bf16[256,512], index: 5, kind: input, shape index: {}]
  %s6 = inlined_call_operand.vmem [shape: f32[256,1], index: 6, kind: input, shape index: {}]
  %s7 = inlined_call_operand.vmem [shape: bf16[128,256], index: 7, kind: input, shape index: {}]
  %s8 = inlined_call_operand.vmem [shape: f32[128,1], index: 8, kind: input, shape index: {}]
  %s9 = inlined_call_operand.vmem [shape: bf16[8,128], index: 9, kind: input, shape index: {}]
  %s10 = inlined_call_operand.vmem [shape: f32[8,1], index: 10, kind: input, shape index: {}]
  %s11 = inlined_call_operand.vmem [shape: f32[2,8,512], index: 11, kind: output, shape index: {}]
  %s12 = sld [smem:[#allocation0]]
  $region77: #{pointnet_seg_forward.3} parent=0
    _
  %s14 = ssub.s32 1, %s12
  %s15 = scalar_select 0, %s14, %s12
  loop: start=0, step=1, limit=10
  $region2: #{pointnet_seg_forward.3} parent=0 // loop_pre_header
    _
  $region3: #{pointnet_seg_forward.3} parent=0 // loop_header
    %s17 = sphi 0, %s21
    %p18 = scmp.ge.s32.totalorder %s17, 10
    %s24 = sphi 0, %s36
    %s25 = sphi 0, %s32
    %s26 = sphi 0, %s24
    %s27 = sphi 0, %s25
    %s28 = sphi 0, %s26
    %s29 = sphi 0, %s27
    %s41 = sphi 0, %s43
    %s44 = sphi 0, %s41
    %s45 = sphi 0, %s44
    %s61 = sphi 0, %s45
    %s67 = sphi 0, %s69
    %s70 = sphi 0, %s67
    %s71 = sphi 0, %s70
    %s87 = sphi 0, %s71
    %s91 = sphi 0, %s91
    %s93 = sphi 0, %s91
    %s94 = sphi 0, %s93
    %s108 = sphi 0, %s94
    %s112 = sphi 0, %s112
    %s114 = sphi 0, %s112
    %s115 = sphi 0, %s114
    %s129 = sphi 0, %s115
    %s133 = sphi 0, %s133
    %s135 = sphi 0, %s133
    %s136 = sphi 0, %s135
    %s150 = sphi 0, %s136
    %s154 = sphi 0, %s154
    %s156 = sphi 0, %s154
    %s157 = sphi 0, %s156
    %s171 = sphi 0, %s157
    %s175 = sphi 0, %s175
    %s177 = sphi 0, %s175
    %s178 = sphi 0, %s177
    %s192 = sphi 0, %s178
    %s196 = sphi 0, %s196
    %s198 = sphi 0, %s196
    %s199 = sphi 0, %s198
    %s213 = sphi 0, %s199
    %s217 = sphi 0, %s217
    %s219 = sphi 0, %s217
    %s220 = sphi 0, %s219
    %s234 = sphi 0, %s220
    %s238 = sphi 0, %s238
    %s240 = sphi 0, %s238
    %s241 = sphi 0, %s240
    %s255 = sphi 0, %s241
    %s259 = sphi 0, %s259
    %s261 = sphi 0, %s259
    %s262 = sphi 0, %s261
    %s276 = sphi 0, %s262
    %s284 = sphi 0, %s286
    %s287 = sphi 0, %s284
    %s288 = sphi 0, %s287
    %s304 = sphi 0, %s288
  $region4: #{pointnet_seg_forward.3} parent=0 // loop_header_branch
    %20 = sbr.rel (%p18) target = $region8
  $region5: #{pointnet_seg_forward.3} parent=0 // loop_body
    %s22 = ssub.s32 %s17, 1
    %s23 = ssub.s32 %s17, 2
    %s30 = sadd.s32 1, %s25
    %p31 = scmp.ge.s32.totalorder %s30, 4
    %s32 = scalar_select %p31, 0, %s30
    %s33 = sadd.s32 1, %s24
    %s34 = scalar_select %p31, %s33, %s24
    %p35 = scmp.ge.s32.totalorder %s34, 2
    %s36 = scalar_select %p35, 0, %s34
    %s37 = ssub.s32 %s24, %s36
    %s38 = ssub.s32 %s25, %s32
    %s39 = sor.u32 %s37, %s38
    %p40 = scmp.eq.s32.totalorder %s39, 0
    %s42 = sadd.s32 %s41, 1
    %s43 = scalar_select %p40, %s41, %s42
    %p46 = pneg %p40
    %p47 = scmp.eq.s32.totalorder %s17, 7
    %p48 = por %p46, %p47
    %p49 = scmp.ne.s32.totalorder %s41, %s44
    %p50 = scmp.eq.s32.totalorder %s17, 0
    %p51 = por %p49, %p50
    %p52 = scmp.ne.s32.totalorder %s41, %s44
    %p53 = scmp.eq.s32.totalorder %s22, 7
    %p54 = por %p52, %p53
    %p55 = scmp.ne.s32.totalorder %s44, %s45
    %p56 = scmp.eq.s32.totalorder %s22, 0
    %p57 = por %p55, %p56
    %p58 = scmp.ne.s32.totalorder %s44, %s45
    %p59 = scmp.eq.s32.totalorder %s23, 7
    %p60 = por %p58, %p59
    %p62 = scmp.ne.s32.totalorder %s45, %s61
    %p63 = scmp.eq.s32.totalorder %s23, 0
    %p64 = por %p62, %p63
    %s65 = ssub.s32 %s24, %s36
    %p66 = scmp.eq.s32.totalorder %s65, 0
    %s68 = sadd.s32 %s67, 1
    %s69 = scalar_select %p66, %s67, %s68
    %p72 = pneg %p66
    %p73 = scmp.eq.s32.totalorder %s17, 7
    %p74 = por %p72, %p73
    %p75 = scmp.ne.s32.totalorder %s67, %s70
    %p76 = scmp.eq.s32.totalorder %s17, 0
    %p77 = por %p75, %p76
    %p78 = scmp.ne.s32.totalorder %s67, %s70
    %p79 = scmp.eq.s32.totalorder %s22, 7
    %p80 = por %p78, %p79
    %p81 = scmp.ne.s32.totalorder %s70, %s71
    %p82 = scmp.eq.s32.totalorder %s22, 0
    %p83 = por %p81, %p82
    %p84 = scmp.ne.s32.totalorder %s70, %s71
    %p85 = scmp.eq.s32.totalorder %s23, 7
    %p86 = por %p84, %p85
    %p88 = scmp.ne.s32.totalorder %s71, %s87
    %p89 = scmp.eq.s32.totalorder %s23, 0
    %p90 = por %p88, %p89
    %s92 = sadd.s32 %s91, 1
    %p95 = scmp.eq.s32.totalorder %s17, 7
    %p96 = scmp.ne.s32.totalorder %s91, %s93
    %p97 = scmp.eq.s32.totalorder %s17, 0
    %p98 = por %p96, %p97
    %p99 = scmp.ne.s32.totalorder %s91, %s93
    %p100 = scmp.eq.s32.totalorder %s22, 7
    %p101 = por %p99, %p100
    %p102 = scmp.ne.s32.totalorder %s93, %s94
    %p103 = scmp.eq.s32.totalorder %s22, 0
    %p104 = por %p102, %p103
    %p105 = scmp.ne.s32.totalorder %s93, %s94
    %p106 = scmp.eq.s32.totalorder %s23, 7
    %p107 = por %p105, %p106
    %p109 = scmp.ne.s32.totalorder %s94, %s108
    %p110 = scmp.eq.s32.totalorder %s23, 0
    %p111 = por %p109, %p110
    %s113 = sadd.s32 %s112, 1
    %p116 = scmp.eq.s32.totalorder %s17, 7
    %p117 = scmp.ne.s32.totalorder %s112, %s114
    %p118 = scmp.eq.s32.totalorder %s17, 0
    %p119 = por %p117, %p118
    %p120 = scmp.ne.s32.totalorder %s112, %s114
    %p121 = scmp.eq.s32.totalorder %s22, 7
    %p122 = por %p120, %p121
    %p123 = scmp.ne.s32.totalorder %s114, %s115
    %p124 = scmp.eq.s32.totalorder %s22, 0
    %p125 = por %p123, %p124
    %p126 = scmp.ne.s32.totalorder %s114, %s115
    %p127 = scmp.eq.s32.totalorder %s23, 7
    %p128 = por %p126, %p127
    %p130 = scmp.ne.s32.totalorder %s115, %s129
    %p131 = scmp.eq.s32.totalorder %s23, 0
    %p132 = por %p130, %p131
    %s134 = sadd.s32 %s133, 1
    %p137 = scmp.eq.s32.totalorder %s17, 7
    %p138 = scmp.ne.s32.totalorder %s133, %s135
    %p139 = scmp.eq.s32.totalorder %s17, 0
    %p140 = por %p138, %p139
    %p141 = scmp.ne.s32.totalorder %s133, %s135
    %p142 = scmp.eq.s32.totalorder %s22, 7
    %p143 = por %p141, %p142
    %p144 = scmp.ne.s32.totalorder %s135, %s136
    %p145 = scmp.eq.s32.totalorder %s22, 0
    %p146 = por %p144, %p145
    %p147 = scmp.ne.s32.totalorder %s135, %s136
    %p148 = scmp.eq.s32.totalorder %s23, 7
    %p149 = por %p147, %p148
    %p151 = scmp.ne.s32.totalorder %s136, %s150
    %p152 = scmp.eq.s32.totalorder %s23, 0
    %p153 = por %p151, %p152
    %s155 = sadd.s32 %s154, 1
    %p158 = scmp.eq.s32.totalorder %s17, 7
    %p159 = scmp.ne.s32.totalorder %s154, %s156
    %p160 = scmp.eq.s32.totalorder %s17, 0
    %p161 = por %p159, %p160
    %p162 = scmp.ne.s32.totalorder %s154, %s156
    %p163 = scmp.eq.s32.totalorder %s22, 7
    %p164 = por %p162, %p163
    %p165 = scmp.ne.s32.totalorder %s156, %s157
    %p166 = scmp.eq.s32.totalorder %s22, 0
    %p167 = por %p165, %p166
    %p168 = scmp.ne.s32.totalorder %s156, %s157
    %p169 = scmp.eq.s32.totalorder %s23, 7
    %p170 = por %p168, %p169
    %p172 = scmp.ne.s32.totalorder %s157, %s171
    %p173 = scmp.eq.s32.totalorder %s23, 0
    %p174 = por %p172, %p173
    %s176 = sadd.s32 %s175, 1
    %p179 = scmp.eq.s32.totalorder %s17, 7
    %p180 = scmp.ne.s32.totalorder %s175, %s177
    %p181 = scmp.eq.s32.totalorder %s17, 0
    %p182 = por %p180, %p181
    %p183 = scmp.ne.s32.totalorder %s175, %s177
    %p184 = scmp.eq.s32.totalorder %s22, 7
    %p185 = por %p183, %p184
    %p186 = scmp.ne.s32.totalorder %s177, %s178
    %p187 = scmp.eq.s32.totalorder %s22, 0
    %p188 = por %p186, %p187
    %p189 = scmp.ne.s32.totalorder %s177, %s178
    %p190 = scmp.eq.s32.totalorder %s23, 7
    %p191 = por %p189, %p190
    %p193 = scmp.ne.s32.totalorder %s178, %s192
    %p194 = scmp.eq.s32.totalorder %s23, 0
    %p195 = por %p193, %p194
    %s197 = sadd.s32 %s196, 1
    %p200 = scmp.eq.s32.totalorder %s17, 7
    %p201 = scmp.ne.s32.totalorder %s196, %s198
    %p202 = scmp.eq.s32.totalorder %s17, 0
    %p203 = por %p201, %p202
    %p204 = scmp.ne.s32.totalorder %s196, %s198
    %p205 = scmp.eq.s32.totalorder %s22, 7
    %p206 = por %p204, %p205
    %p207 = scmp.ne.s32.totalorder %s198, %s199
    %p208 = scmp.eq.s32.totalorder %s22, 0
    %p209 = por %p207, %p208
    %p210 = scmp.ne.s32.totalorder %s198, %s199
    %p211 = scmp.eq.s32.totalorder %s23, 7
    %p212 = por %p210, %p211
    %p214 = scmp.ne.s32.totalorder %s199, %s213
    %p215 = scmp.eq.s32.totalorder %s23, 0
    %p216 = por %p214, %p215
    %s218 = sadd.s32 %s217, 1
    %p221 = scmp.eq.s32.totalorder %s17, 7
    %p222 = scmp.ne.s32.totalorder %s217, %s219
    %p223 = scmp.eq.s32.totalorder %s17, 0
    %p224 = por %p222, %p223
    %p225 = scmp.ne.s32.totalorder %s217, %s219
    %p226 = scmp.eq.s32.totalorder %s22, 7
    %p227 = por %p225, %p226
    %p228 = scmp.ne.s32.totalorder %s219, %s220
    %p229 = scmp.eq.s32.totalorder %s22, 0
    %p230 = por %p228, %p229
    %p231 = scmp.ne.s32.totalorder %s219, %s220
    %p232 = scmp.eq.s32.totalorder %s23, 7
    %p233 = por %p231, %p232
    %p235 = scmp.ne.s32.totalorder %s220, %s234
    %p236 = scmp.eq.s32.totalorder %s23, 0
    %p237 = por %p235, %p236
    %s239 = sadd.s32 %s238, 1
    %p242 = scmp.eq.s32.totalorder %s17, 7
    %p243 = scmp.ne.s32.totalorder %s238, %s240
    %p244 = scmp.eq.s32.totalorder %s17, 0
    %p245 = por %p243, %p244
    %p246 = scmp.ne.s32.totalorder %s238, %s240
    %p247 = scmp.eq.s32.totalorder %s22, 7
    %p248 = por %p246, %p247
    %p249 = scmp.ne.s32.totalorder %s240, %s241
    %p250 = scmp.eq.s32.totalorder %s22, 0
    %p251 = por %p249, %p250
    %p252 = scmp.ne.s32.totalorder %s240, %s241
    %p253 = scmp.eq.s32.totalorder %s23, 7
    %p254 = por %p252, %p253
    %p256 = scmp.ne.s32.totalorder %s241, %s255
    %p257 = scmp.eq.s32.totalorder %s23, 0
    %p258 = por %p256, %p257
    %s260 = sadd.s32 %s259, 1
    %p263 = scmp.eq.s32.totalorder %s17, 7
    %p264 = scmp.ne.s32.totalorder %s259, %s261
    %p265 = scmp.eq.s32.totalorder %s17, 0
    %p266 = por %p264, %p265
    %p267 = scmp.ne.s32.totalorder %s259, %s261
    %p268 = scmp.eq.s32.totalorder %s22, 7
    %p269 = por %p267, %p268
    %p270 = scmp.ne.s32.totalorder %s261, %s262
    %p271 = scmp.eq.s32.totalorder %s22, 0
    %p272 = por %p270, %p271
    %p273 = scmp.ne.s32.totalorder %s261, %s262
    %p274 = scmp.eq.s32.totalorder %s23, 7
    %p275 = por %p273, %p274
    %p277 = scmp.ne.s32.totalorder %s262, %s276
    %p278 = scmp.eq.s32.totalorder %s23, 0
    %p279 = por %p277, %p278
    %s280 = ssub.s32 %s24, %s36
    %s281 = ssub.s32 %s25, %s32
    %s282 = sor.u32 %s280, %s281
    %p283 = scmp.eq.s32.totalorder %s282, 0
    %s285 = sadd.s32 %s284, 1
    %s286 = scalar_select %p283, %s284, %s285
    %p289 = pneg %p283
    %p290 = scmp.eq.s32.totalorder %s17, 7
    %p291 = por %p289, %p290
    %p292 = scmp.ne.s32.totalorder %s284, %s287
    %p293 = scmp.eq.s32.totalorder %s17, 0
    %p294 = por %p292, %p293
    %p295 = scmp.ne.s32.totalorder %s284, %s287
    %p296 = scmp.eq.s32.totalorder %s22, 7
    %p297 = por %p295, %p296
    %p298 = scmp.ne.s32.totalorder %s287, %s288
    %p299 = scmp.eq.s32.totalorder %s22, 0
    %p300 = por %p298, %p299
    %p301 = scmp.ne.s32.totalorder %s287, %s288
    %p302 = scmp.eq.s32.totalorder %s23, 7
    %p303 = por %p301, %p302
    %p305 = scmp.ne.s32.totalorder %s288, %s304
    %p306 = scmp.eq.s32.totalorder %s23, 0
    %p307 = por %p305, %p306
    %p308 = scmp.le.s32.totalorder 1, %s17
    %p309 = scmp.lt.s32.totalorder %s17, 9
    %p310 = pnand %p308, %p309
    %p311 = pneg %p310
    // Predicated region
    $region9: #{pointnet_seg_forward.3} parent=5 // pred_check
      _
    $region10: #{pointnet_seg_forward.3} parent=5 // pred_check_branch
      %313 = sbr.rel (%p310) target = $region12
    $region11: #{pointnet_seg_forward.3} parent=5 // pred_region
      %s314 = ssub.s32 %s17, 1
      // Predicated region
      $region13: #{pointnet_seg_forward.3} parent=11 // pred_check
        %p315 = pneg %p104
      $region14: #{pointnet_seg_forward.3} parent=11 // pred_check_branch
        %317 = sbr.rel (%p315) target = $region16
      $region15: #{pointnet_seg_forward.3} parent=11 // pred_region
        _
      $region16: #{pointnet_seg_forward.3} parent=11 // pred_fallthru
        _
      // Predicated region
      $region17: #{pointnet_seg_forward.3} parent=11 // pred_check
        %p318 = pneg %p125
      $region18: #{pointnet_seg_forward.3} parent=11 // pred_check_branch
        %320 = sbr.rel (%p318) target = $region20
      $region19: #{pointnet_seg_forward.3} parent=11 // pred_region
        _
      $region20: #{pointnet_seg_forward.3} parent=11 // pred_fallthru
        _
      // Predicated region
      $region21: #{pointnet_seg_forward.3} parent=11 // pred_check
        %p321 = pneg %p146
      $region22: #{pointnet_seg_forward.3} parent=11 // pred_check_branch
        %323 = sbr.rel (%p321) target = $region24
      $region23: #{pointnet_seg_forward.3} parent=11 // pred_region
        _
      $region24: #{pointnet_seg_forward.3} parent=11 // pred_fallthru
        _
      // Predicated region
      $region25: #{pointnet_seg_forward.3} parent=11 // pred_check
        %p324 = pneg %p167
      $region26: #{pointnet_seg_forward.3} parent=11 // pred_check_branch
        %326 = sbr.rel (%p324) target = $region28
      $region27: #{pointnet_seg_forward.3} parent=11 // pred_region
        _
      $region28: #{pointnet_seg_forward.3} parent=11 // pred_fallthru
        _
      // Predicated region
      $region29: #{pointnet_seg_forward.3} parent=11 // pred_check
        %p327 = pneg %p188
      $region30: #{pointnet_seg_forward.3} parent=11 // pred_check_branch
        %329 = sbr.rel (%p327) target = $region32
      $region31: #{pointnet_seg_forward.3} parent=11 // pred_region
        _
      $region32: #{pointnet_seg_forward.3} parent=11 // pred_fallthru
        _
      // Predicated region
      $region33: #{pointnet_seg_forward.3} parent=11 // pred_check
        %p330 = pneg %p209
      $region34: #{pointnet_seg_forward.3} parent=11 // pred_check_branch
        %332 = sbr.rel (%p330) target = $region36
      $region35: #{pointnet_seg_forward.3} parent=11 // pred_region
        _
      $region36: #{pointnet_seg_forward.3} parent=11 // pred_fallthru
        _
      // Predicated region
      $region37: #{pointnet_seg_forward.3} parent=11 // pred_check
        %p333 = pneg %p230
      $region38: #{pointnet_seg_forward.3} parent=11 // pred_check_branch
        %335 = sbr.rel (%p333) target = $region40
      $region39: #{pointnet_seg_forward.3} parent=11 // pred_region
        _
      $region40: #{pointnet_seg_forward.3} parent=11 // pred_fallthru
        _
      // Predicated region
      $region41: #{pointnet_seg_forward.3} parent=11 // pred_check
        %p336 = pneg %p251
      $region42: #{pointnet_seg_forward.3} parent=11 // pred_check_branch
        %338 = sbr.rel (%p336) target = $region44
      $region43: #{pointnet_seg_forward.3} parent=11 // pred_region
        _
      $region44: #{pointnet_seg_forward.3} parent=11 // pred_fallthru
        _
      // Predicated region
      $region45: #{pointnet_seg_forward.3} parent=11 // pred_check
        %p339 = pneg %p272
      $region46: #{pointnet_seg_forward.3} parent=11 // pred_check_branch
        %341 = sbr.rel (%p339) target = $region48
      $region47: #{pointnet_seg_forward.3} parent=11 // pred_region
        _
      $region48: #{pointnet_seg_forward.3} parent=11 // pred_fallthru
        _
    $region12: #{pointnet_seg_forward.3} parent=5 // pred_fallthru
      _
    %p342 = scmp.lt.s32.totalorder %s17, 8
    // Predicated region
    $region49: #{pointnet_seg_forward.3} parent=5 // pred_check
      %p343 = pneg %p342
    $region50: #{pointnet_seg_forward.3} parent=5 // pred_check_branch
      %345 = sbr.rel (%p343) target = $region52
    $region51: #{pointnet_seg_forward.3} parent=5 // pred_region
      // Predicated region
      $region53: #{pointnet_seg_forward.3} parent=51 // pred_check
        %p346 = pneg %p51
      $region54: #{pointnet_seg_forward.3} parent=51 // pred_check_branch
        %348 = sbr.rel (%p346) target = $region56
      $region55: #{pointnet_seg_forward.3} parent=51 // pred_region
        %p349 = scmp.lt.s32.totalorder %s24, 1
        %s350 = scalar_select %p349, %s24, 1
        %p351 = scmp.lt.s32.totalorder %s25, 3
        %s352 = scalar_select %p351, %s25, 3
        %s353 = smul.addr %s350, 4
        %s354 = sadd.s32 %s352, %s353
        %s355 = smul.addr %s354, 4
        %s356 = scalar_lea.vmem %s0, %s355
      $region56: #{pointnet_seg_forward.3} parent=51 // pred_fallthru
        _
      // Predicated region
      $region57: #{pointnet_seg_forward.3} parent=51 // pred_check
        %p357 = pneg %p77
      $region58: #{pointnet_seg_forward.3} parent=51 // pred_check_branch
        %359 = sbr.rel (%p357) target = $region60
      $region59: #{pointnet_seg_forward.3} parent=51 // pred_region
        %p360 = scmp.lt.s32.totalorder %s24, 1
        %s361 = scalar_select %p360, %s24, 1
        %s362 = smul.addr %s361, 64
        %s363 = smul.addr %s362, 8
        %s364 = scalar_lea.vmem %s1, %s363
      $region60: #{pointnet_seg_forward.3} parent=51 // pred_fallthru
        _
    $region52: #{pointnet_seg_forward.3} parent=5 // pred_fallthru
      _
    %p365 = scmp.le.s32.totalorder 1, %s17
    %p366 = scmp.lt.s32.totalorder %s17, 9
    %p367 = pnand %p365, %p366
    %p368 = pneg %p367
    // Predicated region
    $region61: #{pointnet_seg_forward.3} parent=5 // pred_check
      _
    $region62: #{pointnet_seg_forward.3} parent=5 // pred_check_branch
      %370 = sbr.rel (%p367) target = $region64
    $region63: #{pointnet_seg_forward.3} parent=5 // pred_region
      %s371 = ssub.s32 %s17, 1
      %p372 = scmp.lt.s32.totalorder %s26, 1
      %s373 = scalar_select %p372, %s26, 1
      %p374 = scmp.lt.s32.totalorder %s27, 3
      %s375 = scalar_select %p374, %s27, 3
      %s376 = smul.addr %s373, 4
      %s377 = sadd.s32 %s375, %s376
      %s378 = smul.addr %s377, 4
      %s379 = scalar_lea.vmem %s0, %s378
      %p380 = pneg %p57
      %p381 = pneg %p54
      %p382 = scmp.lt.s32.totalorder %s26, 1
      %s383 = scalar_select %p382, %s26, 1
      %s384 = smul.addr %s383, 64
      %s385 = smul.addr %s384, 8
      %s386 = scalar_lea.vmem %s1, %s385
      %p387 = pneg %p83
      %p388 = pneg %p80
      %p389 = pneg %p104
      %p390 = pneg %p101
      %p391 = pneg %p125
      %p392 = pneg %p122
      %p393 = pneg %p146
      %p394 = pneg %p143
      %p395 = pneg %p167
      %p396 = pneg %p164
      %p397 = pneg %p188
      %p398 = pneg %p185
      %p399 = pneg %p209
      %p400 = pneg %p206
      %p401 = pneg %p230
      %p402 = pneg %p227
      %p403 = pneg %p251
      %p404 = pneg %p248
      %p405 = pneg %p272
      %p406 = pneg %p269
      %p407 = pneg %p300
      %p408 = pneg %p297
      %p409 = scmp.lt.s32.totalorder %s26, 1
      %s410 = scalar_select %p409, %s26, 1
      %p411 = scmp.lt.s32.totalorder %s27, 3
      %s412 = scalar_select %p411, %s27, 3
      %s413 = smul.addr %s410, 4
      %s414 = sadd.s32 %s412, %s413
      %s415 = smul.addr %s414, 8
      %s416 = scalar_lea.vmem %s11, %s415
      %p417 = scmp.lt.s32.totalorder %s26, 1
      %s418 = scalar_select %p417, %s26, 1
      %p419 = scmp.lt.s32.totalorder %s27, 3
      %s420 = scalar_select %p419, %s27, 3
      %s421 = smul.addr %s418, 4
      %s422 = sadd.s32 %s420, %s421
      %s423 = smul.addr %s422, 4
      %s424 = scalar_lea.vmem %s0, %s423
      %p425 = scmp.lt.s32.totalorder %s26, 1
      %s426 = scalar_select %p425, %s26, 1
      %s427 = smul.addr %s426, 64
      %s428 = smul.addr %s427, 8
      %s429 = scalar_lea.vmem %s1, %s428
      %p430 = scmp.lt.s32.totalorder %s26, 1
      %s431 = scalar_select %p430, %s26, 1
      %p432 = scmp.lt.s32.totalorder %s27, 3
      %s433 = scalar_select %p432, %s27, 3
      %s434 = smul.addr %s431, 4
      %s435 = sadd.s32 %s433, %s434
      %s436 = smul.addr %s435, 8
      %s437 = scalar_lea.vmem %s11, %s436
      %v439 = vld [vmem:[%s424] sm:$0x7]
      %v440 = vld [vmem:[%s2] sm:$0xf]
      %v441 = vld [vmem:[%s2 + $0x4] sm:$0xf]
      %v442 = vld [vmem:[%s2 + $0x8] sm:$0xf]
      %v443 = vld [vmem:[%s2 + $0xc] sm:$0xf]
      %v444 = vld [vmem:[%s2 + $0x10] sm:$0xf]
      %v445 = vld [vmem:[%s2 + $0x14] sm:$0xf]
      %v446 = vld [vmem:[%s2 + $0x18] sm:$0xf]
      %v447 = vld [vmem:[%s2 + $0x1c] sm:$0xf]
      %v448 = vpack.c.bf16 %v439, %v439
      %v449 = vld [vmem:[%s3] sm:$0xff]
      %v450 = vld [vmem:[%s3 + $0x8] sm:$0xff]
      %v451 = vld [vmem:[%s3 + $0x10] sm:$0xff]
      %v452 = vld [vmem:[%s3 + $0x18] sm:$0xff]
      %v453 = vld [vmem:[%s3 + $0x20] sm:$0xff]
      %v454 = vld [vmem:[%s3 + $0x28] sm:$0xff]
      %v455 = vld [vmem:[%s3 + $0x30] sm:$0xff]
      %v456 = vld [vmem:[%s3 + $0x38] sm:$0xff]
      %458 = vset.pattern.permute.xlu0 0
      %459 = vperm.xlu0 %458, %v449
      %v460 = vpop.permute.xlu0 %459
      %463 = vset.pattern.permute.xlu0 0
      %464 = vperm.xlu0 %463, %v450
      %v465 = vpop.permute.xlu0 %464
      %468 = vset.pattern.permute.xlu0 0
      %469 = vperm.xlu0 %468, %v451
      %v470 = vpop.permute.xlu0 %469
      %473 = vset.pattern.permute.xlu0 0
      %474 = vperm.xlu0 %473, %v452
      %v475 = vpop.permute.xlu0 %474
      %478 = vset.pattern.permute.xlu0 0
      %479 = vperm.xlu0 %478, %v453
      %v480 = vpop.permute.xlu0 %479
      %483 = vset.pattern.permute.xlu0 0
      %484 = vperm.xlu0 %483, %v454
      %v485 = vpop.permute.xlu0 %484
      %488 = vset.pattern.permute.xlu0 0
      %489 = vperm.xlu0 %488, %v455
      %v490 = vpop.permute.xlu0 %489
      %493 = vset.pattern.permute.xlu0 0
      %494 = vperm.xlu0 %493, %v456
      %v495 = vpop.permute.xlu0 %494
      %v505 = vunpack.c.l.b16 %v440
      %v506 = vunpack.c.l.b16 %v441
      %v507 = vunpack.c.l.b16 %v442
      %v508 = vunpack.c.l.b16 %v443
      %v509 = vunpack.c.l.b16 %v444
      %v510 = vunpack.c.l.b16 %v445
      %v511 = vunpack.c.l.b16 %v446
      %v512 = vunpack.c.l.b16 %v447
      %v513 = vpack.c.b16 %v506, %v505
      %v514 = vpack.c.b16 %v508, %v507
      %v515 = vpack.c.b16 %v510, %v509
      %v516 = vpack.c.b16 %v512, %v511
      %vm517 = vcmask 23552
      %v519 = vsel %vm517, %v513, 0
      %v522 = vsel %vm517, %v514, 0
      %v525 = vsel %vm517, %v515, 0
      %v528 = vsel %vm517, %v516, 0
      %vm530 = vcmask 1040384
      %vm531 = vcmask 1041408
      %v532 = vsel %vm530, 4294967295, 65535
      %v533 = vsel %vm531, %v532, 0
      %v535 = vand.u32 %v448, %v533
      %537 = vmatprep.subr.bf16.mxu0 0
      %538 = vmatpush1.bf16.msra.mxu0 %v535
      %539 = vmatprep.subr.bf16.mxu0 0
      %540 = vmatpush1.bf16.msra.mxu0 0
      %541 = vmatprep.subr.bf16.mxu0 0
      %542 = vmatpush1.bf16.msra.mxu0 0
      %543 = vmatprep.subr.bf16.mxu0 0
      %544 = vmatpush1.bf16.msra.mxu0 0
      %545 = vmatprep.subr.bf16.mxu0 0
      %546 = vmatpush1.bf16.msra.mxu0 0
      %547 = vmatprep.subr.bf16.mxu0 0
      %548 = vmatpush1.bf16.msra.mxu0 0
      %549 = vmatprep.subr.bf16.mxu0 0
      %550 = vmatpush1.bf16.msra.mxu0 0
      %551 = vmatprep.subr.bf16.mxu0 0
      %552 = vmatpush1.bf16.msra.mxu0 0
      %553 = vmatprep.subr.bf16.mxu0 0
      %554 = vmatpush1.bf16.msra.mxu0 0
      %555 = vmatprep.subr.bf16.mxu0 0
      %556 = vmatpush1.bf16.msra.mxu0 0
      %557 = vmatprep.subr.bf16.mxu0 0
      %558 = vmatpush1.bf16.msra.mxu0 0
      %559 = vmatprep.subr.bf16.mxu0 0
      %560 = vmatpush1.bf16.msra.mxu0 0
      %561 = vmatprep.subr.bf16.mxu0 0
      %562 = vmatpush1.bf16.msra.mxu0 0
      %563 = vmatprep.subr.bf16.mxu0 0
      %564 = vmatpush1.bf16.msra.mxu0 0
      %565 = vmatprep.subr.bf16.mxu0 0
      %566 = vmatpush1.bf16.msra.mxu0 0
      %567 = vmatprep.subr.bf16.mxu0 0
      %568 = vmatpush1.bf16.msra.mxu0 0
      %569 = vmatprep.mubr.bf16.mxu0 0
      %570 = vmatmul.mubr.bf16.gmra.mrb[0].mxu0 %v519
      %v571 = vpop.f32.mrb[0].mxu0
      %v572 = vadd.f32 %v460, %v571
      %v573 = vpop.f32.mrb[0].mxu0
      %v574 = vpop.f32.mrb[0].mxu0
      %v575 = vadd.f32 %v465, %v574
      %v576 = vpop.f32.mrb[0].mxu0
      %577 = vmatprep.mubr.bf16.mxu0 0
      %578 = vmatmul.mubr.bf16.gmra.mrb[0].mxu0 %v522
      %v579 = vpop.f32.mrb[0].mxu0
      %v580 = vadd.f32 %v470, %v579
      %v581 = vpop.f32.mrb[0].mxu0
      %v582 = vpop.f32.mrb[0].mxu0
      %v583 = vadd.f32 %v475, %v582
      %v584 = vpop.f32.mrb[0].mxu0
      %585 = vmatprep.mubr.bf16.mxu0 0
      %586 = vmatmul.mubr.bf16.gmra.mrb[0].mxu0 %v525
      %v587 = vpop.f32.mrb[0].mxu0
      %v588 = vadd.f32 %v480, %v587
      %v589 = vpop.f32.mrb[0].mxu0
      %v590 = vpop.f32.mrb[0].mxu0
      %v591 = vadd.f32 %v485, %v590
      %v592 = vpop.f32.mrb[0].mxu0
      %593 = vmatprep.mubr.bf16.mxu0 0
      %594 = vmatmul.mubr.bf16.gmra.mrb[0].mxu0 %v528
      %v595 = vpop.f32.mrb[0].mxu0
      %v596 = vadd.f32 %v490, %v595
      %v597 = vpop.f32.mrb[0].mxu0
      %v598 = vpop.f32.mrb[0].mxu0
      %v599 = vadd.f32 %v495, %v598
      %v600 = vpop.f32.mrb[0].mxu0
      %601 = vdwg.mxu0
      %v602 = vmax.f32 %v572, 0.0
      %v603 = vmax.f32 %v575, 0.0
      %v604 = vmax.f32 %v580, 0.0
      %v605 = vmax.f32 %v583, 0.0
      %v606 = vmax.f32 %v588, 0.0
      %v607 = vmax.f32 %v591, 0.0
      %v608 = vmax.f32 %v596, 0.0
      %v609 = vmax.f32 %v599, 0.0
      %v610 = vld [vmem:[%s4] sm:$0xf]
      %v611 = vld [vmem:[%s4 + $0x4] sm:$0xf]
      %v612 = vld [vmem:[%s4 + $0x8] sm:$0xf]
      %v613 = vld [vmem:[%s4 + $0xc] sm:$0xf]
      %v614 = vld [vmem:[%s4 + $0x10] sm:$0xf]
      %v615 = vld [vmem:[%s4 + $0x14] sm:$0xf]
      %v616 = vld [vmem:[%s4 + $0x18] sm:$0xf]
      %v617 = vld [vmem:[%s4 + $0x1c] sm:$0xf]
      %v618 = vld [vmem:[%s4 + $0x20] sm:$0xf]
      %v619 = vld [vmem:[%s4 + $0x24] sm:$0xf]
      %v620 = vld [vmem:[%s4 + $0x28] sm:$0xf]
      %v621 = vld [vmem:[%s4 + $0x2c] sm:$0xf]
      %v622 = vld [vmem:[%s4 + $0x30] sm:$0xf]
      %v623 = vld [vmem:[%s4 + $0x34] sm:$0xf]
      %v624 = vld [vmem:[%s4 + $0x38] sm:$0xf]
      %v625 = vld [vmem:[%s4 + $0x3c] sm:$0xf]
      %v626 = vld [vmem:[%s4 + $0x40] sm:$0xf]
      %v627 = vld [vmem:[%s4 + $0x44] sm:$0xf]
      %v628 = vld [vmem:[%s4 + $0x48] sm:$0xf]
      %v629 = vld [vmem:[%s4 + $0x4c] sm:$0xf]
      %v630 = vld [vmem:[%s4 + $0x50] sm:$0xf]
      %v631 = vld [vmem:[%s4 + $0x54] sm:$0xf]
      %v632 = vld [vmem:[%s4 + $0x58] sm:$0xf]
      %v633 = vld [vmem:[%s4 + $0x5c] sm:$0xf]
      %v634 = vld [vmem:[%s4 + $0x60] sm:$0xf]
      %v635 = vld [vmem:[%s4 + $0x64] sm:$0xf]
      %v636 = vld [vmem:[%s4 + $0x68] sm:$0xf]
      %v637 = vld [vmem:[%s4 + $0x6c] sm:$0xf]
      %v638 = vld [vmem:[%s4 + $0x70] sm:$0xf]
      %v639 = vld [vmem:[%s4 + $0x74] sm:$0xf]
      %v640 = vld [vmem:[%s4 + $0x78] sm:$0xf]
      %v641 = vld [vmem:[%s4 + $0x7c] sm:$0xf]
      %v642 = vld [vmem:[%s4 + $0x80] sm:$0xf]
      %v643 = vld [vmem:[%s4 + $0x84] sm:$0xf]
      %v644 = vld [vmem:[%s4 + $0x88] sm:$0xf]
      %v645 = vld [vmem:[%s4 + $0x8c] sm:$0xf]
      %v646 = vld [vmem:[%s4 + $0x90] sm:$0xf]
      %v647 = vld [vmem:[%s4 + $0x94] sm:$0xf]
      %v648 = vld [vmem:[%s4 + $0x98] sm:$0xf]
      %v649 = vld [vmem:[%s4 + $0x9c] sm:$0xf]
      %v650 = vld [vmem:[%s4 + $0xa0] sm:$0xf]
      %v651 = vld [vmem:[%s4 + $0xa4] sm:$0xf]
      %v652 = vld [vmem:[%s4 + $0xa8] sm:$0xf]
      %v653 = vld [vmem:[%s4 + $0xac] sm:$0xf]
      %v654 = vld [vmem:[%s4 + $0xb0] sm:$0xf]
      %v655 = vld [vmem:[%s4 + $0xb4] sm:$0xf]
      %v656 = vld [vmem:[%s4 + $0xb8] sm:$0xf]
      %v657 = vld [vmem:[%s4 + $0xbc] sm:$0xf]
      %v658 = vld [vmem:[%s4 + $0xc0] sm:$0xf]
      %v659 = vld [vmem:[%s4 + $0xc4] sm:$0xf]
      %v660 = vld [vmem:[%s4 + $0xc8] sm:$0xf]
      %v661 = vld [vmem:[%s4 + $0xcc] sm:$0xf]
      %v662 = vld [vmem:[%s4 + $0xd0] sm:$0xf]
      %v663 = vld [vmem:[%s4 + $0xd4] sm:$0xf]
      %v664 = vld [vmem:[%s4 + $0xd8] sm:$0xf]
      %v665 = vld [vmem:[%s4 + $0xdc] sm:$0xf]
      %v666 = vld [vmem:[%s4 + $0xe0] sm:$0xf]
      %v667 = vld [vmem:[%s4 + $0xe4] sm:$0xf]
      %v668 = vld [vmem:[%s4 + $0xe8] sm:$0xf]
      %v669 = vld [vmem:[%s4 + $0xec] sm:$0xf]
      %v670 = vld [vmem:[%s4 + $0xf0] sm:$0xf]
      %v671 = vld [vmem:[%s4 + $0xf4] sm:$0xf]
      %v672 = vld [vmem:[%s4 + $0xf8] sm:$0xf]
      %v673 = vld [vmem:[%s4 + $0xfc] sm:$0xf]
      %v674 = vpack.c.bf16 %v603, %v602
      %v675 = vpack.c.bf16 %v605, %v604
      %v676 = vpack.c.bf16 %v607, %v606
      %v677 = vpack.c.bf16 %v609, %v608
      %v678 = vld [vmem:[%s429] sm:$0xff]
      %v679 = vld [vmem:[%s429 + $0x8] sm:$0xff]
      %v680 = vld [vmem:[%s429 + $0x10] sm:$0xff]
      %v681 = vld [vmem:[%s429 + $0x18] sm:$0xff]
      %v682 = vld [vmem:[%s429 + $0x20] sm:$0xff]
      %v683 = vld [vmem:[%s429 + $0x28] sm:$0xff]
      %v684 = vld [vmem:[%s429 + $0x30] sm:$0xff]
      %v685 = vld [vmem:[%s429 + $0x38] sm:$0xff]
      %v686 = vld [vmem:[%s429 + $0x40] sm:$0xff]
      %v687 = vld [vmem:[%s429 + $0x48] sm:$0xff]
      %v688 = vld [vmem:[%s429 + $0x50] sm:$0xff]
      %v689 = vld [vmem:[%s429 + $0x58] sm:$0xff]
      %v690 = vld [vmem:[%s429 + $0x60] sm:$0xff]
      %v691 = vld [vmem:[%s429 + $0x68] sm:$0xff]
      %v692 = vld [vmem:[%s429 + $0x70] sm:$0xff]
      %v693 = vld [vmem:[%s429 + $0x78] sm:$0xff]
      %v694 = vld [vmem:[%s429 + $0x80] sm:$0xff]
      %v695 = vld [vmem:[%s429 + $0x88] sm:$0xff]
      %v696 = vld [vmem:[%s429 + $0x90] sm:$0xff]
      %v697 = vld [vmem:[%s429 + $0x98] sm:$0xff]
      %v698 = vld [vmem:[%s429 + $0xa0] sm:$0xff]
      %v699 = vld [vmem:[%s429 + $0xa8] sm:$0xff]
      %v700 = vld [vmem:[%s429 + $0xb0] sm:$0xff]
      %v701 = vld [vmem:[%s429 + $0xb8] sm:$0xff]
      %v702 = vld [vmem:[%s429 + $0xc0] sm:$0xff]
      %v703 = vld [vmem:[%s429 + $0xc8] sm:$0xff]
      %v704 = vld [vmem:[%s429 + $0xd0] sm:$0xff]
      %v705 = vld [vmem:[%s429 + $0xd8] sm:$0xff]
      %v706 = vld [vmem:[%s429 + $0xe0] sm:$0xff]
      %v707 = vld [vmem:[%s429 + $0xe8] sm:$0xff]
      %v708 = vld [vmem:[%s429 + $0xf0] sm:$0xff]
      %v709 = vld [vmem:[%s429 + $0xf8] sm:$0xff]
      %v710 = vld [vmem:[%s429 + $0x100] sm:$0xff]
      %v711 = vld [vmem:[%s429 + $0x108] sm:$0xff]
      %v712 = vld [vmem:[%s429 + $0x110] sm:$0xff]
      %v713 = vld [vmem:[%s429 + $0x118] sm:$0xff]
      %v714 = vld [vmem:[%s429 + $0x120] sm:$0xff]
      %v715 = vld [vmem:[%s429 + $0x128] sm:$0xff]
      %v716 = vld [vmem:[%s429 + $0x130] sm:$0xff]
      %v717 = vld [vmem:[%s429 + $0x138] sm:$0xff]
      %v718 = vld [vmem:[%s429 + $0x140] sm:$0xff]
      %v719 = vld [vmem:[%s429 + $0x148] sm:$0xff]
      %v720 = vld [vmem:[%s429 + $0x150] sm:$0xff]
      %v721 = vld [vmem:[%s429 + $0x158] sm:$0xff]
      %v722 = vld [vmem:[%s429 + $0x160] sm:$0xff]
      %v723 = vld [vmem:[%s429 + $0x168] sm:$0xff]
      %v724 = vld [vmem:[%s429 + $0x170] sm:$0xff]
      %v725 = vld [vmem:[%s429 + $0x178] sm:$0xff]
      %v726 = vld [vmem:[%s429 + $0x180] sm:$0xff]
      %v727 = vld [vmem:[%s429 + $0x188] sm:$0xff]
      %v728 = vld [vmem:[%s429 + $0x190] sm:$0xff]
      %v729 = vld [vmem:[%s429 + $0x198] sm:$0xff]
      %v730 = vld [vmem:[%s429 + $0x1a0] sm:$0xff]
      %v731 = vld [vmem:[%s429 + $0x1a8] sm:$0xff]
      %v732 = vld [vmem:[%s429 + $0x1b0] sm:$0xff]
      %v733 = vld [vmem:[%s429 + $0x1b8] sm:$0xff]
      %v734 = vld [vmem:[%s429 + $0x1c0] sm:$0xff]
      %v735 = vld [vmem:[%s429 + $0x1c8] sm:$0xff]
      %v736 = vld [vmem:[%s429 + $0x1d0] sm:$0xff]
      %v737 = vld [vmem:[%s429 + $0x1d8] sm:$0xff]
      %v738 = vld [vmem:[%s429 + $0x1e0] sm:$0xff]
      %v739 = vld [vmem:[%s429 + $0x1e8] sm:$0xff]
      %v740 = vld [vmem:[%s429 + $0x1f0] sm:$0xff]
      %v741 = vld [vmem:[%s429 + $0x1f8] sm:$0xff]
      %743 = vset.pattern.permute.xlu0 0
      %744 = vperm.xlu0 %743, %v678
      %v745 = vpop.permute.xlu0 %744
      %748 = vset.pattern.permute.xlu0 0
      %749 = vperm.xlu0 %748, %v679
      %v750 = vpop.permute.xlu0 %749
      %753 = vset.pattern.permute.xlu0 0
      %754 = vperm.xlu0 %753, %v680
      %v755 = vpop.permute.xlu0 %754
      %758 = vset.pattern.permute.xlu0 0
      %759 = vperm.xlu0 %758, %v681
      %v760 = vpop.permute.xlu0 %759
      %763 = vset.pattern.permute.xlu0 0
      %764 = vperm.xlu0 %763, %v682
      %v765 = vpop.permute.xlu0 %764
      %768 = vset.pattern.permute.xlu0 0
      %769 = vperm.xlu0 %768, %v683
      %v770 = vpop.permute.xlu0 %769
      %773 = vset.pattern.permute.xlu0 0
      %774 = vperm.xlu0 %773, %v684
      %v775 = vpop.permute.xlu0 %774
      %778 = vset.pattern.permute.xlu0 0
      %779 = vperm.xlu0 %778, %v685
      %v780 = vpop.permute.xlu0 %779
      %783 = vset.pattern.permute.xlu0 0
      %784 = vperm.xlu0 %783, %v686
      %v785 = vpop.permute.xlu0 %784
      %788 = vset.pattern.permute.xlu0 0
      %789 = vperm.xlu0 %788, %v687
      %v790 = vpop.permute.xlu0 %789
      %793 = vset.pattern.permute.xlu0 0
      %794 = vperm.xlu0 %793, %v688
      %v795 = vpop.permute.xlu0 %794
      %798 = vset.pattern.permute.xlu0 0
      %799 = vperm.xlu0 %798, %v689
      %v800 = vpop.permute.xlu0 %799
      %803 = vset.pattern.permute.xlu0 0
      %804 = vperm.xlu0 %803, %v690
      %v805 = vpop.permute.xlu0 %804
      %808 = vset.pattern.permute.xlu0 0
      %809 = vperm.xlu0 %808, %v691
      %v810 = vpop.permute.xlu0 %809
      %813 = vset.pattern.permute.xlu0 0
      %814 = vperm.xlu0 %813, %v692
      %v815 = vpop.permute.xlu0 %814
      %818 = vset.pattern.permute.xlu0 0
      %819 = vperm.xlu0 %818, %v693
      %v820 = vpop.permute.xlu0 %819
      %823 = vset.pattern.permute.xlu0 0
      %824 = vperm.xlu0 %823, %v694
      %v825 = vpop.permute.xlu0 %824
      %828 = vset.pattern.permute.xlu0 0
      %829 = vperm.xlu0 %828, %v695
      %v830 = vpop.permute.xlu0 %829
      %833 = vset.pattern.permute.xlu0 0
      %834 = vperm.xlu0 %833, %v696
      %v835 = vpop.permute.xlu0 %834
      %838 = vset.pattern.permute.xlu0 0
      %839 = vperm.xlu0 %838, %v697
      %v840 = vpop.permute.xlu0 %839
      %843 = vset.pattern.permute.xlu0 0
      %844 = vperm.xlu0 %843, %v698
      %v845 = vpop.permute.xlu0 %844
      %848 = vset.pattern.permute.xlu0 0
      %849 = vperm.xlu0 %848, %v699
      %v850 = vpop.permute.xlu0 %849
      %853 = vset.pattern.permute.xlu0 0
      %854 = vperm.xlu0 %853, %v700
      %v855 = vpop.permute.xlu0 %854
      %858 = vset.pattern.permute.xlu0 0
      %859 = vperm.xlu0 %858, %v701
      %v860 = vpop.permute.xlu0 %859
      %863 = vset.pattern.permute.xlu0 0
      %864 = vperm.xlu0 %863, %v702
      %v865 = vpop.permute.xlu0 %864
      %868 = vset.pattern.permute.xlu0 0
      %869 = vperm.xlu0 %868, %v703
      %v870 = vpop.permute.xlu0 %869
      %873 = vset.pattern.permute.xlu0 0
      %874 = vperm.xlu0 %873, %v704
      %v875 = vpop.permute.xlu0 %874
      %878 = vset.pattern.permute.xlu0 0
      %879 = vperm.xlu0 %878, %v705
      %v880 = vpop.permute.xlu0 %879
      %883 = vset.pattern.permute.xlu0 0
      %884 = vperm.xlu0 %883, %v706
      %v885 = vpop.permute.xlu0 %884
      %888 = vset.pattern.permute.xlu0 0
      %889 = vperm.xlu0 %888, %v707
      %v890 = vpop.permute.xlu0 %889
      %893 = vset.pattern.permute.xlu0 0
      %894 = vperm.xlu0 %893, %v708
      %v895 = vpop.permute.xlu0 %894
      %898 = vset.pattern.permute.xlu0 0
      %899 = vperm.xlu0 %898, %v709
      %v900 = vpop.permute.xlu0 %899
      %903 = vset.pattern.permute.xlu0 0
      %904 = vperm.xlu0 %903, %v710
      %v905 = vpop.permute.xlu0 %904
      %908 = vset.pattern.permute.xlu0 0
      %909 = vperm.xlu0 %908, %v711
      %v910 = vpop.permute.xlu0 %909
      %913 = vset.pattern.permute.xlu0 0
      %914 = vperm.xlu0 %913, %v712
      %v915 = vpop.permute.xlu0 %914
      %918 = vset.pattern.permute.xlu0 0
      %919 = vperm.xlu0 %918, %v713
      %v920 = vpop.permute.xlu0 %919
      %923 = vset.pattern.permute.xlu0 0
      %924 = vperm.xlu0 %923, %v714
      %v925 = vpop.permute.xlu0 %924
      %928 = vset.pattern.permute.xlu0 0
      %929 = vperm.xlu0 %928, %v715
      %v930 = vpop.permute.xlu0 %929
      %933 = vset.pattern.permute.xlu0 0
      %934 = vperm.xlu0 %933, %v716
      %v935 = vpop.permute.xlu0 %934
      %938 = vset.pattern.permute.xlu0 0
      %939 = vperm.xlu0 %938, %v717
      %v940 = vpop.permute.xlu0 %939
      %943 = vset.pattern.permute.xlu0 0
      %944 = vperm.xlu0 %943, %v718
      %v945 = vpop.permute.xlu0 %944
      %948 = vset.pattern.permute.xlu0 0
      %949 = vperm.xlu0 %948, %v719
      %v950 = vpop.permute.xlu0 %949
      %953 = vset.pattern.permute.xlu0 0
      %954 = vperm.xlu0 %953, %v720
      %v955 = vpop.permute.xlu0 %954
      %958 = vset.pattern.permute.xlu0 0
      %959 = vperm.xlu0 %958, %v721
      %v960 = vpop.permute.xlu0 %959
      %963 = vset.pattern.permute.xlu0 0
      %964 = vperm.xlu0 %963, %v722
      %v965 = vpop.permute.xlu0 %964
      %968 = vset.pattern.permute.xlu0 0
      %969 = vperm.xlu0 %968, %v723
      %v970 = vpop.permute.xlu0 %969
      %973 = vset.pattern.permute.xlu0 0
      %974 = vperm.xlu0 %973, %v724
      %v975 = vpop.permute.xlu0 %974
      %978 = vset.pattern.permute.xlu0 0
      %979 = vperm.xlu0 %978, %v725
      %v980 = vpop.permute.xlu0 %979
      %983 = vset.pattern.permute.xlu0 0
      %984 = vperm.xlu0 %983, %v726
      %v985 = vpop.permute.xlu0 %984
      %988 = vset.pattern.permute.xlu0 0
      %989 = vperm.xlu0 %988, %v727
      %v990 = vpop.permute.xlu0 %989
      %993 = vset.pattern.permute.xlu0 0
      %994 = vperm.xlu0 %993, %v728
      %v995 = vpop.permute.xlu0 %994
      %998 = vset.pattern.permute.xlu0 0
      %999 = vperm.xlu0 %998, %v729
      %v1000 = vpop.permute.xlu0 %999
      %1003 = vset.pattern.permute.xlu0 0
      %1004 = vperm.xlu0 %1003, %v730
      %v1005 = vpop.permute.xlu0 %1004
      %1008 = vset.pattern.permute.xlu0 0
      %1009 = vperm.xlu0 %1008, %v731
      %v1010 = vpop.permute.xlu0 %1009
      %1013 = vset.pattern.permute.xlu0 0
      %1014 = vperm.xlu0 %1013, %v732
      %v1015 = vpop.permute.xlu0 %1014
      %1018 = vset.pattern.permute.xlu0 0
      %1019 = vperm.xlu0 %1018, %v733
      %v1020 = vpop.permute.xlu0 %1019
      %1023 = vset.pattern.permute.xlu0 0
      %1024 = vperm.xlu0 %1023, %v734
      %v1025 = vpop.permute.xlu0 %1024
      %1028 = vset.pattern.permute.xlu0 0
      %1029 = vperm.xlu0 %1028, %v735
      %v1030 = vpop.permute.xlu0 %1029
      %1033 = vset.pattern.permute.xlu0 0
      %1034 = vperm.xlu0 %1033, %v736
      %v1035 = vpop.permute.xlu0 %1034
      %1038 = vset.pattern.permute.xlu0 0
      %1039 = vperm.xlu0 %1038, %v737
      %v1040 = vpop.permute.xlu0 %1039
      %1043 = vset.pattern.permute.xlu0 0
      %1044 = vperm.xlu0 %1043, %v738
      %v1045 = vpop.permute.xlu0 %1044
      %1048 = vset.pattern.permute.xlu0 0
      %1049 = vperm.xlu0 %1048, %v739
      %v1050 = vpop.permute.xlu0 %1049
      %1053 = vset.pattern.permute.xlu0 0
      %1054 = vperm.xlu0 %1053, %v740
      %v1055 = vpop.permute.xlu0 %1054
      %1058 = vset.pattern.permute.xlu0 0
      %1059 = vperm.xlu0 %1058, %v741
      %v1060 = vpop.permute.xlu0 %1059
      %v1126 = vunpack.c.l.b16 %v610
      %v1127 = vunpack.c.l.b16 %v611
      %v1128 = vunpack.c.l.b16 %v612
      %v1129 = vunpack.c.l.b16 %v613
      %v1130 = vunpack.c.l.b16 %v614
      %v1131 = vunpack.c.l.b16 %v615
      %v1132 = vunpack.c.l.b16 %v616
      %v1133 = vunpack.c.l.b16 %v617
      %v1134 = vunpack.c.l.b16 %v618
      %v1135 = vunpack.c.l.b16 %v619
      %v1136 = vunpack.c.l.b16 %v620
      %v1137 = vunpack.c.l.b16 %v621
      %v1138 = vunpack.c.l.b16 %v622
      %v1139 = vunpack.c.l.b16 %v623
      %v1140 = vunpack.c.l.b16 %v624
      %v1141 = vunpack.c.l.b16 %v625
      %v1142 = vunpack.c.l.b16 %v626
      %v1143 = vunpack.c.l.b16 %v627
      %v1144 = vunpack.c.l.b16 %v628
      %v1145 = vunpack.c.l.b16 %v629
      %v1146 = vunpack.c.l.b16 %v630
      %v1147 = vunpack.c.l.b16 %v631
      %v1148 = vunpack.c.l.b16 %v632
      %v1149 = vunpack.c.l.b16 %v633
      %v1150 = vunpack.c.l.b16 %v634
      %v1151 = vunpack.c.l.b16 %v635
      %v1152 = vunpack.c.l.b16 %v636
      %v1153 = vunpack.c.l.b16 %v637
      %v1154 = vunpack.c.l.b16 %v638
      %v1155 = vunpack.c.l.b16 %v639
      %v1156 = vunpack.c.l.b16 %v640
      %v1157 = vunpack.c.l.b16 %v641
      %v1158 = vunpack.c.l.b16 %v642
      %v1159 = vunpack.c.l.b16 %v643
      %v1160 = vunpack.c.l.b16 %v644
      %v1161 = vunpack.c.l.b16 %v645
      %v1162 = vunpack.c.l.b16 %v646
      %v1163 = vunpack.c.l.b16 %v647
      %v1164 = vunpack.c.l.b16 %v648
      %v1165 = vunpack.c.l.b16 %v649
      %v1166 = vunpack.c.l.b16 %v650
      %v1167 = vunpack.c.l.b16 %v651
      %v1168 = vunpack.c.l.b16 %v652
      %v1169 = vunpack.c.l.b16 %v653
      %v1170 = vunpack.c.l.b16 %v654
      %v1171 = vunpack.c.l.b16 %v655
      %v1172 = vunpack.c.l.b16 %v656
      %v1173 = vunpack.c.l.b16 %v657
      %v1174 = vunpack.c.l.b16 %v658
      %v1175 = vunpack.c.l.b16 %v659
      %v1176 = vunpack.c.l.b16 %v660
      %v1177 = vunpack.c.l.b16 %v661
      %v1178 = vunpack.c.l.b16 %v662
      %v1179 = vunpack.c.l.b16 %v663
      %v1180 = vunpack.c.l.b16 %v664
      %v1181 = vunpack.c.l.b16 %v665
      %v1182 = vunpack.c.l.b16 %v666
      %v1183 = vunpack.c.l.b16 %v667
      %v1184 = vunpack.c.l.b16 %v668
      %v1185 = vunpack.c.l.b16 %v669
      %v1186 = vunpack.c.l.b16 %v670
      %v1187 = vunpack.c.l.b16 %v671
      %v1188 = vunpack.c.l.b16 %v672
      %v1189 = vunpack.c.l.b16 %v673
      %v1190 = vpack.c.b16 %v1127, %v1126
      %v1191 = vpack.c.b16 %v1129, %v1128
      %v1192 = vpack.c.b16 %v1131, %v1130
      %v1193 = vpack.c.b16 %v1133, %v1132
      %v1194 = vpack.c.b16 %v1135, %v1134
      %v1195 = vpack.c.b16 %v1137, %v1136
      %v1196 = vpack.c.b16 %v1139, %v1138
      %v1197 = vpack.c.b16 %v1141, %v1140
      %v1198 = vpack.c.b16 %v1143, %v1142
      %v1199 = vpack.c.b16 %v1145, %v1144
      %v1200 = vpack.c.b16 %v1147, %v1146
      %v1201 = vpack.c.b16 %v1149, %v1148
      %v1202 = vpack.c.b16 %v1151, %v1150
      %v1203 = vpack.c.b16 %v1153, %v1152
      %v1204 = vpack.c.b16 %v1155, %v1154
      %v1205 = vpack.c.b16 %v1157, %v1156
      %v1206 = vpack.c.b16 %v1159, %v1158
      %v1207 = vpack.c.b16 %v1161, %v1160
      %v1208 = vpack.c.b16 %v1163, %v1162
      %v1209 = vpack.c.b16 %v1165, %v1164
      %v1210 = vpack.c.b16 %v1167, %v1166
      %v1211 = vpack.c.b16 %v1169, %v1168
      %v1212 = vpack.c.b16 %v1171, %v1170
      %v1213 = vpack.c.b16 %v1173, %v1172
      %v1214 = vpack.c.b16 %v1175, %v1174
      %v1215 = vpack.c.b16 %v1177, %v1176
      %v1216 = vpack.c.b16 %v1179, %v1178
      %v1217 = vpack.c.b16 %v1181, %v1180
      %v1218 = vpack.c.b16 %v1183, %v1182
      %v1219 = vpack.c.b16 %v1185, %v1184
      %v1220 = vpack.c.b16 %v1187, %v1186
      %v1221 = vpack.c.b16 %v1189, %v1188
      %vm1222 = vcmask 523264
      %v1224 = vsel %vm1222, %v1190, 0
      %v1227 = vsel %vm1222, %v1191, 0
      %v1230 = vsel %vm1222, %v1192, 0
      %v1233 = vsel %vm1222, %v1193, 0
      %v1236 = vsel %vm1222, %v1194, 0
      %v1239 = vsel %vm1222, %v1195, 0
      %v1242 = vsel %vm1222, %v1196, 0
      %v1245 = vsel %vm1222, %v1197, 0
      %v1248 = vsel %vm1222, %v1198, 0
      %v1251 = vsel %vm1222, %v1199, 0
      %v1254 = vsel %vm1222, %v1200, 0
      %v1257 = vsel %vm1222, %v1201, 0
      %v1260 = vsel %vm1222, %v1202, 0
      %v1263 = vsel %vm1222, %v1203, 0
      %v1266 = vsel %vm1222, %v1204, 0
      %v1269 = vsel %vm1222, %v1205, 0
      %v1272 = vsel %vm1222, %v1206, 0
      %v1275 = vsel %vm1222, %v1207, 0
      %v1278 = vsel %vm1222, %v1208, 0
      %v1281 = vsel %vm1222, %v1209, 0
      %v1284 = vsel %vm1222, %v1210, 0
      %v1287 = vsel %vm1222, %v1211, 0
      %v1290 = vsel %vm1222, %v1212, 0
      %v1293 = vsel %vm1222, %v1213, 0
      %v1296 = vsel %vm1222, %v1214, 0
      %v1299 = vsel %vm1222, %v1215, 0
      %v1302 = vsel %vm1222, %v1216, 0
      %v1305 = vsel %vm1222, %v1217, 0
      %v1308 = vsel %vm1222, %v1218, 0
      %v1311 = vsel %vm1222, %v1219, 0
      %v1314 = vsel %vm1222, %v1220, 0
      %v1317 = vsel %vm1222, %v1221, 0
      %1319 = vmatprep.subr.bf16.mxu0 0
      %1320 = vmatpush1.bf16.msra.mxu0 %v674
      %1321 = vmatprep.subr.bf16.mxu0 0
      %1322 = vmatpush1.bf16.msra.mxu0 %v675
      %1323 = vmatprep.subr.bf16.mxu0 0
      %1324 = vmatpush1.bf16.msra.mxu0 %v676
      %1325 = vmatprep.subr.bf16.mxu0 0
      %1326 = vmatpush1.bf16.msra.mxu0 %v677
      %1327 = vmatprep.subr.bf16.mxu0 0
      %1328 = vmatpush1.bf16.msra.mxu0 0
      %1329 = vmatprep.subr.bf16.mxu0 0
      %1330 = vmatpush1.bf16.msra.mxu0 0
      %1331 = vmatprep.subr.bf16.mxu0 0
      %1332 = vmatpush1.bf16.msra.mxu0 0
      %1333 = vmatprep.subr.bf16.mxu0 0
      %1334 = vmatpush1.bf16.msra.mxu0 0
      %1335 = vmatprep.subr.bf16.mxu0 0
      %1336 = vmatpush1.bf16.msra.mxu0 0
      %1337 = vmatprep.subr.bf16.mxu0 0
      %1338 = vmatpush1.bf16.msra.mxu0 0
      %1339 = vmatprep.subr.bf16.mxu0 0
      %1340 = vmatpush1.bf16.msra.mxu0 0
      %1341 = vmatprep.subr.bf16.mxu0 0
      %1342 = vmatpush1.bf16.msra.mxu0 0
      %1343 = vmatprep.subr.bf16.mxu0 0
      %1344 = vmatpush1.bf16.msra.mxu0 0
      %1345 = vmatprep.subr.bf16.mxu0 0
      %1346 = vmatpush1.bf16.msra.mxu0 0
      %1347 = vmatprep.subr.bf16.mxu0 0
      %1348 = vmatpush1.bf16.msra.mxu0 0
      %1349 = vmatprep.subr.bf16.mxu0 0
      %1350 = vmatpush1.bf16.msra.mxu0 0
      %1351 = vmatprep.mubr.bf16.mxu0 0
      %1352 = vmatmul.mubr.bf16.gmra.mrb[0].mxu0 %v1224
      %v1353 = vpop.f32.mrb[0].mxu0
      %v1354 = vadd.f32 %v745, %v1353
      %v1355 = vpop.f32.mrb[0].mxu0
      %v1356 = vpop.f32.mrb[0].mxu0
      %v1357 = vadd.f32 %v750, %v1356
      %v1358 = vpop.f32.mrb[0].mxu0
      %1359 = vmatprep.mubr.bf16.mxu0 0
      %1360 = vmatmul.mubr.bf16.gmra.mrb[0].mxu0 %v1227
      %v1361 = vpop.f32.mrb[0].mxu0
      %v1362 = vadd.f32 %v755, %v1361
      %v1363 = vpop.f32.mrb[0].mxu0
      %v1364 = vpop.f32.mrb[0].mxu0
      %v1365 = vadd.f32 %v760, %v1364
      %v1366 = vpop.f32.mrb[0].mxu0
      %1367 = vmatprep.mubr.bf16.mxu0 0
      %1368 = vmatmul.mubr.bf16.gmra.mrb[0].mxu0 %v1230
      %v1369 = vpop.f32.mrb[0].mxu0
      %v1370 = vadd.f32 %v765, %v1369
      %v1371 = vpop.f32.mrb[0].mxu0
      %v1372 = vpop.f32.mrb[0].mxu0
      %v1373 = vadd.f32 %v770, %v1372
      %v1374 = vpop.f32.mrb[0].mxu0
      %1375 = vmatprep.mubr.bf16.mxu0 0
      %1376 = vmatmul.mubr.bf16.gmra.mrb[0].mxu0 %v1233
      %v1377 = vpop.f32.mrb[0].mxu0
      %v1378 = vadd.f32 %v775, %v1377
      %v1379 = vpop.f32.mrb[0].mxu0
      %v1380 = vpop.f32.mrb[0].mxu0
      %v1381 = vadd.f32 %v780, %v1380
      %v1382 = vpop.f32.mrb[0].mxu0
      %1383 = vmatprep.mubr.bf16.mxu0 0
      %1384 = vmatmul.mubr.bf16.gmra.mrb[0].mxu0 %v1236
      %v1385 = vpop.f32.mrb[0].mxu0
      %v1386 = vadd.f32 %v785, %v1385
      %v1387 = vpop.f32.mrb[0].mxu0
      %v1388 = vpop.f32.mrb[0].mxu0
      %v1389 = vadd.f32 %v790, %v1388
      %v1390 = vpop.f32.mrb[0].mxu0
      %1391 = vmatprep.mubr.bf16.mxu0 0
      %1392 = vmatmul.mubr.bf16.gmra.mrb[0].mxu0 %v1239
      %v1393 = vpop.f32.mrb[0].mxu0
      %v1394 = vadd.f32 %v795, %v1393
      %v1395 = vpop.f32.mrb[0].mxu0
      %v1396 = vpop.f32.mrb[0].mxu0
      %v1397 = vadd.f32 %v800, %v1396
      %v1398 = vpop.f32.mrb[0].mxu0
      %1399 = vmatprep.mubr.bf16.mxu0 0
      %1400 = vmatmul.mubr.bf16.gmra.mrb[0].mxu0 %v1242
      %v1401 = vpop.f32.mrb[0].mxu0
      %v1402 = vadd.f32 %v805, %v1401
      %v1403 = vpop.f32.mrb[0].mxu0
      %v1404 = vpop.f32.mrb[0].mxu0
      %v1405 = vadd.f32 %v810, %v1404
      %v1406 = vpop.f32.mrb[0].mxu0
      %1407 = vmatprep.mubr.bf16.mxu0 0
      %1408 = vmatmul.mubr.bf16.gmra.mrb[0].mxu0 %v1245
      %v1409 = vpop.f32.mrb[0].mxu0
      %v1410 = vadd.f32 %v815, %v1409
      %v1411 = vpop.f32.mrb[0].mxu0
      %v1412 = vpop.f32.mrb[0].mxu0
      %v1413 = vadd.f32 %v820, %v1412
      %v1414 = vpop.f32.mrb[0].mxu0
      %1415 = vmatprep.mubr.bf16.mxu0 0
      %1416 = vmatmul.mubr.bf16.gmra.mrb[0].mxu0 %v1248
      %v1417 = vpop.f32.mrb[0].mxu0
      %v1418 = vadd.f32 %v825, %v1417
      %v1419 = vpop.f32.mrb[0].mxu0
      %v1420 = vpop.f32.mrb[0].mxu0
      %v1421 = vadd.f32 %v830, %v1420
      %v1422 = vpop.f32.mrb[0].mxu0
      %1423 = vmatprep.mubr.bf16.mxu0 0
      %1424 = vmatmul.mubr.bf16.gmra.mrb[0].mxu0 %v1251
      %v1425 = vpop.f32.mrb[0].mxu0
      %v1426 = vadd.f32 %v835, %v1425
      %v1427 = vpop.f32.mrb[0].mxu0
      %v1428 = vpop.f32.mrb[0].mxu0
      %v1429 = vadd.f32 %v840, %v1428
      %v1430 = vpop.f32.mrb[0].mxu0
      %1431 = vmatprep.mubr.bf16.mxu0 0
      %1432 = vmatmul.mubr.bf16.gmra.mrb[0].mxu0 %v1254
      %v1433 = vpop.f32.mrb[0].mxu0
      %v1434 = vadd.f32 %v845, %v1433
      %v1435 = vpop.f32.mrb[0].mxu0
      %v1436 = vpop.f32.mrb[0].mxu0
      %v1437 = vadd.f32 %v850, %v1436
      %v1438 = vpop.f32.mrb[0].mxu0
      %1439 = vmatprep.mubr.bf16.mxu0 0
      %1440 = vmatmul.mubr.bf16.gmra.mrb[0].mxu0 %v1257
      %v1441 = vpop.f32.mrb[0].mxu0
      %v1442 = vadd.f32 %v855, %v1441
      %v1443 = vpop.f32.mrb[0].mxu0
      %v1444 = vpop.f32.mrb[0].mxu0
      %v1445 = vadd.f32 %v860, %v1444
      %v1446 = vpop.f32.mrb[0].mxu0
      %1447 = vmatprep.mubr.bf16.mxu0 0
      %1448 = vmatmul.mubr.bf16.gmra.mrb[0].mxu0 %v1260
      %v1449 = vpop.f32.mrb[0].mxu0
      %v1450 = vadd.f32 %v865, %v1449
      %v1451 = vpop.f32.mrb[0].mxu0
      %v1452 = vpop.f32.mrb[0].mxu0
      %v1453 = vadd.f32 %v870, %v1452
      %v1454 = vpop.f32.mrb[0].mxu0
      %1455 = vmatprep.mubr.bf16.mxu0 0
      %1456 = vmatmul.mubr.bf16.gmra.mrb[0].mxu0 %v1263
      %v1457 = vpop.f32.mrb[0].mxu0
      %v1458 = vadd.f32 %v875, %v1457
      %v1459 = vpop.f32.mrb[0].mxu0
      %v1460 = vpop.f32.mrb[0].mxu0
      %v1461 = vadd.f32 %v880, %v1460
      %v1462 = vpop.f32.mrb[0].mxu0
      %1463 = vmatprep.mubr.bf16.mxu0 0
      %1464 = vmatmul.mubr.bf16.gmra.mrb[0].mxu0 %v1266
      %v1465 = vpop.f32.mrb[0].mxu0
      %v1466 = vadd.f32 %v885, %v1465
      %v1467 = vpop.f32.mrb[0].mxu0
      %v1468 = vpop.f32.mrb[0].mxu0
      %v1469 = vadd.f32 %v890, %v1468
      %v1470 = vpop.f32.mrb[0].mxu0
      %1471 = vmatprep.mubr.bf16.mxu0 0
      %1472 = vmatmul.mubr.bf16.gmra.mrb[0].mxu0 %v1269
      %v1473 = vpop.f32.mrb[0].mxu0
      %v1474 = vadd.f32 %v895, %v1473
      %v1475 = vpop.f32.mrb[0].mxu0
      %v1476 = vpop.f32.mrb[0].mxu0
      %v1477 = vadd.f32 %v900, %v1476
      %v1478 = vpop.f32.mrb[0].mxu0
      %1479 = vmatprep.mubr.bf16.mxu0 0
      %1480 = vmatmul.mubr.bf16.gmra.mrb[0].mxu0 %v1272
      %v1481 = vpop.f32.mrb[0].mxu0
      %v1482 = vadd.f32 %v905, %v1481
      %v1483 = vpop.f32.mrb[0].mxu0
      %v1484 = vpop.f32.mrb[0].mxu0
      %v1485 = vadd.f32 %v910, %v1484
      %v1486 = vpop.f32.mrb[0].mxu0
      %1487 = vmatprep.mubr.bf16.mxu0 0
      %1488 = vmatmul.mubr.bf16.gmra.mrb[0].mxu0 %v1275
      %v1489 = vpop.f32.mrb[0].mxu0
      %v1490 = vadd.f32 %v915, %v1489
      %v1491 = vpop.f32.mrb[0].mxu0
      %v1492 = vpop.f32.mrb[0].mxu0
      %v1493 = vadd.f32 %v920, %v1492
      %v1494 = vpop.f32.mrb[0].mxu0
      %1495 = vmatprep.mubr.bf16.mxu0 0
      %1496 = vmatmul.mubr.bf16.gmra.mrb[0].mxu0 %v1278
      %v1497 = vpop.f32.mrb[0].mxu0
      %v1498 = vadd.f32 %v925, %v1497
      %v1499 = vpop.f32.mrb[0].mxu0
      %v1500 = vpop.f32.mrb[0].mxu0
      %v1501 = vadd.f32 %v930, %v1500
      %v1502 = vpop.f32.mrb[0].mxu0
      %1503 = vmatprep.mubr.bf16.mxu0 0
      %1504 = vmatmul.mubr.bf16.gmra.mrb[0].mxu0 %v1281
      %v1505 = vpop.f32.mrb[0].mxu0
      %v1506 = vadd.f32 %v935, %v1505
      %v1507 = vpop.f32.mrb[0].mxu0
      %v1508 = vpop.f32.mrb[0].mxu0
      %v1509 = vadd.f32 %v940, %v1508
      %v1510 = vpop.f32.mrb[0].mxu0
      %1511 = vmatprep.mubr.bf16.mxu0 0
      %1512 = vmatmul.mubr.bf16.gmra.mrb[0].mxu0 %v1284
      %v1513 = vpop.f32.mrb[0].mxu0
      %v1514 = vadd.f32 %v945, %v1513
      %v1515 = vpop.f32.mrb[0].mxu0
      %v1516 = vpop.f32.mrb[0].mxu0
      %v1517 = vadd.f32 %v950, %v1516
      %v1518 = vpop.f32.mrb[0].mxu0
      %1519 = vmatprep.mubr.bf16.mxu0 0
      %1520 = vmatmul.mubr.bf16.gmra.mrb[0].mxu0 %v1287
      %v1521 = vpop.f32.mrb[0].mxu0
      %v1522 = vadd.f32 %v955, %v1521
      %v1523 = vpop.f32.mrb[0].mxu0
      %v1524 = vpop.f32.mrb[0].mxu0
      %v1525 = vadd.f32 %v960, %v1524
      %v1526 = vpop.f32.mrb[0].mxu0
      %1527 = vmatprep.mubr.bf16.mxu0 0
      %1528 = vmatmul.mubr.bf16.gmra.mrb[0].mxu0 %v1290
      %v1529 = vpop.f32.mrb[0].mxu0
      %v1530 = vadd.f32 %v965, %v1529
      %v1531 = vpop.f32.mrb[0].mxu0
      %v1532 = vpop.f32.mrb[0].mxu0
      %v1533 = vadd.f32 %v970, %v1532
      %v1534 = vpop.f32.mrb[0].mxu0
      %1535 = vmatprep.mubr.bf16.mxu0 0
      %1536 = vmatmul.mubr.bf16.gmra.mrb[0].mxu0 %v1293
      %v1537 = vpop.f32.mrb[0].mxu0
      %v1538 = vadd.f32 %v975, %v1537
      %v1539 = vpop.f32.mrb[0].mxu0
      %v1540 = vpop.f32.mrb[0].mxu0
      %v1541 = vadd.f32 %v980, %v1540
      %v1542 = vpop.f32.mrb[0].mxu0
      %1543 = vmatprep.mubr.bf16.mxu0 0
      %1544 = vmatmul.mubr.bf16.gmra.mrb[0].mxu0 %v1296
      %v1545 = vpop.f32.mrb[0].mxu0
      %v1546 = vadd.f32 %v985, %v1545
      %v1547 = vpop.f32.mrb[0].mxu0
      %v1548 = vpop.f32.mrb[0].mxu0
      %v1549 = vadd.f32 %v990, %v1548
      %v1550 = vpop.f32.mrb[0].mxu0
      %1551 = vmatprep.mubr.bf16.mxu0 0
      %1552 = vmatmul.mubr.bf16.gmra.mrb[0].mxu0 %v1299
      %v1553 = vpop.f32.mrb[0].mxu0
      %v1554 = vadd.f32 %v995, %v1553
      %v1555 = vpop.f32.mrb[0].mxu0
      %v1556 = vpop.f32.mrb[0].mxu0
      %v1557 = vadd.f32 %v1000, %v1556
      %v1558 = vpop.f32.mrb[0].mxu0
      %1559 = vmatprep.mubr.bf16.mxu0 0
      %1560 = vmatmul.mubr.bf16.gmra.mrb[0].mxu0 %v1302
      %v1561 = vpop.f32.mrb[0].mxu0
      %v1562 = vadd.f32 %v1005, %v1561
      %v1563 = vpop.f32.mrb[0].mxu0
      %v1564 = vpop.f32.mrb[0].mxu0
      %v1565 = vadd.f32 %v1010, %v1564
      %v1566 = vpop.f32.mrb[0].mxu0
      %1567 = vmatprep.mubr.bf16.mxu0 0
      %1568 = vmatmul.mubr.bf16.gmra.mrb[0].mxu0 %v1305
      %v1569 = vpop.f32.mrb[0].mxu0
      %v1570 = vadd.f32 %v1015, %v1569
      %v1571 = vpop.f32.mrb[0].mxu0
      %v1572 = vpop.f32.mrb[0].mxu0
      %v1573 = vadd.f32 %v1020, %v1572
      %v1574 = vpop.f32.mrb[0].mxu0
      %1575 = vmatprep.mubr.bf16.mxu0 0
      %1576 = vmatmul.mubr.bf16.gmra.mrb[0].mxu0 %v1308
      %v1577 = vpop.f32.mrb[0].mxu0
      %v1578 = vadd.f32 %v1025, %v1577
      %v1579 = vpop.f32.mrb[0].mxu0
      %v1580 = vpop.f32.mrb[0].mxu0
      %v1581 = vadd.f32 %v1030, %v1580
      %v1582 = vpop.f32.mrb[0].mxu0
      %1583 = vmatprep.mubr.bf16.mxu0 0
      %1584 = vmatmul.mubr.bf16.gmra.mrb[0].mxu0 %v1311
      %v1585 = vpop.f32.mrb[0].mxu0
      %v1586 = vadd.f32 %v1035, %v1585
      %v1587 = vpop.f32.mrb[0].mxu0
      %v1588 = vpop.f32.mrb[0].mxu0
      %v1589 = vadd.f32 %v1040, %v1588
      %v1590 = vpop.f32.mrb[0].mxu0
      %1591 = vmatprep.mubr.bf16.mxu0 0
      %1592 = vmatmul.mubr.bf16.gmra.mrb[0].mxu0 %v1314
      %v1593 = vpop.f32.mrb[0].mxu0
      %v1594 = vadd.f32 %v1045, %v1593
      %v1595 = vpop.f32.mrb[0].mxu0
      %v1596 = vpop.f32.mrb[0].mxu0
      %v1597 = vadd.f32 %v1050, %v1596
      %v1598 = vpop.f32.mrb[0].mxu0
      %1599 = vmatprep.mubr.bf16.mxu0 0
      %1600 = vmatmul.mubr.bf16.gmra.mrb[0].mxu0 %v1317
      %v1601 = vpop.f32.mrb[0].mxu0
      %v1602 = vadd.f32 %v1055, %v1601
      %v1603 = vpop.f32.mrb[0].mxu0
      %v1604 = vpop.f32.mrb[0].mxu0
      %v1605 = vadd.f32 %v1060, %v1604
      %v1606 = vpop.f32.mrb[0].mxu0
      %1607 = vdwg.mxu0
      %v1608 = vmax.f32 %v1354, 0.0
      %v1609 = vmax.f32 %v1357, 0.0
      %v1610 = vmax.f32 %v1362, 0.0
      %v1611 = vmax.f32 %v1365, 0.0
      %v1612 = vmax.f32 %v1370, 0.0
      %v1613 = vmax.f32 %v1373, 0.0
      %v1614 = vmax.f32 %v1378, 0.0
      %v1615 = vmax.f32 %v1381, 0.0
      %v1616 = vmax.f32 %v1386, 0.0
      %v1617 = vmax.f32 %v1389, 0.0
      %v1618 = vmax.f32 %v1394, 0.0
      %v1619 = vmax.f32 %v1397, 0.0
      %v1620 = vmax.f32 %v1402, 0.0
      %v1621 = vmax.f32 %v1405, 0.0
      %v1622 = vmax.f32 %v1410, 0.0
      %v1623 = vmax.f32 %v1413, 0.0
      %v1624 = vmax.f32 %v1418, 0.0
      %v1625 = vmax.f32 %v1421, 0.0
      %v1626 = vmax.f32 %v1426, 0.0
      %v1627 = vmax.f32 %v1429, 0.0
      %v1628 = vmax.f32 %v1434, 0.0
      %v1629 = vmax.f32 %v1437, 0.0
      %v1630 = vmax.f32 %v1442, 0.0
      %v1631 = vmax.f32 %v1445, 0.0
      %v1632 = vmax.f32 %v1450, 0.0
      %v1633 = vmax.f32 %v1453, 0.0
      %v1634 = vmax.f32 %v1458, 0.0
      %v1635 = vmax.f32 %v1461, 0.0
      %v1636 = vmax.f32 %v1466, 0.0
      %v1637 = vmax.f32 %v1469, 0.0
      %v1638 = vmax.f32 %v1474, 0.0
      %v1639 = vmax.f32 %v1477, 0.0
      %v1640 = vmax.f32 %v1482, 0.0
      %v1641 = vmax.f32 %v1485, 0.0
      %v1642 = vmax.f32 %v1490, 0.0
      %v1643 = vmax.f32 %v1493, 0.0
      %v1644 = vmax.f32 %v1498, 0.0
      %v1645 = vmax.f32 %v1501, 0.0
      %v1646 = vmax.f32 %v1506, 0.0
      %v1647 = vmax.f32 %v1509, 0.0
      %v1648 = vmax.f32 %v1514, 0.0
      %v1649 = vmax.f32 %v1517, 0.0
      %v1650 = vmax.f32 %v1522, 0.0
      %v1651 = vmax.f32 %v1525, 0.0
      %v1652 = vmax.f32 %v1530, 0.0
      %v1653 = vmax.f32 %v1533, 0.0
      %v1654 = vmax.f32 %v1538, 0.0
      %v1655 = vmax.f32 %v1541, 0.0
      %v1656 = vmax.f32 %v1546, 0.0
      %v1657 = vmax.f32 %v1549, 0.0
      %v1658 = vmax.f32 %v1554, 0.0
      %v1659 = vmax.f32 %v1557, 0.0
      %v1660 = vmax.f32 %v1562, 0.0
      %v1661 = vmax.f32 %v1565, 0.0
      %v1662 = vmax.f32 %v1570, 0.0
      %v1663 = vmax.f32 %v1573, 0.0
      %v1664 = vmax.f32 %v1578, 0.0
      %v1665 = vmax.f32 %v1581, 0.0
      %v1666 = vmax.f32 %v1586, 0.0
      %v1667 = vmax.f32 %v1589, 0.0
      %v1668 = vmax.f32 %v1594, 0.0
      %v1669 = vmax.f32 %v1597, 0.0
      %v1670 = vmax.f32 %v1602, 0.0
      %v1671 = vmax.f32 %v1605, 0.0
      %v1672 = vld [vmem:[%s5] sm:$0xff]
      %v1673 = vld [vmem:[%s5 + $0x8] sm:$0xff]
      %v1674 = vld [vmem:[%s5 + $0x10] sm:$0xff]
      %v1675 = vld [vmem:[%s5 + $0x18] sm:$0xff]
      %v1676 = vld [vmem:[%s5 + $0x20] sm:$0xff]
      %v1677 = vld [vmem:[%s5 + $0x28] sm:$0xff]
      %v1678 = vld [vmem:[%s5 + $0x30] sm:$0xff]
      %v1679 = vld [vmem:[%s5 + $0x38] sm:$0xff]
      %v1680 = vld [vmem:[%s5 + $0x40] sm:$0xff]
      %v1681 = vld [vmem:[%s5 + $0x48] sm:$0xff]
      %v1682 = vld [vmem:[%s5 + $0x50] sm:$0xff]
      %v1683 = vld [vmem:[%s5 + $0x58] sm:$0xff]
      %v1684 = vld [vmem:[%s5 + $0x60] sm:$0xff]
      %v1685 = vld [vmem:[%s5 + $0x68] sm:$0xff]
      %v1686 = vld [vmem:[%s5 + $0x70] sm:$0xff]
      %v1687 = vld [vmem:[%s5 + $0x78] sm:$0xff]
      %v1688 = vld [vmem:[%s5 + $0x80] sm:$0xff]
      %v1689 = vld [vmem:[%s5 + $0x88] sm:$0xff]
      %v1690 = vld [vmem:[%s5 + $0x90] sm:$0xff]
      %v1691 = vld [vmem:[%s5 + $0x98] sm:$0xff]
      %v1692 = vld [vmem:[%s5 + $0xa0] sm:$0xff]
      %v1693 = vld [vmem:[%s5 + $0xa8] sm:$0xff]
      %v1694 = vld [vmem:[%s5 + $0xb0] sm:$0xff]
      %v1695 = vld [vmem:[%s5 + $0xb8] sm:$0xff]
      %v1696 = vld [vmem:[%s5 + $0xc0] sm:$0xff]
      %v1697 = vld [vmem:[%s5 + $0xc8] sm:$0xff]
      %v1698 = vld [vmem:[%s5 + $0xd0] sm:$0xff]
      %v1699 = vld [vmem:[%s5 + $0xd8] sm:$0xff]
      %v1700 = vld [vmem:[%s5 + $0xe0] sm:$0xff]
      %v1701 = vld [vmem:[%s5 + $0xe8] sm:$0xff]
      %v1702 = vld [vmem:[%s5 + $0xf0] sm:$0xff]
      %v1703 = vld [vmem:[%s5 + $0xf8] sm:$0xff]
      %v1704 = vld [vmem:[%s5 + $0x100] sm:$0xff]
      %v1705 = vld [vmem:[%s5 + $0x108] sm:$0xff]
      %v1706 = vld [vmem:[%s5 + $0x110] sm:$0xff]
      %v1707 = vld [vmem:[%s5 + $0x118] sm:$0xff]
      %v1708 = vld [vmem:[%s5 + $0x120] sm:$0xff]
      %v1709 = vld [vmem:[%s5 + $0x128] sm:$0xff]
      %v1710 = vld [vmem:[%s5 + $0x130] sm:$0xff]
      %v1711 = vld [vmem:[%s5 + $0x138] sm:$0xff]
      %v1712 = vld [vmem:[%s5 + $0x140] sm:$0xff]
      %v1713 = vld [vmem:[%s5 + $0x148] sm:$0xff]
      %v1714 = vld [vmem:[%s5 + $0x150] sm:$0xff]
      %v1715 = vld [vmem:[%s5 + $0x158] sm:$0xff]
      %v1716 = vld [vmem:[%s5 + $0x160] sm:$0xff]
      %v1717 = vld [vmem:[%s5 + $0x168] sm:$0xff]
      %v1718 = vld [vmem:[%s5 + $0x170] sm:$0xff]
      %v1719 = vld [vmem:[%s5 + $0x178] sm:$0xff]
      %v1720 = vld [vmem:[%s5 + $0x180] sm:$0xff]
      %v1721 = vld [vmem:[%s5 + $0x188] sm:$0xff]
      %v1722 = vld [vmem:[%s5 + $0x190] sm:$0xff]
      %v1723 = vld [vmem:[%s5 + $0x198] sm:$0xff]
      %v1724 = vld [vmem:[%s5 + $0x1a0] sm:$0xff]
      %v1725 = vld [vmem:[%s5 + $0x1a8] sm:$0xff]
      %v1726 = vld [vmem:[%s5 + $0x1b0] sm:$0xff]
      %v1727 = vld [vmem:[%s5 + $0x1b8] sm:$0xff]
      %v1728 = vld [vmem:[%s5 + $0x1c0] sm:$0xff]
      %v1729 = vld [vmem:[%s5 + $0x1c8] sm:$0xff]
      %v1730 = vld [vmem:[%s5 + $0x1d0] sm:$0xff]
      %v1731 = vld [vmem:[%s5 + $0x1d8] sm:$0xff]
      %v1732 = vld [vmem:[%s5 + $0x1e0] sm:$0xff]
      %v1733 = vld [vmem:[%s5 + $0x1e8] sm:$0xff]
      %v1734 = vld [vmem:[%s5 + $0x1f0] sm:$0xff]
      %v1735 = vld [vmem:[%s5 + $0x1f8] sm:$0xff]
      %v1736 = vpack.c.bf16 %v1609, %v1608
      %v1737 = vpack.c.bf16 %v1611, %v1610
      %v1738 = vpack.c.bf16 %v1613, %v1612
      %v1739 = vpack.c.bf16 %v1615, %v1614
      %v1740 = vpack.c.bf16 %v1617, %v1616
      %v1741 = vpack.c.bf16 %v1619, %v1618
      %v1742 = vpack.c.bf16 %v1621, %v1620
      %v1743 = vpack.c.bf16 %v1623, %v1622
      %v1744 = vpack.c.bf16 %v1625, %v1624
      %v1745 = vpack.c.bf16 %v1627, %v1626
      %v1746 = vpack.c.bf16 %v1629, %v1628
      %v1747 = vpack.c.bf16 %v1631, %v1630
      %v1748 = vpack.c.bf16 %v1633, %v1632
      %v1749 = vpack.c.bf16 %v1635, %v1634
      %v1750 = vpack.c.bf16 %v1637, %v1636
      %v1751 = vpack.c.bf16 %v1639, %v1638
      %v1752 = vpack.c.bf16 %v1641, %v1640
      %v1753 = vpack.c.bf16 %v1643, %v1642
      %v1754 = vpack.c.bf16 %v1645, %v1644
      %v1755 = vpack.c.bf16 %v1647, %v1646
      %v1756 = vpack.c.bf16 %v1649, %v1648
      %v1757 = vpack.c.bf16 %v1651, %v1650
      %v1758 = vpack.c.bf16 %v1653, %v1652
      %v1759 = vpack.c.bf16 %v1655, %v1654
      %v1760 = vpack.c.bf16 %v1657, %v1656
      %v1761 = vpack.c.bf16 %v1659, %v1658
      %v1762 = vpack.c.bf16 %v1661, %v1660
      %v1763 = vpack.c.bf16 %v1663, %v1662
      %v1764 = vpack.c.bf16 %v1665, %v1664
      %v1765 = vpack.c.bf16 %v1667, %v1666
      %v1766 = vpack.c.bf16 %v1669, %v1668
      %v1767 = vpack.c.bf16 %v1671, %v1670
      %v1768 = vld [vmem:[%s6] sm:$0xff]
      %v1769 = vld [vmem:[%s6 + $0x8] sm:$0xff]
      %v1770 = vld [vmem:[%s6 + $0x10] sm:$0xff]
      %v1771 = vld [vmem:[%s6 + $0x18] sm:$0xff]
      %v1772 = vld [vmem:[%s6 + $0x20] sm:$0xff]
      %v1773 = vld [vmem:[%s6 + $0x28] sm:$0xff]
      %v1774 = vld [vmem:[%s6 + $0x30] sm:$0xff]
      %v1775 = vld [vmem:[%s6 + $0x38] sm:$0xff]
      %v1776 = vld [vmem:[%s6 + $0x40] sm:$0xff]
      %v1777 = vld [vmem:[%s6 + $0x48] sm:$0xff]
      %v1778 = vld [vmem:[%s6 + $0x50] sm:$0xff]
      %v1779 = vld [vmem:[%s6 + $0x58] sm:$0xff]
      %v1780 = vld [vmem:[%s6 + $0x60] sm:$0xff]
      %v1781 = vld [vmem:[%s6 + $0x68] sm:$0xff]
      %v1782 = vld [vmem:[%s6 + $0x70] sm:$0xff]
      %v1783 = vld [vmem:[%s6 + $0x78] sm:$0xff]
      %v1784 = vld [vmem:[%s6 + $0x80] sm:$0xff]
      %v1785 = vld [vmem:[%s6 + $0x88] sm:$0xff]
      %v1786 = vld [vmem:[%s6 + $0x90] sm:$0xff]
      %v1787 = vld [vmem:[%s6 + $0x98] sm:$0xff]
      %v1788 = vld [vmem:[%s6 + $0xa0] sm:$0xff]
      %v1789 = vld [vmem:[%s6 + $0xa8] sm:$0xff]
      %v1790 = vld [vmem:[%s6 + $0xb0] sm:$0xff]
      %v1791 = vld [vmem:[%s6 + $0xb8] sm:$0xff]
      %v1792 = vld [vmem:[%s6 + $0xc0] sm:$0xff]
      %v1793 = vld [vmem:[%s6 + $0xc8] sm:$0xff]
      %v1794 = vld [vmem:[%s6 + $0xd0] sm:$0xff]
      %v1795 = vld [vmem:[%s6 + $0xd8] sm:$0xff]
      %v1796 = vld [vmem:[%s6 + $0xe0] sm:$0xff]
      %v1797 = vld [vmem:[%s6 + $0xe8] sm:$0xff]
      %v1798 = vld [vmem:[%s6 + $0xf0] sm:$0xff]
      %v1799 = vld [vmem:[%s6 + $0xf8] sm:$0xff]
      %1801 = vset.pattern.permute.xlu0 0
      %1802 = vperm.xlu0 %1801, %v1768
      %v1803 = vpop.permute.xlu0 %1802
      %1806 = vset.pattern.permute.xlu0 0
      %1807 = vperm.xlu0 %1806, %v1769
      %v1808 = vpop.permute.xlu0 %1807
      %1811 = vset.pattern.permute.xlu0 0
      %1812 = vperm.xlu0 %1811, %v1770
      %v1813 = vpop.permute.xlu0 %1812
      %1816 = vset.pattern.permute.xlu0 0
      %1817 = vperm.xlu0 %1816, %v1771
      %v1818 = vpop.permute.xlu0 %1817
      %1821 = vset.pattern.permute.xlu0 0
      %1822 = vperm.xlu0 %1821, %v1772
      %v1823 = vpop.permute.xlu0 %1822
      %1826 = vset.pattern.permute.xlu0 0
      %1827 = vperm.xlu0 %1826, %v1773
      %v1828 = vpop.permute.xlu0 %1827
      %1831 = vset.pattern.permute.xlu0 0
      %1832 = vperm.xlu0 %1831, %v1774
      %v1833 = vpop.permute.xlu0 %1832
      %1836 = vset.pattern.permute.xlu0 0
      %1837 = vperm.xlu0 %1836, %v1775
      %v1838 = vpop.permute.xlu0 %1837
      %1841 = vset.pattern.permute.xlu0 0
      %1842 = vperm.xlu0 %1841, %v1776
      %v1843 = vpop.permute.xlu0 %1842
      %1846 = vset.pattern.permute.xlu0 0
      %1847 = vperm.xlu0 %1846, %v1777
      %v1848 = vpop.permute.xlu0 %1847
      %1851 = vset.pattern.permute.xlu0 0
      %1852 = vperm.xlu0 %1851, %v1778
      %v1853 = vpop.permute.xlu0 %1852
      %1856 = vset.pattern.permute.xlu0 0
      %1857 = vperm.xlu0 %1856, %v1779
      %v1858 = vpop.permute.xlu0 %1857
      %1861 = vset.pattern.permute.xlu0 0
      %1862 = vperm.xlu0 %1861, %v1780
      %v1863 = vpop.permute.xlu0 %1862
      %1866 = vset.pattern.permute.xlu0 0
      %1867 = vperm.xlu0 %1866, %v1781
      %v1868 = vpop.permute.xlu0 %1867
      %1871 = vset.pattern.permute.xlu0 0
      %1872 = vperm.xlu0 %1871, %v1782
      %v1873 = vpop.permute.xlu0 %1872
      %1876 = vset.pattern.permute.xlu0 0
      %1877 = vperm.xlu0 %1876, %v1783
      %v1878 = vpop.permute.xlu0 %1877
      %1881 = vset.pattern.permute.xlu0 0
      %1882 = vperm.xlu0 %1881, %v1784
      %v1883 = vpop.permute.xlu0 %1882
      %1886 = vset.pattern.permute.xlu0 0
      %1887 = vperm.xlu0 %1886, %v1785
      %v1888 = vpop.permute.xlu0 %1887
      %1891 = vset.pattern.permute.xlu0 0
      %1892 = vperm.xlu0 %1891, %v1786
      %v1893 = vpop.permute.xlu0 %1892
      %1896 = vset.pattern.permute.xlu0 0
      %1897 = vperm.xlu0 %1896, %v1787
      %v1898 = vpop.permute.xlu0 %1897
      %1901 = vset.pattern.permute.xlu0 0
      %1902 = vperm.xlu0 %1901, %v1788
      %v1903 = vpop.permute.xlu0 %1902
      %1906 = vset.pattern.permute.xlu0 0
      %1907 = vperm.xlu0 %1906, %v1789
      %v1908 = vpop.permute.xlu0 %1907
      %1911 = vset.pattern.permute.xlu0 0
      %1912 = vperm.xlu0 %1911, %v1790
      %v1913 = vpop.permute.xlu0 %1912
      %1916 = vset.pattern.permute.xlu0 0
      %1917 = vperm.xlu0 %1916, %v1791
      %v1918 = vpop.permute.xlu0 %1917
      %1921 = vset.pattern.permute.xlu0 0
      %1922 = vperm.xlu0 %1921, %v1792
      %v1923 = vpop.permute.xlu0 %1922
      %1926 = vset.pattern.permute.xlu0 0
      %1927 = vperm.xlu0 %1926, %v1793
      %v1928 = vpop.permute.xlu0 %1927
      %1931 = vset.pattern.permute.xlu0 0
      %1932 = vperm.xlu0 %1931, %v1794
      %v1933 = vpop.permute.xlu0 %1932
      %1936 = vset.pattern.permute.xlu0 0
      %1937 = vperm.xlu0 %1936, %v1795
      %v1938 = vpop.permute.xlu0 %1937
      %1941 = vset.pattern.permute.xlu0 0
      %1942 = vperm.xlu0 %1941, %v1796
      %v1943 = vpop.permute.xlu0 %1942
      %1946 = vset.pattern.permute.xlu0 0
      %1947 = vperm.xlu0 %1946, %v1797
      %v1948 = vpop.permute.xlu0 %1947
      %1951 = vset.pattern.permute.xlu0 0
      %1952 = vperm.xlu0 %1951, %v1798
      %v1953 = vpop.permute.xlu0 %1952
      %1956 = vset.pattern.permute.xlu0 0
      %1957 = vperm.xlu0 %1956, %v1799
      %v1958 = vpop.permute.xlu0 %1957
      %v2024 = vunpack.c.l.b16 %v1672
      %v2025 = vunpack.c.h.b16 %v1672
      %v2026 = vunpack.c.l.b16 %v1673
      %v2027 = vunpack.c.h.b16 %v1673
      %v2028 = vunpack.c.l.b16 %v1674
      %v2029 = vunpack.c.h.b16 %v1674
      %v2030 = vunpack.c.l.b16 %v1675
      %v2031 = vunpack.c.h.b16 %v1675
      %v2032 = vunpack.c.l.b16 %v1676
      %v2033 = vunpack.c.h.b16 %v1676
      %v2034 = vunpack.c.l.b16 %v1677
      %v2035 = vunpack.c.h.b16 %v1677
      %v2036 = vunpack.c.l.b16 %v1678
      %v2037 = vunpack.c.h.b16 %v1678
      %v2038 = vunpack.c.l.b16 %v1679
      %v2039 = vunpack.c.h.b16 %v1679
      %v2040 = vunpack.c.l.b16 %v1680
      %v2041 = vunpack.c.h.b16 %v1680
      %v2042 = vunpack.c.l.b16 %v1681
      %v2043 = vunpack.c.h.b16 %v1681
      %v2044 = vunpack.c.l.b16 %v1682
      %v2045 = vunpack.c.h.b16 %v1682
      %v2046 = vunpack.c.l.b16 %v1683
      %v2047 = vunpack.c.h.b16 %v1683
      %v2048 = vunpack.c.l.b16 %v1684
      %v2049 = vunpack.c.h.b16 %v1684
      %v2050 = vunpack.c.l.b16 %v1685
      %v2051 = vunpack.c.h.b16 %v1685
      %v2052 = vunpack.c.l.b16 %v1686
      %v2053 = vunpack.c.h.b16 %v1686
      %v2054 = vunpack.c.l.b16 %v1687
      %v2055 = vunpack.c.h.b16 %v1687
      %v2056 = vunpack.c.l.b16 %v1688
      %v2057 = vunpack.c.h.b16 %v1688
      %v2058 = vunpack.c.l.b16 %v1689
      %v2059 = vunpack.c.h.b16 %v1689
      %v2060 = vunpack.c.l.b16 %v1690
      %v2061 = vunpack.c.h.b16 %v1690
      %v2062 = vunpack.c.l.b16 %v1691
      %v2063 = vunpack.c.h.b16 %v1691
      %v2064 = vunpack.c.l.b16 %v1692
      %v2065 = vunpack.c.h.b16 %v1692
      %v2066 = vunpack.c.l.b16 %v1693
      %v2067 = vunpack.c.h.b16 %v1693
      %v2068 = vunpack.c.l.b16 %v1694
      %v2069 = vunpack.c.h.b16 %v1694
      %v2070 = vunpack.c.l.b16 %v1695
      %v2071 = vunpack.c.h.b16 %v1695
      %v2072 = vunpack.c.l.b16 %v1696
      %v2073 = vunpack.c.h.b16 %v1696
      %v2074 = vunpack.c.l.b16 %v1697
      %v2075 = vunpack.c.h.b16 %v1697
      %v2076 = vunpack.c.l.b16 %v1698
      %v2077 = vunpack.c.h.b16 %v1698
      %v2078 = vunpack.c.l.b16 %v1699
      %v2079 = vunpack.c.h.b16 %v1699
      %v2080 = vunpack.c.l.b16 %v1700
      %v2081 = vunpack.c.h.b16 %v1700
      %v2082 = vunpack.c.l.b16 %v1701
      %v2083 = vunpack.c.h.b16 %v1701
      %v2084 = vunpack.c.l.b16 %v1702
      %v2085 = vunpack.c.h.b16 %v1702
      %v2086 = vunpack.c.l.b16 %v1703
      %v2087 = vunpack.c.h.b16 %v1703
      %v2088 = vunpack.c.l.b16 %v1704
      %v2089 = vunpack.c.h.b16 %v1704
      %v2090 = vunpack.c.l.b16 %v1705
      %v2091 = vunpack.c.h.b16 %v1705
      %v2092 = vunpack.c.l.b16 %v1706
      %v2093 = vunpack.c.h.b16 %v1706
      %v2094 = vunpack.c.l.b16 %v1707
      %v2095 = vunpack.c.h.b16 %v1707
      %v2096 = vunpack.c.l.b16 %v1708
      %v2097 = vunpack.c.h.b16 %v1708
      %v2098 = vunpack.c.l.b16 %v1709
      %v2099 = vunpack.c.h.b16 %v1709
      %v2100 = vunpack.c.l.b16 %v1710
      %v2101 = vunpack.c.h.b16 %v1710
      %v2102 = vunpack.c.l.b16 %v1711
      %v2103 = vunpack.c.h.b16 %v1711
      %v2104 = vunpack.c.l.b16 %v1712
      %v2105 = vunpack.c.h.b16 %v1712
      %v2106 = vunpack.c.l.b16 %v1713
      %v2107 = vunpack.c.h.b16 %v1713
      %v2108 = vunpack.c.l.b16 %v1714
      %v2109 = vunpack.c.h.b16 %v1714
      %v2110 = vunpack.c.l.b16 %v1715
      %v2111 = vunpack.c.h.b16 %v1715
      %v2112 = vunpack.c.l.b16 %v1716
      %v2113 = vunpack.c.h.b16 %v1716
      %v2114 = vunpack.c.l.b16 %v1717
      %v2115 = vunpack.c.h.b16 %v1717
      %v2116 = vunpack.c.l.b16 %v1718
      %v2117 = vunpack.c.h.b16 %v1718
      %v2118 = vunpack.c.l.b16 %v1719
      %v2119 = vunpack.c.h.b16 %v1719
      %v2120 = vunpack.c.l.b16 %v1720
      %v2121 = vunpack.c.h.b16 %v1720
      %v2122 = vunpack.c.l.b16 %v1721
      %v2123 = vunpack.c.h.b16 %v1721
      %v2124 = vunpack.c.l.b16 %v1722
      %v2125 = vunpack.c.h.b16 %v1722
      %v2126 = vunpack.c.l.b16 %v1723
      %v2127 = vunpack.c.h.b16 %v1723
      %v2128 = vunpack.c.l.b16 %v1724
      %v2129 = vunpack.c.h.b16 %v1724
      %v2130 = vunpack.c.l.b16 %v1725
      %v2131 = vunpack.c.h.b16 %v1725
      %v2132 = vunpack.c.l.b16 %v1726
      %v2133 = vunpack.c.h.b16 %v1726
      %v2134 = vunpack.c.l.b16 %v1727
      %v2135 = vunpack.c.h.b16 %v1727
      %v2136 = vunpack.c.l.b16 %v1728
      %v2137 = vunpack.c.h.b16 %v1728
      %v2138 = vunpack.c.l.b16 %v1729
      %v2139 = vunpack.c.h.b16 %v1729
      %v2140 = vunpack.c.l.b16 %v1730
      %v2141 = vunpack.c.h.b16 %v1730
      %v2142 = vunpack.c.l.b16 %v1731
      %v2143 = vunpack.c.h.b16 %v1731
      %v2144 = vunpack.c.l.b16 %v1732
      %v2145 = vunpack.c.h.b16 %v1732
      %v2146 = vunpack.c.l.b16 %v1733
      %v2147 = vunpack.c.h.b16 %v1733
      %v2148 = vunpack.c.l.b16 %v1734
      %v2149 = vunpack.c.h.b16 %v1734
      %v2150 = vunpack.c.l.b16 %v1735
      %v2151 = vunpack.c.h.b16 %v1735
      %v2152 = vpack.c.b16 %v2028, %v2024
      %v2153 = vpack.c.b16 %v2029, %v2025
      %v2154 = vpack.c.b16 %v2030, %v2026
      %v2155 = vpack.c.b16 %v2031, %v2027
      %v2156 = vpack.c.b16 %v2036, %v2032
      %v2157 = vpack.c.b16 %v2037, %v2033
      %v2158 = vpack.c.b16 %v2038, %v2034
      %v2159 = vpack.c.b16 %v2039, %v2035
      %v2160 = vpack.c.b16 %v2044, %v2040
      %v2161 = vpack.c.b16 %v2045, %v2041
      %v2162 = vpack.c.b16 %v2046, %v2042
      %v2163 = vpack.c.b16 %v2047, %v2043
      %v2164 = vpack.c.b16 %v2052, %v2048
      %v2165 = vpack.c.b16 %v2053, %v2049
      %v2166 = vpack.c.b16 %v2054, %v2050
      %v2167 = vpack.c.b16 %v2055, %v2051
      %v2168 = vpack.c.b16 %v2060, %v2056
      %v2169 = vpack.c.b16 %v2061, %v2057
      %v2170 = vpack.c.b16 %v2062, %v2058
      %v2171 = vpack.c.b16 %v2063, %v2059
      %v2172 = vpack.c.b16 %v2068, %v2064
      %v2173 = vpack.c.b16 %v2069, %v2065
      %v2174 = vpack.c.b16 %v2070, %v2066
      %v2175 = vpack.c.b16 %v2071, %v2067
      %v2176 = vpack.c.b16 %v2076, %v2072
      %v2177 = vpack.c.b16 %v2077, %v2073
      %v2178 = vpack.c.b16 %v2078, %v2074
      %v2179 = vpack.c.b16 %v2079, %v2075
      %v2180 = vpack.c.b16 %v2084, %v2080
      %v2181 = vpack.c.b16 %v2085, %v2081
      %v2182 = vpack.c.b16 %v2086, %v2082
      %v2183 = vpack.c.b16 %v2087, %v2083
      %v2184 = vpack.c.b16 %v2092, %v2088
      %v2185 = vpack.c.b16 %v2093, %v2089
      %v2186 = vpack.c.b16 %v2094, %v2090
      %v2187 = vpack.c.b16 %v2095, %v2091
      %v2188 = vpack.c.b16 %v2100, %v2096
      %v2189 = vpack.c.b16 %v2101, %v2097
      %v2190 = vpack.c.b16 %v2102, %v2098
      %v2191 = vpack.c.b16 %v2103, %v2099
      %v2192 = vpack.c.b16 %v2108, %v2104
      %v2193 = vpack.c.b16 %v2109, %v2105
      %v2194 = vpack.c.b16 %v2110, %v2106
      %v2195 = vpack.c.b16 %v2111, %v2107
      %v2196 = vpack.c.b16 %v2116, %v2112
      %v2197 = vpack.c.b16 %v2117, %v2113
      %v2198 = vpack.c.b16 %v2118, %v2114
      %v2199 = vpack.c.b16 %v2119, %v2115
      %v2200 = vpack.c.b16 %v2124, %v2120
      %v2201 = vpack.c.b16 %v2125, %v2121
      %v2202 = vpack.c.b16 %v2126, %v2122
      %v2203 = vpack.c.b16 %v2127, %v2123
      %v2204 = vpack.c.b16 %v2132, %v2128
      %v2205 = vpack.c.b16 %v2133, %v2129
      %v2206 = vpack.c.b16 %v2134, %v2130
      %v2207 = vpack.c.b16 %v2135, %v2131
      %v2208 = vpack.c.b16 %v2140, %v2136
      %v2209 = vpack.c.b16 %v2141, %v2137
      %v2210 = vpack.c.b16 %v2142, %v2138
      %v2211 = vpack.c.b16 %v2143, %v2139
      %v2212 = vpack.c.b16 %v2148, %v2144
      %v2213 = vpack.c.b16 %v2149, %v2145
      %v2214 = vpack.c.b16 %v2150, %v2146
      %v2215 = vpack.c.b16 %v2151, %v2147
      %2280 = vmatprep.subr.bf16.mxu0 0
      %2281 = vmatpush1.bf16.msra.mxu0 %v1736
      %2282 = vmatprep.subr.bf16.mxu0 0
      %2283 = vmatpush1.bf16.msra.mxu0 %v1737
      %2284 = vmatprep.subr.bf16.mxu0 0
      %2285 = vmatpush1.bf16.msra.mxu0 %v1738
      %2286 = vmatprep.subr.bf16.mxu0 0
      %2287 = vmatpush1.bf16.msra.mxu0 %v1739
      %2288 = vmatprep.subr.bf16.mxu0 0
      %2289 = vmatpush1.bf16.msra.mxu0 %v1740
      %2290 = vmatprep.subr.bf16.mxu0 0
      %2291 = vmatpush1.bf16.msra.mxu0 %v1741
      %2292 = vmatprep.subr.bf16.mxu0 0
      %2293 = vmatpush1.bf16.msra.mxu0 %v1742
      %2294 = vmatprep.subr.bf16.mxu0 0
      %2295 = vmatpush1.bf16.msra.mxu0 %v1743
      %2296 = vmatprep.subr.bf16.mxu0 0
      %2297 = vmatpush1.bf16.msra.mxu0 %v1744
      %2298 = vmatprep.subr.bf16.mxu0 0
      %2299 = vmatpush1.bf16.msra.mxu0 %v1745
      %2300 = vmatprep.subr.bf16.mxu0 0
      %2301 = vmatpush1.bf16.msra.mxu0 %v1746
      %2302 = vmatprep.subr.bf16.mxu0 0
      %2303 = vmatpush1.bf16.msra.mxu0 %v1747
      %2304 = vmatprep.subr.bf16.mxu0 0
      %2305 = vmatpush1.bf16.msra.mxu0 %v1748
      %2306 = vmatprep.subr.bf16.mxu0 0
      %2307 = vmatpush1.bf16.msra.mxu0 %v1749
      %2308 = vmatprep.subr.bf16.mxu0 0
      %2309 = vmatpush1.bf16.msra.mxu0 %v1750
      %2310 = vmatprep.subr.bf16.mxu0 0
      %2311 = vmatpush1.bf16.msra.mxu0 %v1751
      %2312 = vmatprep.mubr.bf16.mxu0 %v2153
      %2313 = vmatmul.mubr.bf16.gmra.mrb[0].mxu0 %v2152
      %v2314 = vpop.f32.mrb[0].mxu0
      %v2315 = vadd.f32 %v1803, %v2314
      %v2316 = vpop.f32.mrb[0].mxu0
      %v2317 = vpop.f32.mrb[0].mxu0
      %v2318 = vadd.f32 %v1808, %v2317
      %v2319 = vpop.f32.mrb[0].mxu0
      %2320 = vmatprep.mubr.bf16.mxu0 %v2157
      %2321 = vmatmul.mubr.bf16.gmra.mrb[0].mxu0 %v2156
      %v2322 = vpop.f32.mrb[0].mxu0
      %v2323 = vadd.f32 %v1813, %v2322
      %v2324 = vpop.f32.mrb[0].mxu0
      %v2325 = vpop.f32.mrb[0].mxu0
      %v2326 = vadd.f32 %v1818, %v2325
      %v2327 = vpop.f32.mrb[0].mxu0
      %2328 = vmatprep.mubr.bf16.mxu0 %v2161
      %2329 = vmatmul.mubr.bf16.gmra.mrb[0].mxu0 %v2160
      %v2330 = vpop.f32.mrb[0].mxu0
      %v2331 = vadd.f32 %v1823, %v2330
      %v2332 = vpop.f32.mrb[0].mxu0
      %v2333 = vpop.f32.mrb[0].mxu0
      %v2334 = vadd.f32 %v1828, %v2333
      %v2335 = vpop.f32.mrb[0].mxu0
      %2336 = vmatprep.mubr.bf16.mxu0 %v2165
      %2337 = vmatmul.mubr.bf16.gmra.mrb[0].mxu0 %v2164
      %v2338 = vpop.f32.mrb[0].mxu0
      %v2339 = vadd.f32 %v1833, %v2338
      %v2340 = vpop.f32.mrb[0].mxu0
      %v2341 = vpop.f32.mrb[0].mxu0
      %v2342 = vadd.f32 %v1838, %v2341
      %v2343 = vpop.f32.mrb[0].mxu0
      %2344 = vmatprep.mubr.bf16.mxu0 %v2169
      %2345 = vmatmul.mubr.bf16.gmra.mrb[0].mxu0 %v2168
      %v2346 = vpop.f32.mrb[0].mxu0
      %v2347 = vadd.f32 %v1843, %v2346
      %v2348 = vpop.f32.mrb[0].mxu0
      %v2349 = vpop.f32.mrb[0].mxu0
      %v2350 = vadd.f32 %v1848, %v2349
      %v2351 = vpop.f32.mrb[0].mxu0
      %2352 = vmatprep.mubr.bf16.mxu0 %v2173
      %2353 = vmatmul.mubr.bf16.gmra.mrb[0].mxu0 %v2172
      %v2354 = vpop.f32.mrb[0].mxu0
      %v2355 = vadd.f32 %v1853, %v2354
      %v2356 = vpop.f32.mrb[0].mxu0
      %v2357 = vpop.f32.mrb[0].mxu0
      %v2358 = vadd.f32 %v1858, %v2357
      %v2359 = vpop.f32.mrb[0].mxu0
      %2360 = vmatprep.mubr.bf16.mxu0 %v2177
      %2361 = vmatmul.mubr.bf16.gmra.mrb[0].mxu0 %v2176
      %v2362 = vpop.f32.mrb[0].mxu0
      %v2363 = vadd.f32 %v1863, %v2362
      %v2364 = vpop.f32.mrb[0].mxu0
      %v2365 = vpop.f32.mrb[0].mxu0
      %v2366 = vadd.f32 %v1868, %v2365
      %v2367 = vpop.f32.mrb[0].mxu0
      %2368 = vmatprep.mubr.bf16.mxu0 %v2181
      %2369 = vmatmul.mubr.bf16.gmra.mrb[0].mxu0 %v2180
      %v2370 = vpop.f32.mrb[0].mxu0
      %v2371 = vadd.f32 %v1873, %v2370
      %v2372 = vpop.f32.mrb[0].mxu0
      %v2373 = vpop.f32.mrb[0].mxu0
      %v2374 = vadd.f32 %v1878, %v2373
      %v2375 = vpop.f32.mrb[0].mxu0
      %2376 = vmatprep.mubr.bf16.mxu0 %v2185
      %2377 = vmatmul.mubr.bf16.gmra.mrb[0].mxu0 %v2184
      %v2378 = vpop.f32.mrb[0].mxu0
      %v2379 = vadd.f32 %v1883, %v2378
      %v2380 = vpop.f32.mrb[0].mxu0
      %v2381 = vpop.f32.mrb[0].mxu0
      %v2382 = vadd.f32 %v1888, %v2381
      %v2383 = vpop.f32.mrb[0].mxu0
      %2384 = vmatprep.mubr.bf16.mxu0 %v2189
      %2385 = vmatmul.mubr.bf16.gmra.mrb[0].mxu0 %v2188
      %v2386 = vpop.f32.mrb[0].mxu0
      %v2387 = vadd.f32 %v1893, %v2386
      %v2388 = vpop.f32.mrb[0].mxu0
      %v2389 = vpop.f32.mrb[0].mxu0
      %v2390 = vadd.f32 %v1898, %v2389
      %v2391 = vpop.f32.mrb[0].mxu0
      %2392 = vmatprep.mubr.bf16.mxu0 %v2193
      %2393 = vmatmul.mubr.bf16.gmra.mrb[0].mxu0 %v2192
      %v2394 = vpop.f32.mrb[0].mxu0
      %v2395 = vadd.f32 %v1903, %v2394
      %v2396 = vpop.f32.mrb[0].mxu0
      %v2397 = vpop.f32.mrb[0].mxu0
      %v2398 = vadd.f32 %v1908, %v2397
      %v2399 = vpop.f32.mrb[0].mxu0
      %2400 = vmatprep.mubr.bf16.mxu0 %v2197
      %2401 = vmatmul.mubr.bf16.gmra.mrb[0].mxu0 %v2196
      %v2402 = vpop.f32.mrb[0].mxu0
      %v2403 = vadd.f32 %v1913, %v2402
      %v2404 = vpop.f32.mrb[0].mxu0
      %v2405 = vpop.f32.mrb[0].mxu0
      %v2406 = vadd.f32 %v1918, %v2405
      %v2407 = vpop.f32.mrb[0].mxu0
      %2408 = vmatprep.mubr.bf16.mxu0 %v2201
      %2409 = vmatmul.mubr.bf16.gmra.mrb[0].mxu0 %v2200
      %v2410 = vpop.f32.mrb[0].mxu0
      %v2411 = vadd.f32 %v1923, %v2410
      %v2412 = vpop.f32.mrb[0].mxu0
      %v2413 = vpop.f32.mrb[0].mxu0
      %v2414 = vadd.f32 %v1928, %v2413
      %v2415 = vpop.f32.mrb[0].mxu0
      %2416 = vmatprep.mubr.bf16.mxu0 %v2205
      %2417 = vmatmul.mubr.bf16.gmra.mrb[0].mxu0 %v2204
      %v2418 = vpop.f32.mrb[0].mxu0
      %v2419 = vadd.f32 %v1933, %v2418
      %v2420 = vpop.f32.mrb[0].mxu0
      %v2421 = vpop.f32.mrb[0].mxu0
      %v2422 = vadd.f32 %v1938, %v2421
      %v2423 = vpop.f32.mrb[0].mxu0
      %2424 = vmatprep.mubr.bf16.mxu0 %v2209
      %2425 = vmatmul.mubr.bf16.gmra.mrb[0].mxu0 %v2208
      %v2426 = vpop.f32.mrb[0].mxu0
      %v2427 = vadd.f32 %v1943, %v2426
      %v2428 = vpop.f32.mrb[0].mxu0
      %v2429 = vpop.f32.mrb[0].mxu0
      %v2430 = vadd.f32 %v1948, %v2429
      %v2431 = vpop.f32.mrb[0].mxu0
      %2432 = vmatprep.mubr.bf16.mxu0 %v2213
      %2433 = vmatmul.mubr.bf16.gmra.mrb[0].mxu0 %v2212
      %v2434 = vpop.f32.mrb[0].mxu0
      %v2435 = vadd.f32 %v1953, %v2434
      %v2436 = vpop.f32.mrb[0].mxu0
      %v2437 = vpop.f32.mrb[0].mxu0
      %v2438 = vadd.f32 %v1958, %v2437
      %v2439 = vpop.f32.mrb[0].mxu0
      %2440 = vdwg.mxu0
      %2441 = vmatprep.subr.bf16.mxu0 0
      %2442 = vmatpush1.bf16.msra.mxu0 %v1752
      %2443 = vmatprep.subr.bf16.mxu0 0
      %2444 = vmatpush1.bf16.msra.mxu0 %v1753
      %2445 = vmatprep.subr.bf16.mxu0 0
      %2446 = vmatpush1.bf16.msra.mxu0 %v1754
      %2447 = vmatprep.subr.bf16.mxu0 0
      %2448 = vmatpush1.bf16.msra.mxu0 %v1755
      %2449 = vmatprep.subr.bf16.mxu0 0
      %2450 = vmatpush1.bf16.msra.mxu0 %v1756
      %2451 = vmatprep.subr.bf16.mxu0 0
      %2452 = vmatpush1.bf16.msra.mxu0 %v1757
      %2453 = vmatprep.subr.bf16.mxu0 0
      %2454 = vmatpush1.bf16.msra.mxu0 %v1758
      %2455 = vmatprep.subr.bf16.mxu0 0
      %2456 = vmatpush1.bf16.msra.mxu0 %v1759
      %2457 = vmatprep.subr.bf16.mxu0 0
      %2458 = vmatpush1.bf16.msra.mxu0 %v1760
      %2459 = vmatprep.subr.bf16.mxu0 0
      %2460 = vmatpush1.bf16.msra.mxu0 %v1761
      %2461 = vmatprep.subr.bf16.mxu0 0
      %2462 = vmatpush1.bf16.msra.mxu0 %v1762
      %2463 = vmatprep.subr.bf16.mxu0 0
      %2464 = vmatpush1.bf16.msra.mxu0 %v1763
      %2465 = vmatprep.subr.bf16.mxu0 0
      %2466 = vmatpush1.bf16.msra.mxu0 %v1764
      %2467 = vmatprep.subr.bf16.mxu0 0
      %2468 = vmatpush1.bf16.msra.mxu0 %v1765
      %2469 = vmatprep.subr.bf16.mxu0 0
      %2470 = vmatpush1.bf16.msra.mxu0 %v1766
      %2471 = vmatprep.subr.bf16.mxu0 0
      %2472 = vmatpush1.bf16.msra.mxu0 %v1767
      %2473 = vmatprep.mubr.bf16.mxu0 %v2155
      %2474 = vmatmul.mubr.bf16.gmra.mrb[0].mxu0 %v2154
      %v2475 = vpop.f32.mrb[0].mxu0
      %v2476 = vadd.f32 %v2315, %v2475
      %v2477 = vpop.f32.mrb[0].mxu0
      %v2478 = vpop.f32.mrb[0].mxu0
      %v2479 = vadd.f32 %v2318, %v2478
      %v2480 = vpop.f32.mrb[0].mxu0
      %2481 = vmatprep.mubr.bf16.mxu0 %v2159
      %2482 = vmatmul.mubr.bf16.gmra.mrb[0].mxu0 %v2158
      %v2483 = vpop.f32.mrb[0].mxu0
      %v2484 = vadd.f32 %v2323, %v2483
      %v2485 = vpop.f32.mrb[0].mxu0
      %v2486 = vpop.f32.mrb[0].mxu0
      %v2487 = vadd.f32 %v2326, %v2486
      %v2488 = vpop.f32.mrb[0].mxu0
      %2489 = vmatprep.mubr.bf16.mxu0 %v2163
      %2490 = vmatmul.mubr.bf16.gmra.mrb[0].mxu0 %v2162
      %v2491 = vpop.f32.mrb[0].mxu0
      %v2492 = vadd.f32 %v2331, %v2491
      %v2493 = vpop.f32.mrb[0].mxu0
      %v2494 = vpop.f32.mrb[0].mxu0
      %v2495 = vadd.f32 %v2334, %v2494
      %v2496 = vpop.f32.mrb[0].mxu0
      %2497 = vmatprep.mubr.bf16.mxu0 %v2167
      %2498 = vmatmul.mubr.bf16.gmra.mrb[0].mxu0 %v2166
      %v2499 = vpop.f32.mrb[0].mxu0
      %v2500 = vadd.f32 %v2339, %v2499
      %v2501 = vpop.f32.mrb[0].mxu0
      %v2502 = vpop.f32.mrb[0].mxu0
      %v2503 = vadd.f32 %v2342, %v2502
      %v2504 = vpop.f32.mrb[0].mxu0
      %2505 = vmatprep.mubr.bf16.mxu0 %v2171
      %2506 = vmatmul.mubr.bf16.gmra.mrb[0].mxu0 %v2170
      %v2507 = vpop.f32.mrb[0].mxu0
      %v2508 = vadd.f32 %v2347, %v2507
      %v2509 = vpop.f32.mrb[0].mxu0
      %v2510 = vpop.f32.mrb[0].mxu0
      %v2511 = vadd.f32 %v2350, %v2510
      %v2512 = vpop.f32.mrb[0].mxu0
      %2513 = vmatprep.mubr.bf16.mxu0 %v2175
      %2514 = vmatmul.mubr.bf16.gmra.mrb[0].mxu0 %v2174
      %v2515 = vpop.f32.mrb[0].mxu0
      %v2516 = vadd.f32 %v2355, %v2515
      %v2517 = vpop.f32.mrb[0].mxu0
      %v2518 = vpop.f32.mrb[0].mxu0
      %v2519 = vadd.f32 %v2358, %v2518
      %v2520 = vpop.f32.mrb[0].mxu0
      %2521 = vmatprep.mubr.bf16.mxu0 %v2179
      %2522 = vmatmul.mubr.bf16.gmra.mrb[0].mxu0 %v2178
      %v2523 = vpop.f32.mrb[0].mxu0
      %v2524 = vadd.f32 %v2363, %v2523
      %v2525 = vpop.f32.mrb[0].mxu0
      %v2526 = vpop.f32.mrb[0].mxu0
      %v2527 = vadd.f32 %v2366, %v2526
      %v2528 = vpop.f32.mrb[0].mxu0
      %2529 = vmatprep.mubr.bf16.mxu0 %v2183
      %2530 = vmatmul.mubr.bf16.gmra.mrb[0].mxu0 %v2182
      %v2531 = vpop.f32.mrb[0].mxu0
      %v2532 = vadd.f32 %v2371, %v2531
      %v2533 = vpop.f32.mrb[0].mxu0
      %v2534 = vpop.f32.mrb[0].mxu0
      %v2535 = vadd.f32 %v2374, %v2534
      %v2536 = vpop.f32.mrb[0].mxu0
      %2537 = vmatprep.mubr.bf16.mxu0 %v2187
      %2538 = vmatmul.mubr.bf16.gmra.mrb[0].mxu0 %v2186
      %v2539 = vpop.f32.mrb[0].mxu0
      %v2540 = vadd.f32 %v2379, %v2539
      %v2541 = vpop.f32.mrb[0].mxu0
      %v2542 = vpop.f32.mrb[0].mxu0
      %v2543 = vadd.f32 %v2382, %v2542
      %v2544 = vpop.f32.mrb[0].mxu0
      %2545 = vmatprep.mubr.bf16.mxu0 %v2191
      %2546 = vmatmul.mubr.bf16.gmra.mrb[0].mxu0 %v2190
      %v2547 = vpop.f32.mrb[0].mxu0
      %v2548 = vadd.f32 %v2387, %v2547
      %v2549 = vpop.f32.mrb[0].mxu0
      %v2550 = vpop.f32.mrb[0].mxu0
      %v2551 = vadd.f32 %v2390, %v2550
      %v2552 = vpop.f32.mrb[0].mxu0
      %2553 = vmatprep.mubr.bf16.mxu0 %v2195
      %2554 = vmatmul.mubr.bf16.gmra.mrb[0].mxu0 %v2194
      %v2555 = vpop.f32.mrb[0].mxu0
      %v2556 = vadd.f32 %v2395, %v2555
      %v2557 = vpop.f32.mrb[0].mxu0
      %v2558 = vpop.f32.mrb[0].mxu0
      %v2559 = vadd.f32 %v2398, %v2558
      %v2560 = vpop.f32.mrb[0].mxu0
      %2561 = vmatprep.mubr.bf16.mxu0 %v2199
      %2562 = vmatmul.mubr.bf16.gmra.mrb[0].mxu0 %v2198
      %v2563 = vpop.f32.mrb[0].mxu0
      %v2564 = vadd.f32 %v2403, %v2563
      %v2565 = vpop.f32.mrb[0].mxu0
      %v2566 = vpop.f32.mrb[0].mxu0
      %v2567 = vadd.f32 %v2406, %v2566
      %v2568 = vpop.f32.mrb[0].mxu0
      %2569 = vmatprep.mubr.bf16.mxu0 %v2203
      %2570 = vmatmul.mubr.bf16.gmra.mrb[0].mxu0 %v2202
      %v2571 = vpop.f32.mrb[0].mxu0
      %v2572 = vadd.f32 %v2411, %v2571
      %v2573 = vpop.f32.mrb[0].mxu0
      %v2574 = vpop.f32.mrb[0].mxu0
      %v2575 = vadd.f32 %v2414, %v2574
      %v2576 = vpop.f32.mrb[0].mxu0
      %2577 = vmatprep.mubr.bf16.mxu0 %v2207
      %2578 = vmatmul.mubr.bf16.gmra.mrb[0].mxu0 %v2206
      %v2579 = vpop.f32.mrb[0].mxu0
      %v2580 = vadd.f32 %v2419, %v2579
      %v2581 = vpop.f32.mrb[0].mxu0
      %v2582 = vpop.f32.mrb[0].mxu0
      %v2583 = vadd.f32 %v2422, %v2582
      %v2584 = vpop.f32.mrb[0].mxu0
      %2585 = vmatprep.mubr.bf16.mxu0 %v2211
      %2586 = vmatmul.mubr.bf16.gmra.mrb[0].mxu0 %v2210
      %v2587 = vpop.f32.mrb[0].mxu0
      %v2588 = vadd.f32 %v2427, %v2587
      %v2589 = vpop.f32.mrb[0].mxu0
      %v2590 = vpop.f32.mrb[0].mxu0
      %v2591 = vadd.f32 %v2430, %v2590
      %v2592 = vpop.f32.mrb[0].mxu0
      %2593 = vmatprep.mubr.bf16.mxu0 %v2215
      %2594 = vmatmul.mubr.bf16.gmra.mrb[0].mxu0 %v2214
      %v2595 = vpop.f32.mrb[0].mxu0
      %v2596 = vadd.f32 %v2435, %v2595
      %v2597 = vpop.f32.mrb[0].mxu0
      %v2598 = vpop.f32.mrb[0].mxu0
      %v2599 = vadd.f32 %v2438, %v2598
      %v2600 = vpop.f32.mrb[0].mxu0
      %2601 = vdwg.mxu0
      %v2602 = vmax.f32 %v2476, 0.0
      %v2603 = vmax.f32 %v2479, 0.0
      %v2604 = vmax.f32 %v2484, 0.0
      %v2605 = vmax.f32 %v2487, 0.0
      %v2606 = vmax.f32 %v2492, 0.0
      %v2607 = vmax.f32 %v2495, 0.0
      %v2608 = vmax.f32 %v2500, 0.0
      %v2609 = vmax.f32 %v2503, 0.0
      %v2610 = vmax.f32 %v2508, 0.0
      %v2611 = vmax.f32 %v2511, 0.0
      %v2612 = vmax.f32 %v2516, 0.0
      %v2613 = vmax.f32 %v2519, 0.0
      %v2614 = vmax.f32 %v2524, 0.0
      %v2615 = vmax.f32 %v2527, 0.0
      %v2616 = vmax.f32 %v2532, 0.0
      %v2617 = vmax.f32 %v2535, 0.0
      %v2618 = vmax.f32 %v2540, 0.0
      %v2619 = vmax.f32 %v2543, 0.0
      %v2620 = vmax.f32 %v2548, 0.0
      %v2621 = vmax.f32 %v2551, 0.0
      %v2622 = vmax.f32 %v2556, 0.0
      %v2623 = vmax.f32 %v2559, 0.0
      %v2624 = vmax.f32 %v2564, 0.0
      %v2625 = vmax.f32 %v2567, 0.0
      %v2626 = vmax.f32 %v2572, 0.0
      %v2627 = vmax.f32 %v2575, 0.0
      %v2628 = vmax.f32 %v2580, 0.0
      %v2629 = vmax.f32 %v2583, 0.0
      %v2630 = vmax.f32 %v2588, 0.0
      %v2631 = vmax.f32 %v2591, 0.0
      %v2632 = vmax.f32 %v2596, 0.0
      %v2633 = vmax.f32 %v2599, 0.0
      %v2634 = vld [vmem:[%s7] sm:$0xff]
      %v2635 = vld [vmem:[%s7 + $0x8] sm:$0xff]
      %v2636 = vld [vmem:[%s7 + $0x10] sm:$0xff]
      %v2637 = vld [vmem:[%s7 + $0x18] sm:$0xff]
      %v2638 = vld [vmem:[%s7 + $0x20] sm:$0xff]
      %v2639 = vld [vmem:[%s7 + $0x28] sm:$0xff]
      %v2640 = vld [vmem:[%s7 + $0x30] sm:$0xff]
      %v2641 = vld [vmem:[%s7 + $0x38] sm:$0xff]
      %v2642 = vld [vmem:[%s7 + $0x40] sm:$0xff]
      %v2643 = vld [vmem:[%s7 + $0x48] sm:$0xff]
      %v2644 = vld [vmem:[%s7 + $0x50] sm:$0xff]
      %v2645 = vld [vmem:[%s7 + $0x58] sm:$0xff]
      %v2646 = vld [vmem:[%s7 + $0x60] sm:$0xff]
      %v2647 = vld [vmem:[%s7 + $0x68] sm:$0xff]
      %v2648 = vld [vmem:[%s7 + $0x70] sm:$0xff]
      %v2649 = vld [vmem:[%s7 + $0x78] sm:$0xff]
      %v2650 = vpack.c.bf16 %v2603, %v2602
      %v2651 = vpack.c.bf16 %v2605, %v2604
      %v2652 = vpack.c.bf16 %v2607, %v2606
      %v2653 = vpack.c.bf16 %v2609, %v2608
      %v2654 = vpack.c.bf16 %v2611, %v2610
      %v2655 = vpack.c.bf16 %v2613, %v2612
      %v2656 = vpack.c.bf16 %v2615, %v2614
      %v2657 = vpack.c.bf16 %v2617, %v2616
      %v2658 = vpack.c.bf16 %v2619, %v2618
      %v2659 = vpack.c.bf16 %v2621, %v2620
      %v2660 = vpack.c.bf16 %v2623, %v2622
      %v2661 = vpack.c.bf16 %v2625, %v2624
      %v2662 = vpack.c.bf16 %v2627, %v2626
      %v2663 = vpack.c.bf16 %v2629, %v2628
      %v2664 = vpack.c.bf16 %v2631, %v2630
      %v2665 = vpack.c.bf16 %v2633, %v2632
      %v2666 = vld [vmem:[%s8] sm:$0xff]
      %v2667 = vld [vmem:[%s8 + $0x8] sm:$0xff]
      %v2668 = vld [vmem:[%s8 + $0x10] sm:$0xff]
      %v2669 = vld [vmem:[%s8 + $0x18] sm:$0xff]
      %v2670 = vld [vmem:[%s8 + $0x20] sm:$0xff]
      %v2671 = vld [vmem:[%s8 + $0x28] sm:$0xff]
      %v2672 = vld [vmem:[%s8 + $0x30] sm:$0xff]
      %v2673 = vld [vmem:[%s8 + $0x38] sm:$0xff]
      %v2674 = vld [vmem:[%s8 + $0x40] sm:$0xff]
      %v2675 = vld [vmem:[%s8 + $0x48] sm:$0xff]
      %v2676 = vld [vmem:[%s8 + $0x50] sm:$0xff]
      %v2677 = vld [vmem:[%s8 + $0x58] sm:$0xff]
      %v2678 = vld [vmem:[%s8 + $0x60] sm:$0xff]
      %v2679 = vld [vmem:[%s8 + $0x68] sm:$0xff]
      %v2680 = vld [vmem:[%s8 + $0x70] sm:$0xff]
      %v2681 = vld [vmem:[%s8 + $0x78] sm:$0xff]
      %2683 = vset.pattern.permute.xlu0 0
      %2684 = vperm.xlu0 %2683, %v2666
      %v2685 = vpop.permute.xlu0 %2684
      %2688 = vset.pattern.permute.xlu0 0
      %2689 = vperm.xlu0 %2688, %v2667
      %v2690 = vpop.permute.xlu0 %2689
      %2693 = vset.pattern.permute.xlu0 0
      %2694 = vperm.xlu0 %2693, %v2668
      %v2695 = vpop.permute.xlu0 %2694
      %2698 = vset.pattern.permute.xlu0 0
      %2699 = vperm.xlu0 %2698, %v2669
      %v2700 = vpop.permute.xlu0 %2699
      %2703 = vset.pattern.permute.xlu0 0
      %2704 = vperm.xlu0 %2703, %v2670
      %v2705 = vpop.permute.xlu0 %2704
      %2708 = vset.pattern.permute.xlu0 0
      %2709 = vperm.xlu0 %2708, %v2671
      %v2710 = vpop.permute.xlu0 %2709
      %2713 = vset.pattern.permute.xlu0 0
      %2714 = vperm.xlu0 %2713, %v2672
      %v2715 = vpop.permute.xlu0 %2714
      %2718 = vset.pattern.permute.xlu0 0
      %2719 = vperm.xlu0 %2718, %v2673
      %v2720 = vpop.permute.xlu0 %2719
      %2723 = vset.pattern.permute.xlu0 0
      %2724 = vperm.xlu0 %2723, %v2674
      %v2725 = vpop.permute.xlu0 %2724
      %2728 = vset.pattern.permute.xlu0 0
      %2729 = vperm.xlu0 %2728, %v2675
      %v2730 = vpop.permute.xlu0 %2729
      %2733 = vset.pattern.permute.xlu0 0
      %2734 = vperm.xlu0 %2733, %v2676
      %v2735 = vpop.permute.xlu0 %2734
      %2738 = vset.pattern.permute.xlu0 0
      %2739 = vperm.xlu0 %2738, %v2677
      %v2740 = vpop.permute.xlu0 %2739
      %2743 = vset.pattern.permute.xlu0 0
      %2744 = vperm.xlu0 %2743, %v2678
      %v2745 = vpop.permute.xlu0 %2744
      %2748 = vset.pattern.permute.xlu0 0
      %2749 = vperm.xlu0 %2748, %v2679
      %v2750 = vpop.permute.xlu0 %2749
      %2753 = vset.pattern.permute.xlu0 0
      %2754 = vperm.xlu0 %2753, %v2680
      %v2755 = vpop.permute.xlu0 %2754
      %2758 = vset.pattern.permute.xlu0 0
      %2759 = vperm.xlu0 %2758, %v2681
      %v2760 = vpop.permute.xlu0 %2759
      %v2778 = vunpack.c.l.b16 %v2634
      %v2779 = vunpack.c.h.b16 %v2634
      %v2780 = vunpack.c.l.b16 %v2635
      %v2781 = vunpack.c.h.b16 %v2635
      %v2782 = vunpack.c.l.b16 %v2636
      %v2783 = vunpack.c.h.b16 %v2636
      %v2784 = vunpack.c.l.b16 %v2637
      %v2785 = vunpack.c.h.b16 %v2637
      %v2786 = vunpack.c.l.b16 %v2638
      %v2787 = vunpack.c.h.b16 %v2638
      %v2788 = vunpack.c.l.b16 %v2639
      %v2789 = vunpack.c.h.b16 %v2639
      %v2790 = vunpack.c.l.b16 %v2640
      %v2791 = vunpack.c.h.b16 %v2640
      %v2792 = vunpack.c.l.b16 %v2641
      %v2793 = vunpack.c.h.b16 %v2641
      %v2794 = vunpack.c.l.b16 %v2642
      %v2795 = vunpack.c.h.b16 %v2642
      %v2796 = vunpack.c.l.b16 %v2643
      %v2797 = vunpack.c.h.b16 %v2643
      %v2798 = vunpack.c.l.b16 %v2644
      %v2799 = vunpack.c.h.b16 %v2644
      %v2800 = vunpack.c.l.b16 %v2645
      %v2801 = vunpack.c.h.b16 %v2645
      %v2802 = vunpack.c.l.b16 %v2646
      %v2803 = vunpack.c.h.b16 %v2646
      %v2804 = vunpack.c.l.b16 %v2647
      %v2805 = vunpack.c.h.b16 %v2647
      %v2806 = vunpack.c.l.b16 %v2648
      %v2807 = vunpack.c.h.b16 %v2648
      %v2808 = vunpack.c.l.b16 %v2649
      %v2809 = vunpack.c.h.b16 %v2649
      %v2810 = vpack.c.b16 %v2780, %v2778
      %v2811 = vpack.c.b16 %v2781, %v2779
      %v2812 = vpack.c.b16 %v2784, %v2782
      %v2813 = vpack.c.b16 %v2785, %v2783
      %v2814 = vpack.c.b16 %v2788, %v2786
      %v2815 = vpack.c.b16 %v2789, %v2787
      %v2816 = vpack.c.b16 %v2792, %v2790
      %v2817 = vpack.c.b16 %v2793, %v2791
      %v2818 = vpack.c.b16 %v2796, %v2794
      %v2819 = vpack.c.b16 %v2797, %v2795
      %v2820 = vpack.c.b16 %v2800, %v2798
      %v2821 = vpack.c.b16 %v2801, %v2799
      %v2822 = vpack.c.b16 %v2804, %v2802
      %v2823 = vpack.c.b16 %v2805, %v2803
      %v2824 = vpack.c.b16 %v2808, %v2806
      %v2825 = vpack.c.b16 %v2809, %v2807
      %2842 = vmatprep.subr.bf16.mxu0 0
      %2843 = vmatpush1.bf16.msra.mxu0 %v2650
      %2844 = vmatprep.subr.bf16.mxu0 0
      %2845 = vmatpush1.bf16.msra.mxu0 %v2651
      %2846 = vmatprep.subr.bf16.mxu0 0
      %2847 = vmatpush1.bf16.msra.mxu0 %v2652
      %2848 = vmatprep.subr.bf16.mxu0 0
      %2849 = vmatpush1.bf16.msra.mxu0 %v2653
      %2850 = vmatprep.subr.bf16.mxu0 0
      %2851 = vmatpush1.bf16.msra.mxu0 %v2654
      %2852 = vmatprep.subr.bf16.mxu0 0
      %2853 = vmatpush1.bf16.msra.mxu0 %v2655
      %2854 = vmatprep.subr.bf16.mxu0 0
      %2855 = vmatpush1.bf16.msra.mxu0 %v2656
      %2856 = vmatprep.subr.bf16.mxu0 0
      %2857 = vmatpush1.bf16.msra.mxu0 %v2657
      %2858 = vmatprep.subr.bf16.mxu0 0
      %2859 = vmatpush1.bf16.msra.mxu0 %v2658
      %2860 = vmatprep.subr.bf16.mxu0 0
      %2861 = vmatpush1.bf16.msra.mxu0 %v2659
      %2862 = vmatprep.subr.bf16.mxu0 0
      %2863 = vmatpush1.bf16.msra.mxu0 %v2660
      %2864 = vmatprep.subr.bf16.mxu0 0
      %2865 = vmatpush1.bf16.msra.mxu0 %v2661
      %2866 = vmatprep.subr.bf16.mxu0 0
      %2867 = vmatpush1.bf16.msra.mxu0 %v2662
      %2868 = vmatprep.subr.bf16.mxu0 0
      %2869 = vmatpush1.bf16.msra.mxu0 %v2663
      %2870 = vmatprep.subr.bf16.mxu0 0
      %2871 = vmatpush1.bf16.msra.mxu0 %v2664
      %2872 = vmatprep.subr.bf16.mxu0 0
      %2873 = vmatpush1.bf16.msra.mxu0 %v2665
      %2874 = vmatprep.mubr.bf16.mxu0 %v2811
      %2875 = vmatmul.mubr.bf16.gmra.mrb[0].mxu0 %v2810
      %v2876 = vpop.f32.mrb[0].mxu0
      %v2877 = vadd.f32 %v2685, %v2876
      %v2878 = vpop.f32.mrb[0].mxu0
      %v2879 = vpop.f32.mrb[0].mxu0
      %v2880 = vadd.f32 %v2690, %v2879
      %v2881 = vpop.f32.mrb[0].mxu0
      %2882 = vmatprep.mubr.bf16.mxu0 %v2813
      %2883 = vmatmul.mubr.bf16.gmra.mrb[0].mxu0 %v2812
      %v2884 = vpop.f32.mrb[0].mxu0
      %v2885 = vadd.f32 %v2695, %v2884
      %v2886 = vpop.f32.mrb[0].mxu0
      %v2887 = vpop.f32.mrb[0].mxu0
      %v2888 = vadd.f32 %v2700, %v2887
      %v2889 = vpop.f32.mrb[0].mxu0
      %2890 = vmatprep.mubr.bf16.mxu0 %v2815
      %2891 = vmatmul.mubr.bf16.gmra.mrb[0].mxu0 %v2814
      %v2892 = vpop.f32.mrb[0].mxu0
      %v2893 = vadd.f32 %v2705, %v2892
      %v2894 = vpop.f32.mrb[0].mxu0
      %v2895 = vpop.f32.mrb[0].mxu0
      %v2896 = vadd.f32 %v2710, %v2895
      %v2897 = vpop.f32.mrb[0].mxu0
      %2898 = vmatprep.mubr.bf16.mxu0 %v2817
      %2899 = vmatmul.mubr.bf16.gmra.mrb[0].mxu0 %v2816
      %v2900 = vpop.f32.mrb[0].mxu0
      %v2901 = vadd.f32 %v2715, %v2900
      %v2902 = vpop.f32.mrb[0].mxu0
      %v2903 = vpop.f32.mrb[0].mxu0
      %v2904 = vadd.f32 %v2720, %v2903
      %v2905 = vpop.f32.mrb[0].mxu0
      %2906 = vmatprep.mubr.bf16.mxu0 %v2819
      %2907 = vmatmul.mubr.bf16.gmra.mrb[0].mxu0 %v2818
      %v2908 = vpop.f32.mrb[0].mxu0
      %v2909 = vadd.f32 %v2725, %v2908
      %v2910 = vpop.f32.mrb[0].mxu0
      %v2911 = vpop.f32.mrb[0].mxu0
      %v2912 = vadd.f32 %v2730, %v2911
      %v2913 = vpop.f32.mrb[0].mxu0
      %2914 = vmatprep.mubr.bf16.mxu0 %v2821
      %2915 = vmatmul.mubr.bf16.gmra.mrb[0].mxu0 %v2820
      %v2916 = vpop.f32.mrb[0].mxu0
      %v2917 = vadd.f32 %v2735, %v2916
      %v2918 = vpop.f32.mrb[0].mxu0
      %v2919 = vpop.f32.mrb[0].mxu0
      %v2920 = vadd.f32 %v2740, %v2919
      %v2921 = vpop.f32.mrb[0].mxu0
      %2922 = vmatprep.mubr.bf16.mxu0 %v2823
      %2923 = vmatmul.mubr.bf16.gmra.mrb[0].mxu0 %v2822
      %v2924 = vpop.f32.mrb[0].mxu0
      %v2925 = vadd.f32 %v2745, %v2924
      %v2926 = vpop.f32.mrb[0].mxu0
      %v2927 = vpop.f32.mrb[0].mxu0
      %v2928 = vadd.f32 %v2750, %v2927
      %v2929 = vpop.f32.mrb[0].mxu0
      %2930 = vmatprep.mubr.bf16.mxu0 %v2825
      %2931 = vmatmul.mubr.bf16.gmra.mrb[0].mxu0 %v2824
      %v2932 = vpop.f32.mrb[0].mxu0
      %v2933 = vadd.f32 %v2755, %v2932
      %v2934 = vpop.f32.mrb[0].mxu0
      %v2935 = vpop.f32.mrb[0].mxu0
      %v2936 = vadd.f32 %v2760, %v2935
      %v2937 = vpop.f32.mrb[0].mxu0
      %2938 = vdwg.mxu0
      %v2939 = vmax.f32 %v2877, 0.0
      %v2940 = vmax.f32 %v2880, 0.0
      %v2941 = vmax.f32 %v2885, 0.0
      %v2942 = vmax.f32 %v2888, 0.0
      %v2943 = vmax.f32 %v2893, 0.0
      %v2944 = vmax.f32 %v2896, 0.0
      %v2945 = vmax.f32 %v2901, 0.0
      %v2946 = vmax.f32 %v2904, 0.0
      %v2947 = vmax.f32 %v2909, 0.0
      %v2948 = vmax.f32 %v2912, 0.0
      %v2949 = vmax.f32 %v2917, 0.0
      %v2950 = vmax.f32 %v2920, 0.0
      %v2951 = vmax.f32 %v2925, 0.0
      %v2952 = vmax.f32 %v2928, 0.0
      %v2953 = vmax.f32 %v2933, 0.0
      %v2954 = vmax.f32 %v2936, 0.0
      %v2955 = vld [vmem:[%s9] sm:$0xf]
      %v2956 = vpack.c.bf16 %v2940, %v2939
      %v2957 = vpack.c.bf16 %v2942, %v2941
      %v2958 = vpack.c.bf16 %v2944, %v2943
      %v2959 = vpack.c.bf16 %v2946, %v2945
      %v2960 = vpack.c.bf16 %v2948, %v2947
      %v2961 = vpack.c.bf16 %v2950, %v2949
      %v2962 = vpack.c.bf16 %v2952, %v2951
      %v2963 = vpack.c.bf16 %v2954, %v2953
      %v2964 = vld [vmem:[%s10] sm:$0xff]
      %2966 = vset.pattern.permute.xlu0 0
      %2967 = vperm.xlu0 %2966, %v2964
      %v2968 = vpop.permute.xlu0 %2967
      %2970 = vmatprep.subr.bf16.mxu0 0
      %2971 = vmatpush1.bf16.msra.mxu0 %v2956
      %2972 = vmatprep.subr.bf16.mxu0 0
      %2973 = vmatpush1.bf16.msra.mxu0 %v2957
      %2974 = vmatprep.subr.bf16.mxu0 0
      %2975 = vmatpush1.bf16.msra.mxu0 %v2958
      %2976 = vmatprep.subr.bf16.mxu0 0
      %2977 = vmatpush1.bf16.msra.mxu0 %v2959
      %2978 = vmatprep.subr.bf16.mxu0 0
      %2979 = vmatpush1.bf16.msra.mxu0 %v2960
      %2980 = vmatprep.subr.bf16.mxu0 0
      %2981 = vmatpush1.bf16.msra.mxu0 %v2961
      %2982 = vmatprep.subr.bf16.mxu0 0
      %2983 = vmatpush1.bf16.msra.mxu0 %v2962
      %2984 = vmatprep.subr.bf16.mxu0 0
      %2985 = vmatpush1.bf16.msra.mxu0 %v2963
      %2986 = vmatprep.subr.bf16.mxu0 0
      %2987 = vmatpush1.bf16.msra.mxu0 0
      %2988 = vmatprep.subr.bf16.mxu0 0
      %2989 = vmatpush1.bf16.msra.mxu0 0
      %2990 = vmatprep.subr.bf16.mxu0 0
      %2991 = vmatpush1.bf16.msra.mxu0 0
      %2992 = vmatprep.subr.bf16.mxu0 0
      %2993 = vmatpush1.bf16.msra.mxu0 0
      %2994 = vmatprep.subr.bf16.mxu0 0
      %2995 = vmatpush1.bf16.msra.mxu0 0
      %2996 = vmatprep.subr.bf16.mxu0 0
      %2997 = vmatpush1.bf16.msra.mxu0 0
      %2998 = vmatprep.subr.bf16.mxu0 0
      %2999 = vmatpush1.bf16.msra.mxu0 0
      %3000 = vmatprep.subr.bf16.mxu0 0
      %3001 = vmatpush1.bf16.msra.mxu0 0
      %3002 = vmatprep.mubr.bf16.mxu0 0
      %3003 = vmatmul.mubr.bf16.gmra.mrb[0].mxu0 %v2955
      %v3004 = vpop.f32.mrb[0].mxu0
      %v3005 = vadd.f32 %v2968, %v3004
      %v3006 = vpop.f32.mrb[0].mxu0
      %v3007 = vpop.f32.mrb[0].mxu0
      %v3008 = vpop.f32.mrb[0].mxu0
      %3009 = vdwg.mxu0
      %3010 = vst [vmem:[%s437] sm:$0xff] %v3005
      %p3011 = scmp.lt.s32.totalorder %s26, 1
      %s3012 = scalar_select %p3011, %s26, 1
      %p3013 = scmp.lt.s32.totalorder %s27, 3
      %s3014 = scalar_select %p3013, %s27, 3
      %s3015 = smul.addr %s3012, 4
      %s3016 = sadd.s32 %s3014, %s3015
      %s3017 = smul.addr %s3016, 8
      %s3018 = scalar_lea.vmem %s11, %s3017
      // Predicated region
      $region65: #{pointnet_seg_forward.3} parent=63 // pred_check
        %p3019 = pneg %p297
      $region66: #{pointnet_seg_forward.3} parent=63 // pred_check_branch
        %3021 = sbr.rel (%p3019) target = $region68
      $region67: #{pointnet_seg_forward.3} parent=63 // pred_region
        _
      $region68: #{pointnet_seg_forward.3} parent=63 // pred_fallthru
        _
    $region64: #{pointnet_seg_forward.3} parent=5 // pred_fallthru
      _
    %p3022 = scmp.le.s32.totalorder 2, %s17
    // Predicated region
    $region69: #{pointnet_seg_forward.3} parent=5 // pred_check
      %p3023 = pneg %p3022
    $region70: #{pointnet_seg_forward.3} parent=5 // pred_check_branch
      %3025 = sbr.rel (%p3023) target = $region72
    $region71: #{pointnet_seg_forward.3} parent=5 // pred_region
      %s3026 = ssub.s32 %s17, 2
      // Predicated region
      $region73: #{pointnet_seg_forward.3} parent=71 // pred_check
        %p3027 = pneg %p303
      $region74: #{pointnet_seg_forward.3} parent=71 // pred_check_branch
        %3029 = sbr.rel (%p3027) target = $region76
      $region75: #{pointnet_seg_forward.3} parent=71 // pred_region
        %p3030 = scmp.lt.s32.totalorder %s28, 1
        %s3031 = scalar_select %p3030, %s28, 1
        %p3032 = scmp.lt.s32.totalorder %s29, 3
        %s3033 = scalar_select %p3032, %s29, 3
        %s3034 = smul.addr %s3031, 4
        %s3035 = sadd.s32 %s3033, %s3034
        %s3036 = smul.addr %s3035, 8
        %s3037 = scalar_lea.vmem %s11, %s3036
      $region76: #{pointnet_seg_forward.3} parent=71 // pred_fallthru
        _
    $region72: #{pointnet_seg_forward.3} parent=5 // pred_fallthru
      _
  $region6: #{pointnet_seg_forward.3} parent=0 // loop_footer
    %s21 = sadd.s32 1, %s17
  $region7: #{pointnet_seg_forward.3} parent=0 // loop_footer_branch
    %16 = sbr.rel target = $region3
  $region8: #{pointnet_seg_forward.3} parent=0 // loop_exit
    _

// kernel: pointnet_seg_forward.2
$region0: #{pointnet_seg_forward.2}
  #allocation0 [shape = 'u32[]', space=smem, size = 0x4, offset = 0x4, fixed_abs, tag = 'smem constant byte address 0x4 - core index']
  #allocation1 [shape = 'u32[144,128]{1,0:T(1,128)}', space=vmem, size = 0x12000, scoped, tag = 'internal scratch']
  %s0 = inlined_call_operand.vmem [shape: f32[2,3,512], index: 0, kind: input, shape index: {}]
  %s1 = inlined_call_operand.vmem [shape: bf16[64,3], index: 1, kind: input, shape index: {}]
  %s2 = inlined_call_operand.vmem [shape: f32[64,1], index: 2, kind: input, shape index: {}]
  %s3 = inlined_call_operand.vmem [shape: bf16[128,64], index: 3, kind: input, shape index: {}]
  %s4 = inlined_call_operand.vmem [shape: f32[128,1], index: 4, kind: input, shape index: {}]
  %s5 = inlined_call_operand.hbm [shape: bf16[1024,128], index: 5, kind: input, shape index: {}]
  %s6 = inlined_call_operand.vmem [shape: f32[1024,1], index: 6, kind: input, shape index: {}]
  %s7 = inlined_call_operand.vmem [shape: f32[2,1024,1], index: 7, kind: output, shape index: {}]
  %s8 = sld [smem:[#allocation0]]
  $region69: #{pointnet_seg_forward.2} parent=0
    _
  %s10 = ssub.s32 1, %s8
  %s11 = scalar_select 0, %s10, %s8
  $region1: #{pointnet_seg_forward.2} parent=0
    #allocation2 [shape = 'u8[262144]{0}', space=vmem, size = 0x40000, scoped, tag = 'input window, operand 5, single buffered']
    #allocation3 [shape = 's32[2]{0}', space=sflag, size = 0x8, scoped, tag = 'scoped memory for pointnet_seg_forward.2']
    %12 = vsyncpa [#allocation3], 0
    loop: start=0, step=1, limit=10
    $region2: #{pointnet_seg_forward.2} parent=1 // loop_pre_header
      _
    $region3: #{pointnet_seg_forward.2} parent=1 // loop_header
      %s14 = sphi 0, %s18
      %p15 = scmp.ge.s32.totalorder %s14, 10
      %s21 = sphi 0, %s33
      %s22 = sphi 0, %s29
      %s23 = sphi 0, %s21
      %s24 = sphi 0, %s22
      %s25 = sphi 0, %s23
      %s26 = sphi 0, %s24
      %s38 = sphi 0, %s40
      %s41 = sphi 0, %s38
      %s42 = sphi 0, %s41
      %s58 = sphi 0, %s42
      %s62 = sphi 0, %s62
      %s64 = sphi 0, %s62
      %s65 = sphi 0, %s64
      %s79 = sphi 0, %s65
      %s83 = sphi 0, %s83
      %s85 = sphi 0, %s83
      %s86 = sphi 0, %s85
      %s100 = sphi 0, %s86
      %s104 = sphi 0, %s104
      %s106 = sphi 0, %s104
      %s107 = sphi 0, %s106
      %s121 = sphi 0, %s107
      %s125 = sphi 0, %s125
      %s127 = sphi 0, %s125
      %s128 = sphi 0, %s127
      %s142 = sphi 0, %s128
      %s146 = sphi 0, %s146
      %s148 = sphi 0, %s146
      %s149 = sphi 0, %s148
      %s163 = sphi 0, %s149
      %s167 = sphi 0, %s167
      %s169 = sphi 0, %s167
      %s170 = sphi 0, %s169
      %s184 = sphi 0, %s170
      %s190 = sphi 0, %s192
      %s193 = sphi 0, %s190
      %s194 = sphi 0, %s193
      %s210 = sphi 0, %s194
    $region4: #{pointnet_seg_forward.2} parent=1 // loop_header_branch
      %17 = sbr.rel (%p15) target = $region8
    $region5: #{pointnet_seg_forward.2} parent=1 // loop_body
      %s19 = ssub.s32 %s14, 1
      %s20 = ssub.s32 %s14, 2
      %s27 = sadd.s32 1, %s22
      %p28 = scmp.ge.s32.totalorder %s27, 4
      %s29 = scalar_select %p28, 0, %s27
      %s30 = sadd.s32 1, %s21
      %s31 = scalar_select %p28, %s30, %s21
      %p32 = scmp.ge.s32.totalorder %s31, 2
      %s33 = scalar_select %p32, 0, %s31
      %s34 = ssub.s32 %s21, %s33
      %s35 = ssub.s32 %s22, %s29
      %s36 = sor.u32 %s34, %s35
      %p37 = scmp.eq.s32.totalorder %s36, 0
      %s39 = sadd.s32 %s38, 1
      %s40 = scalar_select %p37, %s38, %s39
      %p43 = pneg %p37
      %p44 = scmp.eq.s32.totalorder %s14, 7
      %p45 = por %p43, %p44
      %p46 = scmp.ne.s32.totalorder %s38, %s41
      %p47 = scmp.eq.s32.totalorder %s14, 0
      %p48 = por %p46, %p47
      %p49 = scmp.ne.s32.totalorder %s38, %s41
      %p50 = scmp.eq.s32.totalorder %s19, 7
      %p51 = por %p49, %p50
      %p52 = scmp.ne.s32.totalorder %s41, %s42
      %p53 = scmp.eq.s32.totalorder %s19, 0
      %p54 = por %p52, %p53
      %p55 = scmp.ne.s32.totalorder %s41, %s42
      %p56 = scmp.eq.s32.totalorder %s20, 7
      %p57 = por %p55, %p56
      %p59 = scmp.ne.s32.totalorder %s42, %s58
      %p60 = scmp.eq.s32.totalorder %s20, 0
      %p61 = por %p59, %p60
      %s63 = sadd.s32 %s62, 1
      %p66 = scmp.eq.s32.totalorder %s14, 7
      %p67 = scmp.ne.s32.totalorder %s62, %s64
      %p68 = scmp.eq.s32.totalorder %s14, 0
      %p69 = por %p67, %p68
      %p70 = scmp.ne.s32.totalorder %s62, %s64
      %p71 = scmp.eq.s32.totalorder %s19, 7
      %p72 = por %p70, %p71
      %p73 = scmp.ne.s32.totalorder %s64, %s65
      %p74 = scmp.eq.s32.totalorder %s19, 0
      %p75 = por %p73, %p74
      %p76 = scmp.ne.s32.totalorder %s64, %s65
      %p77 = scmp.eq.s32.totalorder %s20, 7
      %p78 = por %p76, %p77
      %p80 = scmp.ne.s32.totalorder %s65, %s79
      %p81 = scmp.eq.s32.totalorder %s20, 0
      %p82 = por %p80, %p81
      %s84 = sadd.s32 %s83, 1
      %p87 = scmp.eq.s32.totalorder %s14, 7
      %p88 = scmp.ne.s32.totalorder %s83, %s85
      %p89 = scmp.eq.s32.totalorder %s14, 0
      %p90 = por %p88, %p89
      %p91 = scmp.ne.s32.totalorder %s83, %s85
      %p92 = scmp.eq.s32.totalorder %s19, 7
      %p93 = por %p91, %p92
      %p94 = scmp.ne.s32.totalorder %s85, %s86
      %p95 = scmp.eq.s32.totalorder %s19, 0
      %p96 = por %p94, %p95
      %p97 = scmp.ne.s32.totalorder %s85, %s86
      %p98 = scmp.eq.s32.totalorder %s20, 7
      %p99 = por %p97, %p98
      %p101 = scmp.ne.s32.totalorder %s86, %s100
      %p102 = scmp.eq.s32.totalorder %s20, 0
      %p103 = por %p101, %p102
      %s105 = sadd.s32 %s104, 1
      %p108 = scmp.eq.s32.totalorder %s14, 7
      %p109 = scmp.ne.s32.totalorder %s104, %s106
      %p110 = scmp.eq.s32.totalorder %s14, 0
      %p111 = por %p109, %p110
      %p112 = scmp.ne.s32.totalorder %s104, %s106
      %p113 = scmp.eq.s32.totalorder %s19, 7
      %p114 = por %p112, %p113
      %p115 = scmp.ne.s32.totalorder %s106, %s107
      %p116 = scmp.eq.s32.totalorder %s19, 0
      %p117 = por %p115, %p116
      %p118 = scmp.ne.s32.totalorder %s106, %s107
      %p119 = scmp.eq.s32.totalorder %s20, 7
      %p120 = por %p118, %p119
      %p122 = scmp.ne.s32.totalorder %s107, %s121
      %p123 = scmp.eq.s32.totalorder %s20, 0
      %p124 = por %p122, %p123
      %s126 = sadd.s32 %s125, 1
      %p129 = scmp.eq.s32.totalorder %s14, 7
      %p130 = scmp.ne.s32.totalorder %s125, %s127
      %p131 = scmp.eq.s32.totalorder %s14, 0
      %p132 = por %p130, %p131
      %p133 = scmp.ne.s32.totalorder %s125, %s127
      %p134 = scmp.eq.s32.totalorder %s19, 7
      %p135 = por %p133, %p134
      %p136 = scmp.ne.s32.totalorder %s127, %s128
      %p137 = scmp.eq.s32.totalorder %s19, 0
      %p138 = por %p136, %p137
      %p139 = scmp.ne.s32.totalorder %s127, %s128
      %p140 = scmp.eq.s32.totalorder %s20, 7
      %p141 = por %p139, %p140
      %p143 = scmp.ne.s32.totalorder %s128, %s142
      %p144 = scmp.eq.s32.totalorder %s20, 0
      %p145 = por %p143, %p144
      %s147 = sadd.s32 %s146, 1
      %p150 = scmp.eq.s32.totalorder %s14, 7
      %p151 = scmp.ne.s32.totalorder %s146, %s148
      %p152 = scmp.eq.s32.totalorder %s14, 0
      %p153 = por %p151, %p152
      %p154 = scmp.ne.s32.totalorder %s146, %s148
      %p155 = scmp.eq.s32.totalorder %s19, 7
      %p156 = por %p154, %p155
      %p157 = scmp.ne.s32.totalorder %s148, %s149
      %p158 = scmp.eq.s32.totalorder %s19, 0
      %p159 = por %p157, %p158
      %p160 = scmp.ne.s32.totalorder %s148, %s149
      %p161 = scmp.eq.s32.totalorder %s20, 7
      %p162 = por %p160, %p161
      %p164 = scmp.ne.s32.totalorder %s149, %s163
      %p165 = scmp.eq.s32.totalorder %s20, 0
      %p166 = por %p164, %p165
      %s168 = sadd.s32 %s167, 1
      %p171 = scmp.eq.s32.totalorder %s14, 7
      %p172 = scmp.ne.s32.totalorder %s167, %s169
      %p173 = scmp.eq.s32.totalorder %s14, 0
      %p174 = por %p172, %p173
      %p175 = scmp.ne.s32.totalorder %s167, %s169
      %p176 = scmp.eq.s32.totalorder %s19, 7
      %p177 = por %p175, %p176
      %p178 = scmp.ne.s32.totalorder %s169, %s170
      %p179 = scmp.eq.s32.totalorder %s19, 0
      %p180 = por %p178, %p179
      %p181 = scmp.ne.s32.totalorder %s169, %s170
      %p182 = scmp.eq.s32.totalorder %s20, 7
      %p183 = por %p181, %p182
      %p185 = scmp.ne.s32.totalorder %s170, %s184
      %p186 = scmp.eq.s32.totalorder %s20, 0
      %p187 = por %p185, %p186
      %s188 = ssub.s32 %s21, %s33
      %p189 = scmp.eq.s32.totalorder %s188, 0
      %s191 = sadd.s32 %s190, 1
      %s192 = scalar_select %p189, %s190, %s191
      %p195 = pneg %p189
      %p196 = scmp.eq.s32.totalorder %s14, 7
      %p197 = por %p195, %p196
      %p198 = scmp.ne.s32.totalorder %s190, %s193
      %p199 = scmp.eq.s32.totalorder %s14, 0
      %p200 = por %p198, %p199
      %p201 = scmp.ne.s32.totalorder %s190, %s193
      %p202 = scmp.eq.s32.totalorder %s19, 7
      %p203 = por %p201, %p202
      %p204 = scmp.ne.s32.totalorder %s193, %s194
      %p205 = scmp.eq.s32.totalorder %s19, 0
      %p206 = por %p204, %p205
      %p207 = scmp.ne.s32.totalorder %s193, %s194
      %p208 = scmp.eq.s32.totalorder %s20, 7
      %p209 = por %p207, %p208
      %p211 = scmp.ne.s32.totalorder %s194, %s210
      %p212 = scmp.eq.s32.totalorder %s20, 0
      %p213 = por %p211, %p212
      %p214 = scmp.le.s32.totalorder 1, %s14
      %p215 = scmp.lt.s32.totalorder %s14, 9
      %p216 = pnand %p214, %p215
      %p217 = pneg %p216
      // Predicated region
      $region9: #{pointnet_seg_forward.2} parent=5 // pred_check
        _
      $region10: #{pointnet_seg_forward.2} parent=5 // pred_check_branch
        %219 = sbr.rel (%p216) target = $region12
      $region11: #{pointnet_seg_forward.2} parent=5 // pred_region
        %s220 = ssub.s32 %s14, 1
        // Predicated region
        $region13: #{pointnet_seg_forward.2} parent=11 // pred_check
          %p221 = pneg %p75
        $region14: #{pointnet_seg_forward.2} parent=11 // pred_check_branch
          %223 = sbr.rel (%p221) target = $region16
        $region15: #{pointnet_seg_forward.2} parent=11 // pred_region
          _
        $region16: #{pointnet_seg_forward.2} parent=11 // pred_fallthru
          _
        // Predicated region
        $region17: #{pointnet_seg_forward.2} parent=11 // pred_check
          %p224 = pneg %p96
        $region18: #{pointnet_seg_forward.2} parent=11 // pred_check_branch
          %226 = sbr.rel (%p224) target = $region20
        $region19: #{pointnet_seg_forward.2} parent=11 // pred_region
          _
        $region20: #{pointnet_seg_forward.2} parent=11 // pred_fallthru
          _
        // Predicated region
        $region21: #{pointnet_seg_forward.2} parent=11 // pred_check
          %p227 = pneg %p117
        $region22: #{pointnet_seg_forward.2} parent=11 // pred_check_branch
          %229 = sbr.rel (%p227) target = $region24
        $region23: #{pointnet_seg_forward.2} parent=11 // pred_region
          _
        $region24: #{pointnet_seg_forward.2} parent=11 // pred_fallthru
          _
        // Predicated region
        $region25: #{pointnet_seg_forward.2} parent=11 // pred_check
          %p230 = pneg %p138
        $region26: #{pointnet_seg_forward.2} parent=11 // pred_check_branch
          %232 = sbr.rel (%p230) target = $region28
        $region27: #{pointnet_seg_forward.2} parent=11 // pred_region
          _
        $region28: #{pointnet_seg_forward.2} parent=11 // pred_fallthru
          _
        // Predicated region
        $region29: #{pointnet_seg_forward.2} parent=11 // pred_check
          %p233 = pneg %p159
        $region30: #{pointnet_seg_forward.2} parent=11 // pred_check_branch
          %235 = sbr.rel (%p233) target = $region32
        $region31: #{pointnet_seg_forward.2} parent=11 // pred_region
          %s237 = ssub.s32 8192, 8192
          %238 = vsyncadd [#allocation3], %s237
          %s239 = sshll.u32 [#allocation2], 4
          %s240 = int_to_ptr.vmem [resolvable:$true] %s239
          %245 = dma.hbm_to_vmem [thread:$0]  %s5, 8192, %s240, [#allocation3], 64, 64, 4
        $region32: #{pointnet_seg_forward.2} parent=11 // pred_fallthru
          _
        // Predicated region
        $region33: #{pointnet_seg_forward.2} parent=11 // pred_check
          %p246 = pneg %p180
        $region34: #{pointnet_seg_forward.2} parent=11 // pred_check_branch
          %248 = sbr.rel (%p246) target = $region36
        $region35: #{pointnet_seg_forward.2} parent=11 // pred_region
          _
        $region36: #{pointnet_seg_forward.2} parent=11 // pred_fallthru
          _
      $region12: #{pointnet_seg_forward.2} parent=5 // pred_fallthru
        _
      %p249 = scmp.lt.s32.totalorder %s14, 8
      // Predicated region
      $region37: #{pointnet_seg_forward.2} parent=5 // pred_check
        %p250 = pneg %p249
      $region38: #{pointnet_seg_forward.2} parent=5 // pred_check_branch
        %252 = sbr.rel (%p250) target = $region40
      $region39: #{pointnet_seg_forward.2} parent=5 // pred_region
        // Predicated region
        $region41: #{pointnet_seg_forward.2} parent=39 // pred_check
          %p253 = pneg %p48
        $region42: #{pointnet_seg_forward.2} parent=39 // pred_check_branch
          %255 = sbr.rel (%p253) target = $region44
        $region43: #{pointnet_seg_forward.2} parent=39 // pred_region
          %p256 = scmp.lt.s32.totalorder %s21, 1
          %s257 = scalar_select %p256, %s21, 1
          %p258 = scmp.lt.s32.totalorder %s22, 3
          %s259 = scalar_select %p258, %s22, 3
          %s260 = smul.addr %s257, 4
          %s261 = sadd.s32 %s259, %s260
          %s262 = smul.addr %s261, 4
          %s263 = scalar_lea.vmem %s0, %s262
        $region44: #{pointnet_seg_forward.2} parent=39 // pred_fallthru
          _
      $region40: #{pointnet_seg_forward.2} parent=5 // pred_fallthru
        _
      %p264 = scmp.le.s32.totalorder 1, %s14
      %p265 = scmp.lt.s32.totalorder %s14, 9
      %p266 = pnand %p264, %p265
      %p267 = pneg %p266
      // Predicated region
      $region45: #{pointnet_seg_forward.2} parent=5 // pred_check
        _
      $region46: #{pointnet_seg_forward.2} parent=5 // pred_check_branch
        %269 = sbr.rel (%p266) target = $region48
      $region47: #{pointnet_seg_forward.2} parent=5 // pred_region
        %s270 = ssub.s32 %s14, 1
        // Predicated region
        $region49: #{pointnet_seg_forward.2} parent=47 // pred_check
          %p271 = pneg %p159
        $region50: #{pointnet_seg_forward.2} parent=47 // pred_check_branch
          %273 = sbr.rel (%p271) target = $region52
        $region51: #{pointnet_seg_forward.2} parent=47 // pred_region
          %274 = dma.done [#allocation3], 8192
        $region52: #{pointnet_seg_forward.2} parent=47 // pred_fallthru
          _
        %p275 = scmp.lt.s32.totalorder %s23, 1
        %s276 = scalar_select %p275, %s23, 1
        %p277 = scmp.lt.s32.totalorder %s24, 3
        %s278 = scalar_select %p277, %s24, 3
        %s279 = smul.addr %s276, 4
        %s280 = sadd.s32 %s278, %s279
        %s281 = smul.addr %s280, 4
        %s282 = scalar_lea.vmem %s0, %s281
        %p283 = pneg %p54
        %p284 = pneg %p51
        %p285 = pneg %p75
        %p286 = pneg %p72
        %p287 = pneg %p96
        %p288 = pneg %p93
        %p289 = pneg %p117
        %p290 = pneg %p114
        %p291 = pneg %p138
        %p292 = pneg %p135
        %p293 = pneg %p159
        %p294 = pneg %p156
        %p295 = pneg %p180
        %p296 = pneg %p177
        %p297 = pneg %p206
        %p298 = pneg %p203
        %p299 = scmp.lt.s32.totalorder %s23, 1
        %s300 = scalar_select %p299, %s23, 1
        %s301 = smul.addr %s300, 128
        %s302 = smul.addr %s301, 8
        %s303 = scalar_lea.vmem %s7, %s302
        %p304 = scmp.lt.s32.totalorder %s23, 1
        %s305 = scalar_select %p304, %s23, 1
        %p306 = scmp.lt.s32.totalorder %s24, 3
        %s307 = scalar_select %p306, %s24, 3
        %s308 = smul.addr %s305, 4
        %s309 = sadd.s32 %s307, %s308
        %s310 = smul.addr %s309, 4
        %s311 = scalar_lea.vmem %s0, %s310
        %p312 = scmp.lt.s32.totalorder %s23, 1
        %s313 = scalar_select %p312, %s23, 1
        %s314 = smul.addr %s313, 128
        %s315 = smul.addr %s314, 8
        %s316 = scalar_lea.vmem %s7, %s315
        %p318 = scmp.eq.s32.totalorder %s24, 0
        // Predicated region
        $region53: #{pointnet_seg_forward.2} parent=47 // pred_check
          %p319 = pneg %p318
        $region54: #{pointnet_seg_forward.2} parent=47 // pred_check_branch
          %321 = sbr.rel (%p319) target = $region56
        $region55: #{pointnet_seg_forward.2} parent=47 // pred_region
          %vm322 = vcmask 7168
          %323 = vst.msk [vmem:[%s316] sm:$0xff] %vm322, -inf
          %324 = vst.msk [vmem:[%s316 + $0x8] sm:$0xff] %vm322, -inf
          %325 = vst.msk [vmem:[%s316 + $0x10] sm:$0xff] %vm322, -inf
          %326 = vst.msk [vmem:[%s316 + $0x18] sm:$0xff] %vm322, -inf
          %327 = vst.msk [vmem:[%s316 + $0x20] sm:$0xff] %vm322, -inf
          %328 = vst.msk [vmem:[%s316 + $0x28] sm:$0xff] %vm322, -inf
          %329 = vst.msk [vmem:[%s316 + $0x30] sm:$0xff] %vm322, -inf
          %330 = vst.msk [vmem:[%s316 + $0x38] sm:$0xff] %vm322, -inf
          %331 = vst.msk [vmem:[%s316 + $0x40] sm:$0xff] %vm322, -inf
          %332 = vst.msk [vmem:[%s316 + $0x48] sm:$0xff] %vm322, -inf
          %333 = vst.msk [vmem:[%s316 + $0x50] sm:$0xff] %vm322, -inf
          %334 = vst.msk [vmem:[%s316 + $0x58] sm:$0xff] %vm322, -inf
          %335 = vst.msk [vmem:[%s316 + $0x60] sm:$0xff] %vm322, -inf
          %336 = vst.msk [vmem:[%s316 + $0x68] sm:$0xff] %vm322, -inf
          %337 = vst.msk [vmem:[%s316 + $0x70] sm:$0xff] %vm322, -inf
          %338 = vst.msk [vmem:[%s316 + $0x78] sm:$0xff] %vm322, -inf
          %339 = vst.msk [vmem:[%s316 + $0x80] sm:$0xff] %vm322, -inf
          %340 = vst.msk [vmem:[%s316 + $0x88] sm:$0xff] %vm322, -inf
          %341 = vst.msk [vmem:[%s316 + $0x90] sm:$0xff] %vm322, -inf
          %342 = vst.msk [vmem:[%s316 + $0x98] sm:$0xff] %vm322, -inf
          %343 = vst.msk [vmem:[%s316 + $0xa0] sm:$0xff] %vm322, -inf
          %344 = vst.msk [vmem:[%s316 + $0xa8] sm:$0xff] %vm322, -inf
          %345 = vst.msk [vmem:[%s316 + $0xb0] sm:$0xff] %vm322, -inf
          %346 = vst.msk [vmem:[%s316 + $0xb8] sm:$0xff] %vm322, -inf
          %347 = vst.msk [vmem:[%s316 + $0xc0] sm:$0xff] %vm322, -inf
          %348 = vst.msk [vmem:[%s316 + $0xc8] sm:$0xff] %vm322, -inf
          %349 = vst.msk [vmem:[%s316 + $0xd0] sm:$0xff] %vm322, -inf
          %350 = vst.msk [vmem:[%s316 + $0xd8] sm:$0xff] %vm322, -inf
          %351 = vst.msk [vmem:[%s316 + $0xe0] sm:$0xff] %vm322, -inf
          %352 = vst.msk [vmem:[%s316 + $0xe8] sm:$0xff] %vm322, -inf
          %353 = vst.msk [vmem:[%s316 + $0xf0] sm:$0xff] %vm322, -inf
          %354 = vst.msk [vmem:[%s316 + $0xf8] sm:$0xff] %vm322, -inf
          %355 = vst.msk [vmem:[%s316 + $0x100] sm:$0xff] %vm322, -inf
          %356 = vst.msk [vmem:[%s316 + $0x108] sm:$0xff] %vm322, -inf
          %357 = vst.msk [vmem:[%s316 + $0x110] sm:$0xff] %vm322, -inf
          %358 = vst.msk [vmem:[%s316 + $0x118] sm:$0xff] %vm322, -inf
          %359 = vst.msk [vmem:[%s316 + $0x120] sm:$0xff] %vm322, -inf
          %360 = vst.msk [vmem:[%s316 + $0x128] sm:$0xff] %vm322, -inf
          %361 = vst.msk [vmem:[%s316 + $0x130] sm:$0xff] %vm322, -inf
          %362 = vst.msk [vmem:[%s316 + $0x138] sm:$0xff] %vm322, -inf
          %363 = vst.msk [vmem:[%s316 + $0x140] sm:$0xff] %vm322, -inf
          %364 = vst.msk [vmem:[%s316 + $0x148] sm:$0xff] %vm322, -inf
          %365 = vst.msk [vmem:[%s316 + $0x150] sm:$0xff] %vm322, -inf
          %366 = vst.msk [vmem:[%s316 + $0x158] sm:$0xff] %vm322, -inf
          %367 = vst.msk [vmem:[%s316 + $0x160] sm:$0xff] %vm322, -inf
          %368 = vst.msk [vmem:[%s316 + $0x168] sm:$0xff] %vm322, -inf
          %369 = vst.msk [vmem:[%s316 + $0x170] sm:$0xff] %vm322, -inf
          %370 = vst.msk [vmem:[%s316 + $0x178] sm:$0xff] %vm322, -inf
          %371 = vst.msk [vmem:[%s316 + $0x180] sm:$0xff] %vm322, -inf
          %372 = vst.msk [vmem:[%s316 + $0x188] sm:$0xff] %vm322, -inf
          %373 = vst.msk [vmem:[%s316 + $0x190] sm:$0xff] %vm322, -inf
          %374 = vst.msk [vmem:[%s316 + $0x198] sm:$0xff] %vm322, -inf
          %375 = vst.msk [vmem:[%s316 + $0x1a0] sm:$0xff] %vm322, -inf
          %376 = vst.msk [vmem:[%s316 + $0x1a8] sm:$0xff] %vm322, -inf
          %377 = vst.msk [vmem:[%s316 + $0x1b0] sm:$0xff] %vm322, -inf
          %378 = vst.msk [vmem:[%s316 + $0x1b8] sm:$0xff] %vm322, -inf
          %379 = vst.msk [vmem:[%s316 + $0x1c0] sm:$0xff] %vm322, -inf
          %380 = vst.msk [vmem:[%s316 + $0x1c8] sm:$0xff] %vm322, -inf
          %381 = vst.msk [vmem:[%s316 + $0x1d0] sm:$0xff] %vm322, -inf
          %382 = vst.msk [vmem:[%s316 + $0x1d8] sm:$0xff] %vm322, -inf
          %383 = vst.msk [vmem:[%s316 + $0x1e0] sm:$0xff] %vm322, -inf
          %384 = vst.msk [vmem:[%s316 + $0x1e8] sm:$0xff] %vm322, -inf
          %385 = vst.msk [vmem:[%s316 + $0x1f0] sm:$0xff] %vm322, -inf
          %386 = vst.msk [vmem:[%s316 + $0x1f8] sm:$0xff] %vm322, -inf
          %387 = vst.msk [vmem:[%s316 + $0x200] sm:$0xff] %vm322, -inf
          %388 = vst.msk [vmem:[%s316 + $0x208] sm:$0xff] %vm322, -inf
          %389 = vst.msk [vmem:[%s316 + $0x210] sm:$0xff] %vm322, -inf
          %390 = vst.msk [vmem:[%s316 + $0x218] sm:$0xff] %vm322, -inf
          %391 = vst.msk [vmem:[%s316 + $0x220] sm:$0xff] %vm322, -inf
          %392 = vst.msk [vmem:[%s316 + $0x228] sm:$0xff] %vm322, -inf
          %393 = vst.msk [vmem:[%s316 + $0x230] sm:$0xff] %vm322, -inf
          %394 = vst.msk [vmem:[%s316 + $0x238] sm:$0xff] %vm322, -inf
          %395 = vst.msk [vmem:[%s316 + $0x240] sm:$0xff] %vm322, -inf
          %396 = vst.msk [vmem:[%s316 + $0x248] sm:$0xff] %vm322, -inf
          %397 = vst.msk [vmem:[%s316 + $0x250] sm:$0xff] %vm322, -inf
          %398 = vst.msk [vmem:[%s316 + $0x258] sm:$0xff] %vm322, -inf
          %399 = vst.msk [vmem:[%s316 + $0x260] sm:$0xff] %vm322, -inf
          %400 = vst.msk [vmem:[%s316 + $0x268] sm:$0xff] %vm322, -inf
          %401 = vst.msk [vmem:[%s316 + $0x270] sm:$0xff] %vm322, -inf
          %402 = vst.msk [vmem:[%s316 + $0x278] sm:$0xff] %vm322, -inf
          %403 = vst.msk [vmem:[%s316 + $0x280] sm:$0xff] %vm322, -inf
          %404 = vst.msk [vmem:[%s316 + $0x288] sm:$0xff] %vm322, -inf
          %405 = vst.msk [vmem:[%s316 + $0x290] sm:$0xff] %vm322, -inf
          %406 = vst.msk [vmem:[%s316 + $0x298] sm:$0xff] %vm322, -inf
          %407 = vst.msk [vmem:[%s316 + $0x2a0] sm:$0xff] %vm322, -inf
          %408 = vst.msk [vmem:[%s316 + $0x2a8] sm:$0xff] %vm322, -inf
          %409 = vst.msk [vmem:[%s316 + $0x2b0] sm:$0xff] %vm322, -inf
          %410 = vst.msk [vmem:[%s316 + $0x2b8] sm:$0xff] %vm322, -inf
          %411 = vst.msk [vmem:[%s316 + $0x2c0] sm:$0xff] %vm322, -inf
          %412 = vst.msk [vmem:[%s316 + $0x2c8] sm:$0xff] %vm322, -inf
          %413 = vst.msk [vmem:[%s316 + $0x2d0] sm:$0xff] %vm322, -inf
          %414 = vst.msk [vmem:[%s316 + $0x2d8] sm:$0xff] %vm322, -inf
          %415 = vst.msk [vmem:[%s316 + $0x2e0] sm:$0xff] %vm322, -inf
          %416 = vst.msk [vmem:[%s316 + $0x2e8] sm:$0xff] %vm322, -inf
          %417 = vst.msk [vmem:[%s316 + $0x2f0] sm:$0xff] %vm322, -inf
          %418 = vst.msk [vmem:[%s316 + $0x2f8] sm:$0xff] %vm322, -inf
          %419 = vst.msk [vmem:[%s316 + $0x300] sm:$0xff] %vm322, -inf
          %420 = vst.msk [vmem:[%s316 + $0x308] sm:$0xff] %vm322, -inf
          %421 = vst.msk [vmem:[%s316 + $0x310] sm:$0xff] %vm322, -inf
          %422 = vst.msk [vmem:[%s316 + $0x318] sm:$0xff] %vm322, -inf
          %423 = vst.msk [vmem:[%s316 + $0x320] sm:$0xff] %vm322, -inf
          %424 = vst.msk [vmem:[%s316 + $0x328] sm:$0xff] %vm322, -inf
          %425 = vst.msk [vmem:[%s316 + $0x330] sm:$0xff] %vm322, -inf
          %426 = vst.msk [vmem:[%s316 + $0x338] sm:$0xff] %vm322, -inf
          %427 = vst.msk [vmem:[%s316 + $0x340] sm:$0xff] %vm322, -inf
          %428 = vst.msk [vmem:[%s316 + $0x348] sm:$0xff] %vm322, -inf
          %429 = vst.msk [vmem:[%s316 + $0x350] sm:$0xff] %vm322, -inf
          %430 = vst.msk [vmem:[%s316 + $0x358] sm:$0xff] %vm322, -inf
          %431 = vst.msk [vmem:[%s316 + $0x360] sm:$0xff] %vm322, -inf
          %432 = vst.msk [vmem:[%s316 + $0x368] sm:$0xff] %vm322, -inf
          %433 = vst.msk [vmem:[%s316 + $0x370] sm:$0xff] %vm322, -inf
          %434 = vst.msk [vmem:[%s316 + $0x378] sm:$0xff] %vm322, -inf
          %435 = vst.msk [vmem:[%s316 + $0x380] sm:$0xff] %vm322, -inf
          %436 = vst.msk [vmem:[%s316 + $0x388] sm:$0xff] %vm322, -inf
          %437 = vst.msk [vmem:[%s316 + $0x390] sm:$0xff] %vm322, -inf
          %438 = vst.msk [vmem:[%s316 + $0x398] sm:$0xff] %vm322, -inf
          %439 = vst.msk [vmem:[%s316 + $0x3a0] sm:$0xff] %vm322, -inf
          %440 = vst.msk [vmem:[%s316 + $0x3a8] sm:$0xff] %vm322, -inf
          %441 = vst.msk [vmem:[%s316 + $0x3b0] sm:$0xff] %vm322, -inf
          %442 = vst.msk [vmem:[%s316 + $0x3b8] sm:$0xff] %vm322, -inf
          %443 = vst.msk [vmem:[%s316 + $0x3c0] sm:$0xff] %vm322, -inf
          %444 = vst.msk [vmem:[%s316 + $0x3c8] sm:$0xff] %vm322, -inf
          %445 = vst.msk [vmem:[%s316 + $0x3d0] sm:$0xff] %vm322, -inf
          %446 = vst.msk [vmem:[%s316 + $0x3d8] sm:$0xff] %vm322, -inf
          %447 = vst.msk [vmem:[%s316 + $0x3e0] sm:$0xff] %vm322, -inf
          %448 = vst.msk [vmem:[%s316 + $0x3e8] sm:$0xff] %vm322, -inf
          %449 = vst.msk [vmem:[%s316 + $0x3f0] sm:$0xff] %vm322, -inf
          %450 = vst.msk [vmem:[%s316 + $0x3f8] sm:$0xff] %vm322, -inf
        $region56: #{pointnet_seg_forward.2} parent=47 // pred_fallthru
          _
        %v451 = vld [vmem:[%s311] sm:$0x7]
        %v452 = vld [vmem:[%s1] sm:$0xf]
        %v453 = vld [vmem:[%s1 + $0x4] sm:$0xf]
        %v454 = vld [vmem:[%s1 + $0x8] sm:$0xf]
        %v455 = vld [vmem:[%s1 + $0xc] sm:$0xf]
        %v456 = vld [vmem:[%s1 + $0x10] sm:$0xf]
        %v457 = vld [vmem:[%s1 + $0x14] sm:$0xf]
        %v458 = vld [vmem:[%s1 + $0x18] sm:$0xf]
        %v459 = vld [vmem:[%s1 + $0x1c] sm:$0xf]
        %v460 = vpack.c.bf16 %v451, %v451
        %v461 = vld [vmem:[%s2] sm:$0xff]
        %v462 = vld [vmem:[%s2 + $0x8] sm:$0xff]
        %v463 = vld [vmem:[%s2 + $0x10] sm:$0xff]
        %v464 = vld [vmem:[%s2 + $0x18] sm:$0xff]
        %v465 = vld [vmem:[%s2 + $0x20] sm:$0xff]
        %v466 = vld [vmem:[%s2 + $0x28] sm:$0xff]
        %v467 = vld [vmem:[%s2 + $0x30] sm:$0xff]
        %v468 = vld [vmem:[%s2 + $0x38] sm:$0xff]
        %470 = vset.pattern.permute.xlu0 0
        %471 = vperm.xlu0 %470, %v461
        %v472 = vpop.permute.xlu0 %471
        %475 = vset.pattern.permute.xlu0 0
        %476 = vperm.xlu0 %475, %v462
        %v477 = vpop.permute.xlu0 %476
        %480 = vset.pattern.permute.xlu0 0
        %481 = vperm.xlu0 %480, %v463
        %v482 = vpop.permute.xlu0 %481
        %485 = vset.pattern.permute.xlu0 0
        %486 = vperm.xlu0 %485, %v464
        %v487 = vpop.permute.xlu0 %486
        %490 = vset.pattern.permute.xlu0 0
        %491 = vperm.xlu0 %490, %v465
        %v492 = vpop.permute.xlu0 %491
        %495 = vset.pattern.permute.xlu0 0
        %496 = vperm.xlu0 %495, %v466
        %v497 = vpop.permute.xlu0 %496
        %500 = vset.pattern.permute.xlu0 0
        %501 = vperm.xlu0 %500, %v467
        %v502 = vpop.permute.xlu0 %501
        %505 = vset.pattern.permute.xlu0 0
        %506 = vperm.xlu0 %505, %v468
        %v507 = vpop.permute.xlu0 %506
        %v517 = vunpack.c.l.b16 %v452
        %v518 = vunpack.c.l.b16 %v453
        %v519 = vunpack.c.l.b16 %v454
        %v520 = vunpack.c.l.b16 %v455
        %v521 = vunpack.c.l.b16 %v456
        %v522 = vunpack.c.l.b16 %v457
        %v523 = vunpack.c.l.b16 %v458
        %v524 = vunpack.c.l.b16 %v459
        %v525 = vpack.c.b16 %v518, %v517
        %v526 = vpack.c.b16 %v520, %v519
        %v527 = vpack.c.b16 %v522, %v521
        %v528 = vpack.c.b16 %v524, %v523
        %vm529 = vcmask 23552
        %v531 = vsel %vm529, %v525, 0
        %v534 = vsel %vm529, %v526, 0
        %v537 = vsel %vm529, %v527, 0
        %v540 = vsel %vm529, %v528, 0
        %vm542 = vcmask 1040384
        %vm543 = vcmask 1041408
        %v544 = vsel %vm542, 4294967295, 65535
        %v545 = vsel %vm543, %v544, 0
        %v547 = vand.u32 %v460, %v545
        %549 = vmatprep.subr.bf16.mxu0 0
        %550 = vmatpush1.bf16.msra.mxu0 %v547
        %551 = vmatprep.subr.bf16.mxu0 0
        %552 = vmatpush1.bf16.msra.mxu0 0
        %553 = vmatprep.subr.bf16.mxu0 0
        %554 = vmatpush1.bf16.msra.mxu0 0
        %555 = vmatprep.subr.bf16.mxu0 0
        %556 = vmatpush1.bf16.msra.mxu0 0
        %557 = vmatprep.subr.bf16.mxu0 0
        %558 = vmatpush1.bf16.msra.mxu0 0
        %559 = vmatprep.subr.bf16.mxu0 0
        %560 = vmatpush1.bf16.msra.mxu0 0
        %561 = vmatprep.subr.bf16.mxu0 0
        %562 = vmatpush1.bf16.msra.mxu0 0
        %563 = vmatprep.subr.bf16.mxu0 0
        %564 = vmatpush1.bf16.msra.mxu0 0
        %565 = vmatprep.subr.bf16.mxu0 0
        %566 = vmatpush1.bf16.msra.mxu0 0
        %567 = vmatprep.subr.bf16.mxu0 0
        %568 = vmatpush1.bf16.msra.mxu0 0
        %569 = vmatprep.subr.bf16.mxu0 0
        %570 = vmatpush1.bf16.msra.mxu0 0
        %571 = vmatprep.subr.bf16.mxu0 0
        %572 = vmatpush1.bf16.msra.mxu0 0
        %573 = vmatprep.subr.bf16.mxu0 0
        %574 = vmatpush1.bf16.msra.mxu0 0
        %575 = vmatprep.subr.bf16.mxu0 0
        %576 = vmatpush1.bf16.msra.mxu0 0
        %577 = vmatprep.subr.bf16.mxu0 0
        %578 = vmatpush1.bf16.msra.mxu0 0
        %579 = vmatprep.subr.bf16.mxu0 0
        %580 = vmatpush1.bf16.msra.mxu0 0
        %581 = vmatprep.mubr.bf16.mxu0 0
        %582 = vmatmul.mubr.bf16.gmra.mrb[0].mxu0 %v531
        %v583 = vpop.f32.mrb[0].mxu0
        %v584 = vadd.f32 %v472, %v583
        %v585 = vpop.f32.mrb[0].mxu0
        %v586 = vpop.f32.mrb[0].mxu0
        %v587 = vadd.f32 %v477, %v586
        %v588 = vpop.f32.mrb[0].mxu0
        %589 = vmatprep.mubr.bf16.mxu0 0
        %590 = vmatmul.mubr.bf16.gmra.mrb[0].mxu0 %v534
        %v591 = vpop.f32.mrb[0].mxu0
        %v592 = vadd.f32 %v482, %v591
        %v593 = vpop.f32.mrb[0].mxu0
        %v594 = vpop.f32.mrb[0].mxu0
        %v595 = vadd.f32 %v487, %v594
        %v596 = vpop.f32.mrb[0].mxu0
        %597 = vmatprep.mubr.bf16.mxu0 0
        %598 = vmatmul.mubr.bf16.gmra.mrb[0].mxu0 %v537
        %v599 = vpop.f32.mrb[0].mxu0
        %v600 = vadd.f32 %v492, %v599
        %v601 = vpop.f32.mrb[0].mxu0
        %v602 = vpop.f32.mrb[0].mxu0
        %v603 = vadd.f32 %v497, %v602
        %v604 = vpop.f32.mrb[0].mxu0
        %605 = vmatprep.mubr.bf16.mxu0 0
        %606 = vmatmul.mubr.bf16.gmra.mrb[0].mxu0 %v540
        %v607 = vpop.f32.mrb[0].mxu0
        %v608 = vadd.f32 %v502, %v607
        %v609 = vpop.f32.mrb[0].mxu0
        %v610 = vpop.f32.mrb[0].mxu0
        %v611 = vadd.f32 %v507, %v610
        %v612 = vpop.f32.mrb[0].mxu0
        %613 = vdwg.mxu0
        %v614 = vmax.f32 %v584, 0.0
        %v615 = vmax.f32 %v587, 0.0
        %v616 = vmax.f32 %v592, 0.0
        %v617 = vmax.f32 %v595, 0.0
        %v618 = vmax.f32 %v600, 0.0
        %v619 = vmax.f32 %v603, 0.0
        %v620 = vmax.f32 %v608, 0.0
        %v621 = vmax.f32 %v611, 0.0
        %v622 = vld [vmem:[%s3] sm:$0xf]
        %v623 = vld [vmem:[%s3 + $0x4] sm:$0xf]
        %v624 = vld [vmem:[%s3 + $0x8] sm:$0xf]
        %v625 = vld [vmem:[%s3 + $0xc] sm:$0xf]
        %v626 = vld [vmem:[%s3 + $0x10] sm:$0xf]
        %v627 = vld [vmem:[%s3 + $0x14] sm:$0xf]
        %v628 = vld [vmem:[%s3 + $0x18] sm:$0xf]
        %v629 = vld [vmem:[%s3 + $0x1c] sm:$0xf]
        %v630 = vld [vmem:[%s3 + $0x20] sm:$0xf]
        %v631 = vld [vmem:[%s3 + $0x24] sm:$0xf]
        %v632 = vld [vmem:[%s3 + $0x28] sm:$0xf]
        %v633 = vld [vmem:[%s3 + $0x2c] sm:$0xf]
        %v634 = vld [vmem:[%s3 + $0x30] sm:$0xf]
        %v635 = vld [vmem:[%s3 + $0x34] sm:$0xf]
        %v636 = vld [vmem:[%s3 + $0x38] sm:$0xf]
        %v637 = vld [vmem:[%s3 + $0x3c] sm:$0xf]
        %v638 = vpack.c.bf16 %v615, %v614
        %v639 = vpack.c.bf16 %v617, %v616
        %v640 = vpack.c.bf16 %v619, %v618
        %v641 = vpack.c.bf16 %v621, %v620
        %v642 = vld [vmem:[%s4] sm:$0xff]
        %v643 = vld [vmem:[%s4 + $0x8] sm:$0xff]
        %v644 = vld [vmem:[%s4 + $0x10] sm:$0xff]
        %v645 = vld [vmem:[%s4 + $0x18] sm:$0xff]
        %v646 = vld [vmem:[%s4 + $0x20] sm:$0xff]
        %v647 = vld [vmem:[%s4 + $0x28] sm:$0xff]
        %v648 = vld [vmem:[%s4 + $0x30] sm:$0xff]
        %v649 = vld [vmem:[%s4 + $0x38] sm:$0xff]
        %v650 = vld [vmem:[%s4 + $0x40] sm:$0xff]
        %v651 = vld [vmem:[%s4 + $0x48] sm:$0xff]
        %v652 = vld [vmem:[%s4 + $0x50] sm:$0xff]
        %v653 = vld [vmem:[%s4 + $0x58] sm:$0xff]
        %v654 = vld [vmem:[%s4 + $0x60] sm:$0xff]
        %v655 = vld [vmem:[%s4 + $0x68] sm:$0xff]
        %v656 = vld [vmem:[%s4 + $0x70] sm:$0xff]
        %v657 = vld [vmem:[%s4 + $0x78] sm:$0xff]
        %659 = vset.pattern.permute.xlu0 0
        %660 = vperm.xlu0 %659, %v642
        %v661 = vpop.permute.xlu0 %660
        %664 = vset.pattern.permute.xlu0 0
        %665 = vperm.xlu0 %664, %v643
        %v666 = vpop.permute.xlu0 %665
        %669 = vset.pattern.permute.xlu0 0
        %670 = vperm.xlu0 %669, %v644
        %v671 = vpop.permute.xlu0 %670
        %674 = vset.pattern.permute.xlu0 0
        %675 = vperm.xlu0 %674, %v645
        %v676 = vpop.permute.xlu0 %675
        %679 = vset.pattern.permute.xlu0 0
        %680 = vperm.xlu0 %679, %v646
        %v681 = vpop.permute.xlu0 %680
        %684 = vset.pattern.permute.xlu0 0
        %685 = vperm.xlu0 %684, %v647
        %v686 = vpop.permute.xlu0 %685
        %689 = vset.pattern.permute.xlu0 0
        %690 = vperm.xlu0 %689, %v648
        %v691 = vpop.permute.xlu0 %690
        %694 = vset.pattern.permute.xlu0 0
        %695 = vperm.xlu0 %694, %v649
        %v696 = vpop.permute.xlu0 %695
        %699 = vset.pattern.permute.xlu0 0
        %700 = vperm.xlu0 %699, %v650
        %v701 = vpop.permute.xlu0 %700
        %704 = vset.pattern.permute.xlu0 0
        %705 = vperm.xlu0 %704, %v651
        %v706 = vpop.permute.xlu0 %705
        %709 = vset.pattern.permute.xlu0 0
        %710 = vperm.xlu0 %709, %v652
        %v711 = vpop.permute.xlu0 %710
        %714 = vset.pattern.permute.xlu0 0
        %715 = vperm.xlu0 %714, %v653
        %v716 = vpop.permute.xlu0 %715
        %719 = vset.pattern.permute.xlu0 0
        %720 = vperm.xlu0 %719, %v654
        %v721 = vpop.permute.xlu0 %720
        %724 = vset.pattern.permute.xlu0 0
        %725 = vperm.xlu0 %724, %v655
        %v726 = vpop.permute.xlu0 %725
        %729 = vset.pattern.permute.xlu0 0
        %730 = vperm.xlu0 %729, %v656
        %v731 = vpop.permute.xlu0 %730
        %734 = vset.pattern.permute.xlu0 0
        %735 = vperm.xlu0 %734, %v657
        %v736 = vpop.permute.xlu0 %735
        %v754 = vunpack.c.l.b16 %v622
        %v755 = vunpack.c.l.b16 %v623
        %v756 = vunpack.c.l.b16 %v624
        %v757 = vunpack.c.l.b16 %v625
        %v758 = vunpack.c.l.b16 %v626
        %v759 = vunpack.c.l.b16 %v627
        %v760 = vunpack.c.l.b16 %v628
        %v761 = vunpack.c.l.b16 %v629
        %v762 = vunpack.c.l.b16 %v630
        %v763 = vunpack.c.l.b16 %v631
        %v764 = vunpack.c.l.b16 %v632
        %v765 = vunpack.c.l.b16 %v633
        %v766 = vunpack.c.l.b16 %v634
        %v767 = vunpack.c.l.b16 %v635
        %v768 = vunpack.c.l.b16 %v636
        %v769 = vunpack.c.l.b16 %v637
        %v770 = vpack.c.b16 %v755, %v754
        %v771 = vpack.c.b16 %v757, %v756
        %v772 = vpack.c.b16 %v759, %v758
        %v773 = vpack.c.b16 %v761, %v760
        %v774 = vpack.c.b16 %v763, %v762
        %v775 = vpack.c.b16 %v765, %v764
        %v776 = vpack.c.b16 %v767, %v766
        %v777 = vpack.c.b16 %v769, %v768
        %vm778 = vcmask 523264
        %v780 = vsel %vm778, %v770, 0
        %v783 = vsel %vm778, %v771, 0
        %v786 = vsel %vm778, %v772, 0
        %v789 = vsel %vm778, %v773, 0
        %v792 = vsel %vm778, %v774, 0
        %v795 = vsel %vm778, %v775, 0
        %v798 = vsel %vm778, %v776, 0
        %v801 = vsel %vm778, %v777, 0
        %803 = vmatprep.subr.bf16.mxu0 0
        %804 = vmatpush1.bf16.msra.mxu0 %v638
        %805 = vmatprep.subr.bf16.mxu0 0
        %806 = vmatpush1.bf16.msra.mxu0 %v639
        %807 = vmatprep.subr.bf16.mxu0 0
        %808 = vmatpush1.bf16.msra.mxu0 %v640
        %809 = vmatprep.subr.bf16.mxu0 0
        %810 = vmatpush1.bf16.msra.mxu0 %v641
        %811 = vmatprep.subr.bf16.mxu0 0
        %812 = vmatpush1.bf16.msra.mxu0 0
        %813 = vmatprep.subr.bf16.mxu0 0
        %814 = vmatpush1.bf16.msra.mxu0 0
        %815 = vmatprep.subr.bf16.mxu0 0
        %816 = vmatpush1.bf16.msra.mxu0 0
        %817 = vmatprep.subr.bf16.mxu0 0
        %818 = vmatpush1.bf16.msra.mxu0 0
        %819 = vmatprep.subr.bf16.mxu0 0
        %820 = vmatpush1.bf16.msra.mxu0 0
        %821 = vmatprep.subr.bf16.mxu0 0
        %822 = vmatpush1.bf16.msra.mxu0 0
        %823 = vmatprep.subr.bf16.mxu0 0
        %824 = vmatpush1.bf16.msra.mxu0 0
        %825 = vmatprep.subr.bf16.mxu0 0
        %826 = vmatpush1.bf16.msra.mxu0 0
        %827 = vmatprep.subr.bf16.mxu0 0
        %828 = vmatpush1.bf16.msra.mxu0 0
        %829 = vmatprep.subr.bf16.mxu0 0
        %830 = vmatpush1.bf16.msra.mxu0 0
        %831 = vmatprep.subr.bf16.mxu0 0
        %832 = vmatpush1.bf16.msra.mxu0 0
        %833 = vmatprep.subr.bf16.mxu0 0
        %834 = vmatpush1.bf16.msra.mxu0 0
        %835 = vmatprep.mubr.bf16.mxu0 0
        %836 = vmatmul.mubr.bf16.gmra.mrb[0].mxu0 %v780
        %v837 = vpop.f32.mrb[0].mxu0
        %v838 = vadd.f32 %v661, %v837
        %v839 = vpop.f32.mrb[0].mxu0
        %v840 = vpop.f32.mrb[0].mxu0
        %v841 = vadd.f32 %v666, %v840
        %v842 = vpop.f32.mrb[0].mxu0
        %843 = vmatprep.mubr.bf16.mxu0 0
        %844 = vmatmul.mubr.bf16.gmra.mrb[0].mxu0 %v783
        %v845 = vpop.f32.mrb[0].mxu0
        %v846 = vadd.f32 %v671, %v845
        %v847 = vpop.f32.mrb[0].mxu0
        %v848 = vpop.f32.mrb[0].mxu0
        %v849 = vadd.f32 %v676, %v848
        %v850 = vpop.f32.mrb[0].mxu0
        %851 = vmatprep.mubr.bf16.mxu0 0
        %852 = vmatmul.mubr.bf16.gmra.mrb[0].mxu0 %v786
        %v853 = vpop.f32.mrb[0].mxu0
        %v854 = vadd.f32 %v681, %v853
        %v855 = vpop.f32.mrb[0].mxu0
        %v856 = vpop.f32.mrb[0].mxu0
        %v857 = vadd.f32 %v686, %v856
        %v858 = vpop.f32.mrb[0].mxu0
        %859 = vmatprep.mubr.bf16.mxu0 0
        %860 = vmatmul.mubr.bf16.gmra.mrb[0].mxu0 %v789
        %v861 = vpop.f32.mrb[0].mxu0
        %v862 = vadd.f32 %v691, %v861
        %v863 = vpop.f32.mrb[0].mxu0
        %v864 = vpop.f32.mrb[0].mxu0
        %v865 = vadd.f32 %v696, %v864
        %v866 = vpop.f32.mrb[0].mxu0
        %867 = vmatprep.mubr.bf16.mxu0 0
        %868 = vmatmul.mubr.bf16.gmra.mrb[0].mxu0 %v792
        %v869 = vpop.f32.mrb[0].mxu0
        %v870 = vadd.f32 %v701, %v869
        %v871 = vpop.f32.mrb[0].mxu0
        %v872 = vpop.f32.mrb[0].mxu0
        %v873 = vadd.f32 %v706, %v872
        %v874 = vpop.f32.mrb[0].mxu0
        %875 = vmatprep.mubr.bf16.mxu0 0
        %876 = vmatmul.mubr.bf16.gmra.mrb[0].mxu0 %v795
        %v877 = vpop.f32.mrb[0].mxu0
        %v878 = vadd.f32 %v711, %v877
        %v879 = vpop.f32.mrb[0].mxu0
        %v880 = vpop.f32.mrb[0].mxu0
        %v881 = vadd.f32 %v716, %v880
        %v882 = vpop.f32.mrb[0].mxu0
        %883 = vmatprep.mubr.bf16.mxu0 0
        %884 = vmatmul.mubr.bf16.gmra.mrb[0].mxu0 %v798
        %v885 = vpop.f32.mrb[0].mxu0
        %v886 = vadd.f32 %v721, %v885
        %v887 = vpop.f32.mrb[0].mxu0
        %v888 = vpop.f32.mrb[0].mxu0
        %v889 = vadd.f32 %v726, %v888
        %v890 = vpop.f32.mrb[0].mxu0
        %891 = vmatprep.mubr.bf16.mxu0 0
        %892 = vmatmul.mubr.bf16.gmra.mrb[0].mxu0 %v801
        %v893 = vpop.f32.mrb[0].mxu0
        %v894 = vadd.f32 %v731, %v893
        %v895 = vpop.f32.mrb[0].mxu0
        %v896 = vpop.f32.mrb[0].mxu0
        %v897 = vadd.f32 %v736, %v896
        %v898 = vpop.f32.mrb[0].mxu0
        %899 = vdwg.mxu0
        %v900 = vmax.f32 %v838, 0.0
        %v901 = vmax.f32 %v841, 0.0
        %v902 = vmax.f32 %v846, 0.0
        %v903 = vmax.f32 %v849, 0.0
        %v904 = vmax.f32 %v854, 0.0
        %v905 = vmax.f32 %v857, 0.0
        %v906 = vmax.f32 %v862, 0.0
        %v907 = vmax.f32 %v865, 0.0
        %v908 = vmax.f32 %v870, 0.0
        %v909 = vmax.f32 %v873, 0.0
        %v910 = vmax.f32 %v878, 0.0
        %v911 = vmax.f32 %v881, 0.0
        %v912 = vmax.f32 %v886, 0.0
        %v913 = vmax.f32 %v889, 0.0
        %v914 = vmax.f32 %v894, 0.0
        %v915 = vmax.f32 %v897, 0.0
        %v916 = vld [vmem:[#allocation2] sm:$0xf]
        %v917 = vld [vmem:[#allocation2 + $0x4] sm:$0xf]
        %v918 = vld [vmem:[#allocation2 + $0x8] sm:$0xf]
        %v919 = vld [vmem:[#allocation2 + $0xc] sm:$0xf]
        %v920 = vld [vmem:[#allocation2 + $0x10] sm:$0xf]
        %v921 = vld [vmem:[#allocation2 + $0x14] sm:$0xf]
        %v922 = vld [vmem:[#allocation2 + $0x18] sm:$0xf]
        %v923 = vld [vmem:[#allocation2 + $0x1c] sm:$0xf]
        %v924 = vld [vmem:[#allocation2 + $0x20] sm:$0xf]
        %v925 = vld [vmem:[#allocation2 + $0x24] sm:$0xf]
        %v926 = vld [vmem:[#allocation2 + $0x28] sm:$0xf]
        %v927 = vld [vmem:[#allocation2 + $0x2c] sm:$0xf]
        %v928 = vld [vmem:[#allocation2 + $0x30] sm:$0xf]
        %v929 = vld [vmem:[#allocation2 + $0x34] sm:$0xf]
        %v930 = vld [vmem:[#allocation2 + $0x38] sm:$0xf]
        %v931 = vld [vmem:[#allocation2 + $0x3c] sm:$0xf]
        %v932 = vld [vmem:[#allocation2 + $0x40] sm:$0xf]
        %v933 = vld [vmem:[#allocation2 + $0x44] sm:$0xf]
        %v934 = vld [vmem:[#allocation2 + $0x48] sm:$0xf]
        %v935 = vld [vmem:[#allocation2 + $0x4c] sm:$0xf]
        %v936 = vld [vmem:[#allocation2 + $0x50] sm:$0xf]
        %v937 = vld [vmem:[#allocation2 + $0x54] sm:$0xf]
        %v938 = vld [vmem:[#allocation2 + $0x58] sm:$0xf]
        %v939 = vld [vmem:[#allocation2 + $0x5c] sm:$0xf]
        %v940 = vld [vmem:[#allocation2 + $0x60] sm:$0xf]
        %v941 = vld [vmem:[#allocation2 + $0x64] sm:$0xf]
        %v942 = vld [vmem:[#allocation2 + $0x68] sm:$0xf]
        %v943 = vld [vmem:[#allocation2 + $0x6c] sm:$0xf]
        %v944 = vld [vmem:[#allocation2 + $0x70] sm:$0xf]
        %v945 = vld [vmem:[#allocation2 + $0x74] sm:$0xf]
        %v946 = vld [vmem:[#allocation2 + $0x78] sm:$0xf]
        %v947 = vld [vmem:[#allocation2 + $0x7c] sm:$0xf]
        %v948 = vld [vmem:[#allocation2 + $0x80] sm:$0xf]
        %v949 = vld [vmem:[#allocation2 + $0x84] sm:$0xf]
        %v950 = vld [vmem:[#allocation2 + $0x88] sm:$0xf]
        %v951 = vld [vmem:[#allocation2 + $0x8c] sm:$0xf]
        %v952 = vld [vmem:[#allocation2 + $0x90] sm:$0xf]
        %v953 = vld [vmem:[#allocation2 + $0x94] sm:$0xf]
        %v954 = vld [vmem:[#allocation2 + $0x98] sm:$0xf]
        %v955 = vld [vmem:[#allocation2 + $0x9c] sm:$0xf]
        %v956 = vld [vmem:[#allocation2 + $0xa0] sm:$0xf]
        %v957 = vld [vmem:[#allocation2 + $0xa4] sm:$0xf]
        %v958 = vld [vmem:[#allocation2 + $0xa8] sm:$0xf]
        %v959 = vld [vmem:[#allocation2 + $0xac] sm:$0xf]
        %v960 = vld [vmem:[#allocation2 + $0xb0] sm:$0xf]
        %v961 = vld [vmem:[#allocation2 + $0xb4] sm:$0xf]
        %v962 = vld [vmem:[#allocation2 + $0xb8] sm:$0xf]
        %v963 = vld [vmem:[#allocation2 + $0xbc] sm:$0xf]
        %v964 = vld [vmem:[#allocation2 + $0xc0] sm:$0xf]
        %v965 = vld [vmem:[#allocation2 + $0xc4] sm:$0xf]
        %v966 = vld [vmem:[#allocation2 + $0xc8] sm:$0xf]
        %v967 = vld [vmem:[#allocation2 + $0xcc] sm:$0xf]
        %v968 = vld [vmem:[#allocation2 + $0xd0] sm:$0xf]
        %v969 = vld [vmem:[#allocation2 + $0xd4] sm:$0xf]
        %v970 = vld [vmem:[#allocation2 + $0xd8] sm:$0xf]
        %v971 = vld [vmem:[#allocation2 + $0xdc] sm:$0xf]
        %v972 = vld [vmem:[#allocation2 + $0xe0] sm:$0xf]
        %v973 = vld [vmem:[#allocation2 + $0xe4] sm:$0xf]
        %v974 = vld [vmem:[#allocation2 + $0xe8] sm:$0xf]
        %v975 = vld [vmem:[#allocation2 + $0xec] sm:$0xf]
        %v976 = vld [vmem:[#allocation2 + $0xf0] sm:$0xf]
        %v977 = vld [vmem:[#allocation2 + $0xf4] sm:$0xf]
        %v978 = vld [vmem:[#allocation2 + $0xf8] sm:$0xf]
        %v979 = vld [vmem:[#allocation2 + $0xfc] sm:$0xf]
        %v980 = vld [vmem:[#allocation2 + $0x100] sm:$0xf]
        %v981 = vld [vmem:[#allocation2 + $0x104] sm:$0xf]
        %v982 = vld [vmem:[#allocation2 + $0x108] sm:$0xf]
        %v983 = vld [vmem:[#allocation2 + $0x10c] sm:$0xf]
        %v984 = vld [vmem:[#allocation2 + $0x110] sm:$0xf]
        %v985 = vld [vmem:[#allocation2 + $0x114] sm:$0xf]
        %v986 = vld [vmem:[#allocation2 + $0x118] sm:$0xf]
        %v987 = vld [vmem:[#allocation2 + $0x11c] sm:$0xf]
        %v988 = vld [vmem:[#allocation2 + $0x120] sm:$0xf]
        %v989 = vld [vmem:[#allocation2 + $0x124] sm:$0xf]
        %v990 = vld [vmem:[#allocation2 + $0x128] sm:$0xf]
        %v991 = vld [vmem:[#allocation2 + $0x12c] sm:$0xf]
        %v992 = vld [vmem:[#allocation2 + $0x130] sm:$0xf]
        %v993 = vld [vmem:[#allocation2 + $0x134] sm:$0xf]
        %v994 = vld [vmem:[#allocation2 + $0x138] sm:$0xf]
        %v995 = vld [vmem:[#allocation2 + $0x13c] sm:$0xf]
        %v996 = vld [vmem:[#allocation2 + $0x140] sm:$0xf]
        %v997 = vld [vmem:[#allocation2 + $0x144] sm:$0xf]
        %v998 = vld [vmem:[#allocation2 + $0x148] sm:$0xf]
        %v999 = vld [vmem:[#allocation2 + $0x14c] sm:$0xf]
        %v1000 = vld [vmem:[#allocation2 + $0x150] sm:$0xf]
        %v1001 = vld [vmem:[#allocation2 + $0x154] sm:$0xf]
        %v1002 = vld [vmem:[#allocation2 + $0x158] sm:$0xf]
        %v1003 = vld [vmem:[#allocation2 + $0x15c] sm:$0xf]
        %v1004 = vld [vmem:[#allocation2 + $0x160] sm:$0xf]
        %v1005 = vld [vmem:[#allocation2 + $0x164] sm:$0xf]
        %v1006 = vld [vmem:[#allocation2 + $0x168] sm:$0xf]
        %v1007 = vld [vmem:[#allocation2 + $0x16c] sm:$0xf]
        %v1008 = vld [vmem:[#allocation2 + $0x170] sm:$0xf]
        %v1009 = vld [vmem:[#allocation2 + $0x174] sm:$0xf]
        %v1010 = vld [vmem:[#allocation2 + $0x178] sm:$0xf]
        %v1011 = vld [vmem:[#allocation2 + $0x17c] sm:$0xf]
        %v1012 = vld [vmem:[#allocation2 + $0x180] sm:$0xf]
        %v1013 = vld [vmem:[#allocation2 + $0x184] sm:$0xf]
        %v1014 = vld [vmem:[#allocation2 + $0x188] sm:$0xf]
        %v1015 = vld [vmem:[#allocation2 + $0x18c] sm:$0xf]
        %v1016 = vld [vmem:[#allocation2 + $0x190] sm:$0xf]
        %v1017 = vld [vmem:[#allocation2 + $0x194] sm:$0xf]
        %v1018 = vld [vmem:[#allocation2 + $0x198] sm:$0xf]
        %v1019 = vld [vmem:[#allocation2 + $0x19c] sm:$0xf]
        %v1020 = vld [vmem:[#allocation2 + $0x1a0] sm:$0xf]
        %v1021 = vld [vmem:[#allocation2 + $0x1a4] sm:$0xf]
        %v1022 = vld [vmem:[#allocation2 + $0x1a8] sm:$0xf]
        %v1023 = vld [vmem:[#allocation2 + $0x1ac] sm:$0xf]
        %v1024 = vld [vmem:[#allocation2 + $0x1b0] sm:$0xf]
        %v1025 = vld [vmem:[#allocation2 + $0x1b4] sm:$0xf]
        %v1026 = vld [vmem:[#allocation2 + $0x1b8] sm:$0xf]
        %v1027 = vld [vmem:[#allocation2 + $0x1bc] sm:$0xf]
        %v1028 = vld [vmem:[#allocation2 + $0x1c0] sm:$0xf]
        %v1029 = vld [vmem:[#allocation2 + $0x1c4] sm:$0xf]
        %v1030 = vld [vmem:[#allocation2 + $0x1c8] sm:$0xf]
        %v1031 = vld [vmem:[#allocation2 + $0x1cc] sm:$0xf]
        %v1032 = vld [vmem:[#allocation2 + $0x1d0] sm:$0xf]
        %v1033 = vld [vmem:[#allocation2 + $0x1d4] sm:$0xf]
        %v1034 = vld [vmem:[#allocation2 + $0x1d8] sm:$0xf]
        %v1035 = vld [vmem:[#allocation2 + $0x1dc] sm:$0xf]
        %v1036 = vld [vmem:[#allocation2 + $0x1e0] sm:$0xf]
        %v1037 = vld [vmem:[#allocation2 + $0x1e4] sm:$0xf]
        %v1038 = vld [vmem:[#allocation2 + $0x1e8] sm:$0xf]
        %v1039 = vld [vmem:[#allocation2 + $0x1ec] sm:$0xf]
        %v1040 = vld [vmem:[#allocation2 + $0x1f0] sm:$0xf]
        %v1041 = vld [vmem:[#allocation2 + $0x1f4] sm:$0xf]
        %v1042 = vld [vmem:[#allocation2 + $0x1f8] sm:$0xf]
        %v1043 = vld [vmem:[#allocation2 + $0x1fc] sm:$0xf]
        %v1044 = vpack.c.bf16 %v901, %v900
        %v1045 = vpack.c.bf16 %v903, %v902
        %v1046 = vpack.c.bf16 %v905, %v904
        %v1047 = vpack.c.bf16 %v907, %v906
        %v1048 = vpack.c.bf16 %v909, %v908
        %v1049 = vpack.c.bf16 %v911, %v910
        %v1050 = vpack.c.bf16 %v913, %v912
        %v1051 = vpack.c.bf16 %v915, %v914
        %v1052 = vld [vmem:[%s6] sm:$0xff]
        %v1053 = vld [vmem:[%s6 + $0x8] sm:$0xff]
        %v1054 = vld [vmem:[%s6 + $0x10] sm:$0xff]
        %v1055 = vld [vmem:[%s6 + $0x18] sm:$0xff]
        %v1056 = vld [vmem:[%s6 + $0x20] sm:$0xff]
        %v1057 = vld [vmem:[%s6 + $0x28] sm:$0xff]
        %v1058 = vld [vmem:[%s6 + $0x30] sm:$0xff]
        %v1059 = vld [vmem:[%s6 + $0x38] sm:$0xff]
        %v1060 = vld [vmem:[%s6 + $0x40] sm:$0xff]
        %v1061 = vld [vmem:[%s6 + $0x48] sm:$0xff]
        %v1062 = vld [vmem:[%s6 + $0x50] sm:$0xff]
        %v1063 = vld [vmem:[%s6 + $0x58] sm:$0xff]
        %v1064 = vld [vmem:[%s6 + $0x60] sm:$0xff]
        %v1065 = vld [vmem:[%s6 + $0x68] sm:$0xff]
        %v1066 = vld [vmem:[%s6 + $0x70] sm:$0xff]
        %v1067 = vld [vmem:[%s6 + $0x78] sm:$0xff]
        %v1068 = vld [vmem:[%s6 + $0x80] sm:$0xff]
        %v1069 = vld [vmem:[%s6 + $0x88] sm:$0xff]
        %v1070 = vld [vmem:[%s6 + $0x90] sm:$0xff]
        %v1071 = vld [vmem:[%s6 + $0x98] sm:$0xff]
        %v1072 = vld [vmem:[%s6 + $0xa0] sm:$0xff]
        %v1073 = vld [vmem:[%s6 + $0xa8] sm:$0xff]
        %v1074 = vld [vmem:[%s6 + $0xb0] sm:$0xff]
        %v1075 = vld [vmem:[%s6 + $0xb8] sm:$0xff]
        %v1076 = vld [vmem:[%s6 + $0xc0] sm:$0xff]
        %v1077 = vld [vmem:[%s6 + $0xc8] sm:$0xff]
        %v1078 = vld [vmem:[%s6 + $0xd0] sm:$0xff]
        %v1079 = vld [vmem:[%s6 + $0xd8] sm:$0xff]
        %v1080 = vld [vmem:[%s6 + $0xe0] sm:$0xff]
        %v1081 = vld [vmem:[%s6 + $0xe8] sm:$0xff]
        %v1082 = vld [vmem:[%s6 + $0xf0] sm:$0xff]
        %v1083 = vld [vmem:[%s6 + $0xf8] sm:$0xff]
        %v1084 = vld [vmem:[%s6 + $0x100] sm:$0xff]
        %v1085 = vld [vmem:[%s6 + $0x108] sm:$0xff]
        %v1086 = vld [vmem:[%s6 + $0x110] sm:$0xff]
        %v1087 = vld [vmem:[%s6 + $0x118] sm:$0xff]
        %v1088 = vld [vmem:[%s6 + $0x120] sm:$0xff]
        %v1089 = vld [vmem:[%s6 + $0x128] sm:$0xff]
        %v1090 = vld [vmem:[%s6 + $0x130] sm:$0xff]
        %v1091 = vld [vmem:[%s6 + $0x138] sm:$0xff]
        %v1092 = vld [vmem:[%s6 + $0x140] sm:$0xff]
        %v1093 = vld [vmem:[%s6 + $0x148] sm:$0xff]
        %v1094 = vld [vmem:[%s6 + $0x150] sm:$0xff]
        %v1095 = vld [vmem:[%s6 + $0x158] sm:$0xff]
        %v1096 = vld [vmem:[%s6 + $0x160] sm:$0xff]
        %v1097 = vld [vmem:[%s6 + $0x168] sm:$0xff]
        %v1098 = vld [vmem:[%s6 + $0x170] sm:$0xff]
        %v1099 = vld [vmem:[%s6 + $0x178] sm:$0xff]
        %v1100 = vld [vmem:[%s6 + $0x180] sm:$0xff]
        %v1101 = vld [vmem:[%s6 + $0x188] sm:$0xff]
        %v1102 = vld [vmem:[%s6 + $0x190] sm:$0xff]
        %v1103 = vld [vmem:[%s6 + $0x198] sm:$0xff]
        %v1104 = vld [vmem:[%s6 + $0x1a0] sm:$0xff]
        %v1105 = vld [vmem:[%s6 + $0x1a8] sm:$0xff]
        %v1106 = vld [vmem:[%s6 + $0x1b0] sm:$0xff]
        %v1107 = vld [vmem:[%s6 + $0x1b8] sm:$0xff]
        %v1108 = vld [vmem:[%s6 + $0x1c0] sm:$0xff]
        %v1109 = vld [vmem:[%s6 + $0x1c8] sm:$0xff]
        %v1110 = vld [vmem:[%s6 + $0x1d0] sm:$0xff]
        %v1111 = vld [vmem:[%s6 + $0x1d8] sm:$0xff]
        %v1112 = vld [vmem:[%s6 + $0x1e0] sm:$0xff]
        %v1113 = vld [vmem:[%s6 + $0x1e8] sm:$0xff]
        %v1114 = vld [vmem:[%s6 + $0x1f0] sm:$0xff]
        %v1115 = vld [vmem:[%s6 + $0x1f8] sm:$0xff]
        %v1116 = vld [vmem:[%s6 + $0x200] sm:$0xff]
        %v1117 = vld [vmem:[%s6 + $0x208] sm:$0xff]
        %v1118 = vld [vmem:[%s6 + $0x210] sm:$0xff]
        %v1119 = vld [vmem:[%s6 + $0x218] sm:$0xff]
        %v1120 = vld [vmem:[%s6 + $0x220] sm:$0xff]
        %v1121 = vld [vmem:[%s6 + $0x228] sm:$0xff]
        %v1122 = vld [vmem:[%s6 + $0x230] sm:$0xff]
        %v1123 = vld [vmem:[%s6 + $0x238] sm:$0xff]
        %v1124 = vld [vmem:[%s6 + $0x240] sm:$0xff]
        %v1125 = vld [vmem:[%s6 + $0x248] sm:$0xff]
        %v1126 = vld [vmem:[%s6 + $0x250] sm:$0xff]
        %v1127 = vld [vmem:[%s6 + $0x258] sm:$0xff]
        %v1128 = vld [vmem:[%s6 + $0x260] sm:$0xff]
        %v1129 = vld [vmem:[%s6 + $0x268] sm:$0xff]
        %v1130 = vld [vmem:[%s6 + $0x270] sm:$0xff]
        %v1131 = vld [vmem:[%s6 + $0x278] sm:$0xff]
        %v1132 = vld [vmem:[%s6 + $0x280] sm:$0xff]
        %v1133 = vld [vmem:[%s6 + $0x288] sm:$0xff]
        %v1134 = vld [vmem:[%s6 + $0x290] sm:$0xff]
        %v1135 = vld [vmem:[%s6 + $0x298] sm:$0xff]
        %v1136 = vld [vmem:[%s6 + $0x2a0] sm:$0xff]
        %v1137 = vld [vmem:[%s6 + $0x2a8] sm:$0xff]
        %v1138 = vld [vmem:[%s6 + $0x2b0] sm:$0xff]
        %v1139 = vld [vmem:[%s6 + $0x2b8] sm:$0xff]
        %v1140 = vld [vmem:[%s6 + $0x2c0] sm:$0xff]
        %v1141 = vld [vmem:[%s6 + $0x2c8] sm:$0xff]
        %v1142 = vld [vmem:[%s6 + $0x2d0] sm:$0xff]
        %v1143 = vld [vmem:[%s6 + $0x2d8] sm:$0xff]
        %v1144 = vld [vmem:[%s6 + $0x2e0] sm:$0xff]
        %v1145 = vld [vmem:[%s6 + $0x2e8] sm:$0xff]
        %v1146 = vld [vmem:[%s6 + $0x2f0] sm:$0xff]
        %v1147 = vld [vmem:[%s6 + $0x2f8] sm:$0xff]
        %v1148 = vld [vmem:[%s6 + $0x300] sm:$0xff]
        %v1149 = vld [vmem:[%s6 + $0x308] sm:$0xff]
        %v1150 = vld [vmem:[%s6 + $0x310] sm:$0xff]
        %v1151 = vld [vmem:[%s6 + $0x318] sm:$0xff]
        %v1152 = vld [vmem:[%s6 + $0x320] sm:$0xff]
        %v1153 = vld [vmem:[%s6 + $0x328] sm:$0xff]
        %v1154 = vld [vmem:[%s6 + $0x330] sm:$0xff]
        %v1155 = vld [vmem:[%s6 + $0x338] sm:$0xff]
        %v1156 = vld [vmem:[%s6 + $0x340] sm:$0xff]
        %v1157 = vld [vmem:[%s6 + $0x348] sm:$0xff]
        %v1158 = vld [vmem:[%s6 + $0x350] sm:$0xff]
        %v1159 = vld [vmem:[%s6 + $0x358] sm:$0xff]
        %v1160 = vld [vmem:[%s6 + $0x360] sm:$0xff]
        %v1161 = vld [vmem:[%s6 + $0x368] sm:$0xff]
        %v1162 = vld [vmem:[%s6 + $0x370] sm:$0xff]
        %v1163 = vld [vmem:[%s6 + $0x378] sm:$0xff]
        %v1164 = vld [vmem:[%s6 + $0x380] sm:$0xff]
        %v1165 = vld [vmem:[%s6 + $0x388] sm:$0xff]
        %v1166 = vld [vmem:[%s6 + $0x390] sm:$0xff]
        %v1167 = vld [vmem:[%s6 + $0x398] sm:$0xff]
        %v1168 = vld [vmem:[%s6 + $0x3a0] sm:$0xff]
        %v1169 = vld [vmem:[%s6 + $0x3a8] sm:$0xff]
        %v1170 = vld [vmem:[%s6 + $0x3b0] sm:$0xff]
        %v1171 = vld [vmem:[%s6 + $0x3b8] sm:$0xff]
        %v1172 = vld [vmem:[%s6 + $0x3c0] sm:$0xff]
        %v1173 = vld [vmem:[%s6 + $0x3c8] sm:$0xff]
        %v1174 = vld [vmem:[%s6 + $0x3d0] sm:$0xff]
        %v1175 = vld [vmem:[%s6 + $0x3d8] sm:$0xff]
        %v1176 = vld [vmem:[%s6 + $0x3e0] sm:$0xff]
        %v1177 = vld [vmem:[%s6 + $0x3e8] sm:$0xff]
        %v1178 = vld [vmem:[%s6 + $0x3f0] sm:$0xff]
        %v1179 = vld [vmem:[%s6 + $0x3f8] sm:$0xff]
        %1181 = vset.pattern.permute.xlu0 0
        %1182 = vperm.xlu0 %1181, %v1052
        %v1183 = vpop.permute.xlu0 %1182
        %1186 = vset.pattern.permute.xlu0 0
        %1187 = vperm.xlu0 %1186, %v1053
        %v1188 = vpop.permute.xlu0 %1187
        %1191 = vset.pattern.permute.xlu0 0
        %1192 = vperm.xlu0 %1191, %v1054
        %v1193 = vpop.permute.xlu0 %1192
        %1196 = vset.pattern.permute.xlu0 0
        %1197 = vperm.xlu0 %1196, %v1055
        %v1198 = vpop.permute.xlu0 %1197
        %1201 = vset.pattern.permute.xlu0 0
        %1202 = vperm.xlu0 %1201, %v1056
        %v1203 = vpop.permute.xlu0 %1202
        %1206 = vset.pattern.permute.xlu0 0
        %1207 = vperm.xlu0 %1206, %v1057
        %v1208 = vpop.permute.xlu0 %1207
        %1211 = vset.pattern.permute.xlu0 0
        %1212 = vperm.xlu0 %1211, %v1058
        %v1213 = vpop.permute.xlu0 %1212
        %1216 = vset.pattern.permute.xlu0 0
        %1217 = vperm.xlu0 %1216, %v1059
        %v1218 = vpop.permute.xlu0 %1217
        %1221 = vset.pattern.permute.xlu0 0
        %1222 = vperm.xlu0 %1221, %v1060
        %v1223 = vpop.permute.xlu0 %1222
        %1226 = vset.pattern.permute.xlu0 0
        %1227 = vperm.xlu0 %1226, %v1061
        %v1228 = vpop.permute.xlu0 %1227
        %1231 = vset.pattern.permute.xlu0 0
        %1232 = vperm.xlu0 %1231, %v1062
        %v1233 = vpop.permute.xlu0 %1232
        %1236 = vset.pattern.permute.xlu0 0
        %1237 = vperm.xlu0 %1236, %v1063
        %v1238 = vpop.permute.xlu0 %1237
        %1241 = vset.pattern.permute.xlu0 0
        %1242 = vperm.xlu0 %1241, %v1064
        %v1243 = vpop.permute.xlu0 %1242
        %1246 = vset.pattern.permute.xlu0 0
        %1247 = vperm.xlu0 %1246, %v1065
        %v1248 = vpop.permute.xlu0 %1247
        %1251 = vset.pattern.permute.xlu0 0
        %1252 = vperm.xlu0 %1251, %v1066
        %v1253 = vpop.permute.xlu0 %1252
        %1256 = vset.pattern.permute.xlu0 0
        %1257 = vperm.xlu0 %1256, %v1067
        %v1258 = vpop.permute.xlu0 %1257
        %1261 = vset.pattern.permute.xlu0 0
        %1262 = vperm.xlu0 %1261, %v1068
        %v1263 = vpop.permute.xlu0 %1262
        %1266 = vset.pattern.permute.xlu0 0
        %1267 = vperm.xlu0 %1266, %v1069
        %v1268 = vpop.permute.xlu0 %1267
        %1271 = vset.pattern.permute.xlu0 0
        %1272 = vperm.xlu0 %1271, %v1070
        %v1273 = vpop.permute.xlu0 %1272
        %1276 = vset.pattern.permute.xlu0 0
        %1277 = vperm.xlu0 %1276, %v1071
        %v1278 = vpop.permute.xlu0 %1277
        %1281 = vset.pattern.permute.xlu0 0
        %1282 = vperm.xlu0 %1281, %v1072
        %v1283 = vpop.permute.xlu0 %1282
        %1286 = vset.pattern.permute.xlu0 0
        %1287 = vperm.xlu0 %1286, %v1073
        %v1288 = vpop.permute.xlu0 %1287
        %1291 = vset.pattern.permute.xlu0 0
        %1292 = vperm.xlu0 %1291, %v1074
        %v1293 = vpop.permute.xlu0 %1292
        %1296 = vset.pattern.permute.xlu0 0
        %1297 = vperm.xlu0 %1296, %v1075
        %v1298 = vpop.permute.xlu0 %1297
        %1301 = vset.pattern.permute.xlu0 0
        %1302 = vperm.xlu0 %1301, %v1076
        %v1303 = vpop.permute.xlu0 %1302
        %1306 = vset.pattern.permute.xlu0 0
        %1307 = vperm.xlu0 %1306, %v1077
        %v1308 = vpop.permute.xlu0 %1307
        %1311 = vset.pattern.permute.xlu0 0
        %1312 = vperm.xlu0 %1311, %v1078
        %v1313 = vpop.permute.xlu0 %1312
        %1316 = vset.pattern.permute.xlu0 0
        %1317 = vperm.xlu0 %1316, %v1079
        %v1318 = vpop.permute.xlu0 %1317
        %1321 = vset.pattern.permute.xlu0 0
        %1322 = vperm.xlu0 %1321, %v1080
        %v1323 = vpop.permute.xlu0 %1322
        %1326 = vset.pattern.permute.xlu0 0
        %1327 = vperm.xlu0 %1326, %v1081
        %v1328 = vpop.permute.xlu0 %1327
        %1331 = vset.pattern.permute.xlu0 0
        %1332 = vperm.xlu0 %1331, %v1082
        %v1333 = vpop.permute.xlu0 %1332
        %1336 = vset.pattern.permute.xlu0 0
        %1337 = vperm.xlu0 %1336, %v1083
        %v1338 = vpop.permute.xlu0 %1337
        %1341 = vset.pattern.permute.xlu0 0
        %1342 = vperm.xlu0 %1341, %v1084
        %v1343 = vpop.permute.xlu0 %1342
        %1346 = vset.pattern.permute.xlu0 0
        %1347 = vperm.xlu0 %1346, %v1085
        %v1348 = vpop.permute.xlu0 %1347
        %1351 = vset.pattern.permute.xlu0 0
        %1352 = vperm.xlu0 %1351, %v1086
        %v1353 = vpop.permute.xlu0 %1352
        %1356 = vset.pattern.permute.xlu0 0
        %1357 = vperm.xlu0 %1356, %v1087
        %v1358 = vpop.permute.xlu0 %1357
        %1361 = vset.pattern.permute.xlu0 0
        %1362 = vperm.xlu0 %1361, %v1088
        %v1363 = vpop.permute.xlu0 %1362
        %1366 = vset.pattern.permute.xlu0 0
        %1367 = vperm.xlu0 %1366, %v1089
        %v1368 = vpop.permute.xlu0 %1367
        %1371 = vset.pattern.permute.xlu0 0
        %1372 = vperm.xlu0 %1371, %v1090
        %v1373 = vpop.permute.xlu0 %1372
        %1376 = vset.pattern.permute.xlu0 0
        %1377 = vperm.xlu0 %1376, %v1091
        %v1378 = vpop.permute.xlu0 %1377
        %1381 = vset.pattern.permute.xlu0 0
        %1382 = vperm.xlu0 %1381, %v1092
        %v1383 = vpop.permute.xlu0 %1382
        %1386 = vset.pattern.permute.xlu0 0
        %1387 = vperm.xlu0 %1386, %v1093
        %v1388 = vpop.permute.xlu0 %1387
        %1391 = vset.pattern.permute.xlu0 0
        %1392 = vperm.xlu0 %1391, %v1094
        %v1393 = vpop.permute.xlu0 %1392
        %1396 = vset.pattern.permute.xlu0 0
        %1397 = vperm.xlu0 %1396, %v1095
        %v1398 = vpop.permute.xlu0 %1397
        %1401 = vset.pattern.permute.xlu0 0
        %1402 = vperm.xlu0 %1401, %v1096
        %v1403 = vpop.permute.xlu0 %1402
        %1406 = vset.pattern.permute.xlu0 0
        %1407 = vperm.xlu0 %1406, %v1097
        %v1408 = vpop.permute.xlu0 %1407
        %1411 = vset.pattern.permute.xlu0 0
        %1412 = vperm.xlu0 %1411, %v1098
        %v1413 = vpop.permute.xlu0 %1412
        %1416 = vset.pattern.permute.xlu0 0
        %1417 = vperm.xlu0 %1416, %v1099
        %v1418 = vpop.permute.xlu0 %1417
        %1421 = vset.pattern.permute.xlu0 0
        %1422 = vperm.xlu0 %1421, %v1100
        %v1423 = vpop.permute.xlu0 %1422
        %1426 = vset.pattern.permute.xlu0 0
        %1427 = vperm.xlu0 %1426, %v1101
        %v1428 = vpop.permute.xlu0 %1427
        %1431 = vset.pattern.permute.xlu0 0
        %1432 = vperm.xlu0 %1431, %v1102
        %v1433 = vpop.permute.xlu0 %1432
        %1436 = vset.pattern.permute.xlu0 0
        %1437 = vperm.xlu0 %1436, %v1103
        %v1438 = vpop.permute.xlu0 %1437
        %1441 = vset.pattern.permute.xlu0 0
        %1442 = vperm.xlu0 %1441, %v1104
        %v1443 = vpop.permute.xlu0 %1442
        %1446 = vset.pattern.permute.xlu0 0
        %1447 = vperm.xlu0 %1446, %v1105
        %v1448 = vpop.permute.xlu0 %1447
        %1451 = vset.pattern.permute.xlu0 0
        %1452 = vperm.xlu0 %1451, %v1106
        %v1453 = vpop.permute.xlu0 %1452
        %1456 = vset.pattern.permute.xlu0 0
        %1457 = vperm.xlu0 %1456, %v1107
        %v1458 = vpop.permute.xlu0 %1457
        %1461 = vset.pattern.permute.xlu0 0
        %1462 = vperm.xlu0 %1461, %v1108
        %v1463 = vpop.permute.xlu0 %1462
        %1466 = vset.pattern.permute.xlu0 0
        %1467 = vperm.xlu0 %1466, %v1109
        %v1468 = vpop.permute.xlu0 %1467
        %1471 = vset.pattern.permute.xlu0 0
        %1472 = vperm.xlu0 %1471, %v1110
        %v1473 = vpop.permute.xlu0 %1472
        %1476 = vset.pattern.permute.xlu0 0
        %1477 = vperm.xlu0 %1476, %v1111
        %v1478 = vpop.permute.xlu0 %1477
        %1481 = vset.pattern.permute.xlu0 0
        %1482 = vperm.xlu0 %1481, %v1112
        %v1483 = vpop.permute.xlu0 %1482
        %1486 = vset.pattern.permute.xlu0 0
        %1487 = vperm.xlu0 %1486, %v1113
        %v1488 = vpop.permute.xlu0 %1487
        %1491 = vset.pattern.permute.xlu0 0
        %1492 = vperm.xlu0 %1491, %v1114
        %v1493 = vpop.permute.xlu0 %1492
        %1496 = vset.pattern.permute.xlu0 0
        %1497 = vperm.xlu0 %1496, %v1115
        %v1498 = vpop.permute.xlu0 %1497
        %1501 = vset.pattern.permute.xlu0 0
        %1502 = vperm.xlu0 %1501, %v1116
        %v1503 = vpop.permute.xlu0 %1502
        %1506 = vset.pattern.permute.xlu0 0
        %1507 = vperm.xlu0 %1506, %v1117
        %v1508 = vpop.permute.xlu0 %1507
        %1511 = vset.pattern.permute.xlu0 0
        %1512 = vperm.xlu0 %1511, %v1118
        %v1513 = vpop.permute.xlu0 %1512
        %1516 = vset.pattern.permute.xlu0 0
        %1517 = vperm.xlu0 %1516, %v1119
        %v1518 = vpop.permute.xlu0 %1517
        %1521 = vset.pattern.permute.xlu0 0
        %1522 = vperm.xlu0 %1521, %v1120
        %v1523 = vpop.permute.xlu0 %1522
        %1526 = vset.pattern.permute.xlu0 0
        %1527 = vperm.xlu0 %1526, %v1121
        %v1528 = vpop.permute.xlu0 %1527
        %1531 = vset.pattern.permute.xlu0 0
        %1532 = vperm.xlu0 %1531, %v1122
        %v1533 = vpop.permute.xlu0 %1532
        %1536 = vset.pattern.permute.xlu0 0
        %1537 = vperm.xlu0 %1536, %v1123
        %v1538 = vpop.permute.xlu0 %1537
        %1541 = vset.pattern.permute.xlu0 0
        %1542 = vperm.xlu0 %1541, %v1124
        %v1543 = vpop.permute.xlu0 %1542
        %1546 = vset.pattern.permute.xlu0 0
        %1547 = vperm.xlu0 %1546, %v1125
        %v1548 = vpop.permute.xlu0 %1547
        %1551 = vset.pattern.permute.xlu0 0
        %1552 = vperm.xlu0 %1551, %v1126
        %v1553 = vpop.permute.xlu0 %1552
        %1556 = vset.pattern.permute.xlu0 0
        %1557 = vperm.xlu0 %1556, %v1127
        %v1558 = vpop.permute.xlu0 %1557
        %1561 = vset.pattern.permute.xlu0 0
        %1562 = vperm.xlu0 %1561, %v1128
        %v1563 = vpop.permute.xlu0 %1562
        %1566 = vset.pattern.permute.xlu0 0
        %1567 = vperm.xlu0 %1566, %v1129
        %v1568 = vpop.permute.xlu0 %1567
        %1571 = vset.pattern.permute.xlu0 0
        %1572 = vperm.xlu0 %1571, %v1130
        %v1573 = vpop.permute.xlu0 %1572
        %1576 = vset.pattern.permute.xlu0 0
        %1577 = vperm.xlu0 %1576, %v1131
        %v1578 = vpop.permute.xlu0 %1577
        %1581 = vset.pattern.permute.xlu0 0
        %1582 = vperm.xlu0 %1581, %v1132
        %v1583 = vpop.permute.xlu0 %1582
        %1586 = vset.pattern.permute.xlu0 0
        %1587 = vperm.xlu0 %1586, %v1133
        %v1588 = vpop.permute.xlu0 %1587
        %1591 = vset.pattern.permute.xlu0 0
        %1592 = vperm.xlu0 %1591, %v1134
        %v1593 = vpop.permute.xlu0 %1592
        %1596 = vset.pattern.permute.xlu0 0
        %1597 = vperm.xlu0 %1596, %v1135
        %v1598 = vpop.permute.xlu0 %1597
        %1601 = vset.pattern.permute.xlu0 0
        %1602 = vperm.xlu0 %1601, %v1136
        %v1603 = vpop.permute.xlu0 %1602
        %1606 = vset.pattern.permute.xlu0 0
        %1607 = vperm.xlu0 %1606, %v1137
        %v1608 = vpop.permute.xlu0 %1607
        %1611 = vset.pattern.permute.xlu0 0
        %1612 = vperm.xlu0 %1611, %v1138
        %v1613 = vpop.permute.xlu0 %1612
        %1616 = vset.pattern.permute.xlu0 0
        %1617 = vperm.xlu0 %1616, %v1139
        %v1618 = vpop.permute.xlu0 %1617
        %1621 = vset.pattern.permute.xlu0 0
        %1622 = vperm.xlu0 %1621, %v1140
        %v1623 = vpop.permute.xlu0 %1622
        %1626 = vset.pattern.permute.xlu0 0
        %1627 = vperm.xlu0 %1626, %v1141
        %v1628 = vpop.permute.xlu0 %1627
        %1631 = vset.pattern.permute.xlu0 0
        %1632 = vperm.xlu0 %1631, %v1142
        %v1633 = vpop.permute.xlu0 %1632
        %1636 = vset.pattern.permute.xlu0 0
        %1637 = vperm.xlu0 %1636, %v1143
        %v1638 = vpop.permute.xlu0 %1637
        %1641 = vset.pattern.permute.xlu0 0
        %1642 = vperm.xlu0 %1641, %v1144
        %v1643 = vpop.permute.xlu0 %1642
        %1646 = vset.pattern.permute.xlu0 0
        %1647 = vperm.xlu0 %1646, %v1145
        %v1648 = vpop.permute.xlu0 %1647
        %1651 = vset.pattern.permute.xlu0 0
        %1652 = vperm.xlu0 %1651, %v1146
        %v1653 = vpop.permute.xlu0 %1652
        %1656 = vset.pattern.permute.xlu0 0
        %1657 = vperm.xlu0 %1656, %v1147
        %v1658 = vpop.permute.xlu0 %1657
        %1661 = vset.pattern.permute.xlu0 0
        %1662 = vperm.xlu0 %1661, %v1148
        %v1663 = vpop.permute.xlu0 %1662
        %1666 = vset.pattern.permute.xlu0 0
        %1667 = vperm.xlu0 %1666, %v1149
        %v1668 = vpop.permute.xlu0 %1667
        %1671 = vset.pattern.permute.xlu0 0
        %1672 = vperm.xlu0 %1671, %v1150
        %v1673 = vpop.permute.xlu0 %1672
        %1676 = vset.pattern.permute.xlu0 0
        %1677 = vperm.xlu0 %1676, %v1151
        %v1678 = vpop.permute.xlu0 %1677
        %1681 = vset.pattern.permute.xlu0 0
        %1682 = vperm.xlu0 %1681, %v1152
        %v1683 = vpop.permute.xlu0 %1682
        %1686 = vset.pattern.permute.xlu0 0
        %1687 = vperm.xlu0 %1686, %v1153
        %v1688 = vpop.permute.xlu0 %1687
        %1691 = vset.pattern.permute.xlu0 0
        %1692 = vperm.xlu0 %1691, %v1154
        %v1693 = vpop.permute.xlu0 %1692
        %1696 = vset.pattern.permute.xlu0 0
        %1697 = vperm.xlu0 %1696, %v1155
        %v1698 = vpop.permute.xlu0 %1697
        %1701 = vset.pattern.permute.xlu0 0
        %1702 = vperm.xlu0 %1701, %v1156
        %v1703 = vpop.permute.xlu0 %1702
        %1706 = vset.pattern.permute.xlu0 0
        %1707 = vperm.xlu0 %1706, %v1157
        %v1708 = vpop.permute.xlu0 %1707
        %1711 = vset.pattern.permute.xlu0 0
        %1712 = vperm.xlu0 %1711, %v1158
        %v1713 = vpop.permute.xlu0 %1712
        %1716 = vset.pattern.permute.xlu0 0
        %1717 = vperm.xlu0 %1716, %v1159
        %v1718 = vpop.permute.xlu0 %1717
        %1721 = vset.pattern.permute.xlu0 0
        %1722 = vperm.xlu0 %1721, %v1160
        %v1723 = vpop.permute.xlu0 %1722
        %1726 = vset.pattern.permute.xlu0 0
        %1727 = vperm.xlu0 %1726, %v1161
        %v1728 = vpop.permute.xlu0 %1727
        %1731 = vset.pattern.permute.xlu0 0
        %1732 = vperm.xlu0 %1731, %v1162
        %v1733 = vpop.permute.xlu0 %1732
        %1736 = vset.pattern.permute.xlu0 0
        %1737 = vperm.xlu0 %1736, %v1163
        %v1738 = vpop.permute.xlu0 %1737
        %1741 = vset.pattern.permute.xlu0 0
        %1742 = vperm.xlu0 %1741, %v1164
        %v1743 = vpop.permute.xlu0 %1742
        %1746 = vset.pattern.permute.xlu0 0
        %1747 = vperm.xlu0 %1746, %v1165
        %v1748 = vpop.permute.xlu0 %1747
        %1751 = vset.pattern.permute.xlu0 0
        %1752 = vperm.xlu0 %1751, %v1166
        %v1753 = vpop.permute.xlu0 %1752
        %1756 = vset.pattern.permute.xlu0 0
        %1757 = vperm.xlu0 %1756, %v1167
        %v1758 = vpop.permute.xlu0 %1757
        %1761 = vset.pattern.permute.xlu0 0
        %1762 = vperm.xlu0 %1761, %v1168
        %v1763 = vpop.permute.xlu0 %1762
        %1766 = vset.pattern.permute.xlu0 0
        %1767 = vperm.xlu0 %1766, %v1169
        %v1768 = vpop.permute.xlu0 %1767
        %1771 = vset.pattern.permute.xlu0 0
        %1772 = vperm.xlu0 %1771, %v1170
        %v1773 = vpop.permute.xlu0 %1772
        %1776 = vset.pattern.permute.xlu0 0
        %1777 = vperm.xlu0 %1776, %v1171
        %v1778 = vpop.permute.xlu0 %1777
        %1781 = vset.pattern.permute.xlu0 0
        %1782 = vperm.xlu0 %1781, %v1172
        %v1783 = vpop.permute.xlu0 %1782
        %1786 = vset.pattern.permute.xlu0 0
        %1787 = vperm.xlu0 %1786, %v1173
        %v1788 = vpop.permute.xlu0 %1787
        %1791 = vset.pattern.permute.xlu0 0
        %1792 = vperm.xlu0 %1791, %v1174
        %v1793 = vpop.permute.xlu0 %1792
        %1796 = vset.pattern.permute.xlu0 0
        %1797 = vperm.xlu0 %1796, %v1175
        %v1798 = vpop.permute.xlu0 %1797
        %1801 = vset.pattern.permute.xlu0 0
        %1802 = vperm.xlu0 %1801, %v1176
        %v1803 = vpop.permute.xlu0 %1802
        %1806 = vset.pattern.permute.xlu0 0
        %1807 = vperm.xlu0 %1806, %v1177
        %v1808 = vpop.permute.xlu0 %1807
        %1811 = vset.pattern.permute.xlu0 0
        %1812 = vperm.xlu0 %1811, %v1178
        %v1813 = vpop.permute.xlu0 %1812
        %1816 = vset.pattern.permute.xlu0 0
        %1817 = vperm.xlu0 %1816, %v1179
        %v1818 = vpop.permute.xlu0 %1817
        %v1948 = vunpack.c.l.b16 %v916
        %v1949 = vunpack.c.l.b16 %v917
        %v1950 = vunpack.c.l.b16 %v918
        %v1951 = vunpack.c.l.b16 %v919
        %v1952 = vunpack.c.l.b16 %v920
        %v1953 = vunpack.c.l.b16 %v921
        %v1954 = vunpack.c.l.b16 %v922
        %v1955 = vunpack.c.l.b16 %v923
        %v1956 = vunpack.c.l.b16 %v924
        %v1957 = vunpack.c.l.b16 %v925
        %v1958 = vunpack.c.l.b16 %v926
        %v1959 = vunpack.c.l.b16 %v927
        %v1960 = vunpack.c.l.b16 %v928
        %v1961 = vunpack.c.l.b16 %v929
        %v1962 = vunpack.c.l.b16 %v930
        %v1963 = vunpack.c.l.b16 %v931
        %v1964 = vunpack.c.l.b16 %v932
        %v1965 = vunpack.c.l.b16 %v933
        %v1966 = vunpack.c.l.b16 %v934
        %v1967 = vunpack.c.l.b16 %v935
        %v1968 = vunpack.c.l.b16 %v936
        %v1969 = vunpack.c.l.b16 %v937
        %v1970 = vunpack.c.l.b16 %v938
        %v1971 = vunpack.c.l.b16 %v939
        %v1972 = vunpack.c.l.b16 %v940
        %v1973 = vunpack.c.l.b16 %v941
        %v1974 = vunpack.c.l.b16 %v942
        %v1975 = vunpack.c.l.b16 %v943
        %v1976 = vunpack.c.l.b16 %v944
        %v1977 = vunpack.c.l.b16 %v945
        %v1978 = vunpack.c.l.b16 %v946
        %v1979 = vunpack.c.l.b16 %v947
        %v1980 = vunpack.c.l.b16 %v948
        %v1981 = vunpack.c.l.b16 %v949
        %v1982 = vunpack.c.l.b16 %v950
        %v1983 = vunpack.c.l.b16 %v951
        %v1984 = vunpack.c.l.b16 %v952
        %v1985 = vunpack.c.l.b16 %v953
        %v1986 = vunpack.c.l.b16 %v954
        %v1987 = vunpack.c.l.b16 %v955
        %v1988 = vunpack.c.l.b16 %v956
        %v1989 = vunpack.c.l.b16 %v957
        %v1990 = vunpack.c.l.b16 %v958
        %v1991 = vunpack.c.l.b16 %v959
        %v1992 = vunpack.c.l.b16 %v960
        %v1993 = vunpack.c.l.b16 %v961
        %v1994 = vunpack.c.l.b16 %v962
        %v1995 = vunpack.c.l.b16 %v963
        %v1996 = vunpack.c.l.b16 %v964
        %v1997 = vunpack.c.l.b16 %v965
        %v1998 = vunpack.c.l.b16 %v966
        %v1999 = vunpack.c.l.b16 %v967
        %v2000 = vunpack.c.l.b16 %v968
        %v2001 = vunpack.c.l.b16 %v969
        %v2002 = vunpack.c.l.b16 %v970
        %v2003 = vunpack.c.l.b16 %v971
        %v2004 = vunpack.c.l.b16 %v972
        %v2005 = vunpack.c.l.b16 %v973
        %v2006 = vunpack.c.l.b16 %v974
        %v2007 = vunpack.c.l.b16 %v975
        %v2008 = vunpack.c.l.b16 %v976
        %v2009 = vunpack.c.l.b16 %v977
        %v2010 = vunpack.c.l.b16 %v978
        %v2011 = vunpack.c.l.b16 %v979
        %v2012 = vunpack.c.l.b16 %v980
        %v2013 = vunpack.c.l.b16 %v981
        %v2014 = vunpack.c.l.b16 %v982
        %v2015 = vunpack.c.l.b16 %v983
        %v2016 = vunpack.c.l.b16 %v984
        %v2017 = vunpack.c.l.b16 %v985
        %v2018 = vunpack.c.l.b16 %v986
        %v2019 = vunpack.c.l.b16 %v987
        %v2020 = vunpack.c.l.b16 %v988
        %v2021 = vunpack.c.l.b16 %v989
        %v2022 = vunpack.c.l.b16 %v990
        %v2023 = vunpack.c.l.b16 %v991
        %v2024 = vunpack.c.l.b16 %v992
        %v2025 = vunpack.c.l.b16 %v993
        %v2026 = vunpack.c.l.b16 %v994
        %v2027 = vunpack.c.l.b16 %v995
        %v2028 = vunpack.c.l.b16 %v996
        %v2029 = vunpack.c.l.b16 %v997
        %v2030 = vunpack.c.l.b16 %v998
        %v2031 = vunpack.c.l.b16 %v999
        %v2032 = vunpack.c.l.b16 %v1000
        %v2033 = vunpack.c.l.b16 %v1001
        %v2034 = vunpack.c.l.b16 %v1002
        %v2035 = vunpack.c.l.b16 %v1003
        %v2036 = vunpack.c.l.b16 %v1004
        %v2037 = vunpack.c.l.b16 %v1005
        %v2038 = vunpack.c.l.b16 %v1006
        %v2039 = vunpack.c.l.b16 %v1007
        %v2040 = vunpack.c.l.b16 %v1008
        %v2041 = vunpack.c.l.b16 %v1009
        %v2042 = vunpack.c.l.b16 %v1010
        %v2043 = vunpack.c.l.b16 %v1011
        %v2044 = vunpack.c.l.b16 %v1012
        %v2045 = vunpack.c.l.b16 %v1013
        %v2046 = vunpack.c.l.b16 %v1014
        %v2047 = vunpack.c.l.b16 %v1015
        %v2048 = vunpack.c.l.b16 %v1016
        %v2049 = vunpack.c.l.b16 %v1017
        %v2050 = vunpack.c.l.b16 %v1018
        %v2051 = vunpack.c.l.b16 %v1019
        %v2052 = vunpack.c.l.b16 %v1020
        %v2053 = vunpack.c.l.b16 %v1021
        %v2054 = vunpack.c.l.b16 %v1022
        %v2055 = vunpack.c.l.b16 %v1023
        %v2056 = vunpack.c.l.b16 %v1024
        %v2057 = vunpack.c.l.b16 %v1025
        %v2058 = vunpack.c.l.b16 %v1026
        %v2059 = vunpack.c.l.b16 %v1027
        %v2060 = vunpack.c.l.b16 %v1028
        %v2061 = vunpack.c.l.b16 %v1029
        %v2062 = vunpack.c.l.b16 %v1030
        %v2063 = vunpack.c.l.b16 %v1031
        %v2064 = vunpack.c.l.b16 %v1032
        %v2065 = vunpack.c.l.b16 %v1033
        %v2066 = vunpack.c.l.b16 %v1034
        %v2067 = vunpack.c.l.b16 %v1035
        %v2068 = vunpack.c.l.b16 %v1036
        %v2069 = vunpack.c.l.b16 %v1037
        %v2070 = vunpack.c.l.b16 %v1038
        %v2071 = vunpack.c.l.b16 %v1039
        %v2072 = vunpack.c.l.b16 %v1040
        %v2073 = vunpack.c.l.b16 %v1041
        %v2074 = vunpack.c.l.b16 %v1042
        %v2075 = vunpack.c.l.b16 %v1043
        %v2076 = vpack.c.b16 %v1949, %v1948
        %v2077 = vpack.c.b16 %v1951, %v1950
        %v2078 = vpack.c.b16 %v1953, %v1952
        %v2079 = vpack.c.b16 %v1955, %v1954
        %v2080 = vpack.c.b16 %v1957, %v1956
        %v2081 = vpack.c.b16 %v1959, %v1958
        %v2082 = vpack.c.b16 %v1961, %v1960
        %v2083 = vpack.c.b16 %v1963, %v1962
        %v2084 = vpack.c.b16 %v1965, %v1964
        %v2085 = vpack.c.b16 %v1967, %v1966
        %v2086 = vpack.c.b16 %v1969, %v1968
        %v2087 = vpack.c.b16 %v1971, %v1970
        %v2088 = vpack.c.b16 %v1973, %v1972
        %v2089 = vpack.c.b16 %v1975, %v1974
        %v2090 = vpack.c.b16 %v1977, %v1976
        %v2091 = vpack.c.b16 %v1979, %v1978
        %v2092 = vpack.c.b16 %v1981, %v1980
        %v2093 = vpack.c.b16 %v1983, %v1982
        %v2094 = vpack.c.b16 %v1985, %v1984
        %v2095 = vpack.c.b16 %v1987, %v1986
        %v2096 = vpack.c.b16 %v1989, %v1988
        %v2097 = vpack.c.b16 %v1991, %v1990
        %v2098 = vpack.c.b16 %v1993, %v1992
        %v2099 = vpack.c.b16 %v1995, %v1994
        %v2100 = vpack.c.b16 %v1997, %v1996
        %v2101 = vpack.c.b16 %v1999, %v1998
        %v2102 = vpack.c.b16 %v2001, %v2000
        %v2103 = vpack.c.b16 %v2003, %v2002
        %v2104 = vpack.c.b16 %v2005, %v2004
        %v2105 = vpack.c.b16 %v2007, %v2006
        %v2106 = vpack.c.b16 %v2009, %v2008
        %v2107 = vpack.c.b16 %v2011, %v2010
        %v2108 = vpack.c.b16 %v2013, %v2012
        %v2109 = vpack.c.b16 %v2015, %v2014
        %v2110 = vpack.c.b16 %v2017, %v2016
        %v2111 = vpack.c.b16 %v2019, %v2018
        %v2112 = vpack.c.b16 %v2021, %v2020
        %v2113 = vpack.c.b16 %v2023, %v2022
        %v2114 = vpack.c.b16 %v2025, %v2024
        %v2115 = vpack.c.b16 %v2027, %v2026
        %v2116 = vpack.c.b16 %v2029, %v2028
        %v2117 = vpack.c.b16 %v2031, %v2030
        %v2118 = vpack.c.b16 %v2033, %v2032
        %v2119 = vpack.c.b16 %v2035, %v2034
        %v2120 = vpack.c.b16 %v2037, %v2036
        %v2121 = vpack.c.b16 %v2039, %v2038
        %v2122 = vpack.c.b16 %v2041, %v2040
        %v2123 = vpack.c.b16 %v2043, %v2042
        %v2124 = vpack.c.b16 %v2045, %v2044
        %v2125 = vpack.c.b16 %v2047, %v2046
        %v2126 = vpack.c.b16 %v2049, %v2048
        %v2127 = vpack.c.b16 %v2051, %v2050
        %v2128 = vpack.c.b16 %v2053, %v2052
        %v2129 = vpack.c.b16 %v2055, %v2054
        %v2130 = vpack.c.b16 %v2057, %v2056
        %v2131 = vpack.c.b16 %v2059, %v2058
        %v2132 = vpack.c.b16 %v2061, %v2060
        %v2133 = vpack.c.b16 %v2063, %v2062
        %v2134 = vpack.c.b16 %v2065, %v2064
        %v2135 = vpack.c.b16 %v2067, %v2066
        %v2136 = vpack.c.b16 %v2069, %v2068
        %v2137 = vpack.c.b16 %v2071, %v2070
        %v2138 = vpack.c.b16 %v2073, %v2072
        %v2139 = vpack.c.b16 %v2075, %v2074
        %2204 = vmatprep.subr.bf16.mxu0 0
        %2205 = vmatpush1.bf16.msra.mxu0 %v1044
        %2206 = vmatprep.subr.bf16.mxu0 0
        %2207 = vmatpush1.bf16.msra.mxu0 %v1045
        %2208 = vmatprep.subr.bf16.mxu0 0
        %2209 = vmatpush1.bf16.msra.mxu0 %v1046
        %2210 = vmatprep.subr.bf16.mxu0 0
        %2211 = vmatpush1.bf16.msra.mxu0 %v1047
        %2212 = vmatprep.subr.bf16.mxu0 0
        %2213 = vmatpush1.bf16.msra.mxu0 %v1048
        %2214 = vmatprep.subr.bf16.mxu0 0
        %2215 = vmatpush1.bf16.msra.mxu0 %v1049
        %2216 = vmatprep.subr.bf16.mxu0 0
        %2217 = vmatpush1.bf16.msra.mxu0 %v1050
        %2218 = vmatprep.subr.bf16.mxu0 0
        %2219 = vmatpush1.bf16.msra.mxu0 %v1051
        %2220 = vmatprep.subr.bf16.mxu0 0
        %2221 = vmatpush1.bf16.msra.mxu0 0
        %2222 = vmatprep.subr.bf16.mxu0 0
        %2223 = vmatpush1.bf16.msra.mxu0 0
        %2224 = vmatprep.subr.bf16.mxu0 0
        %2225 = vmatpush1.bf16.msra.mxu0 0
        %2226 = vmatprep.subr.bf16.mxu0 0
        %2227 = vmatpush1.bf16.msra.mxu0 0
        %2228 = vmatprep.subr.bf16.mxu0 0
        %2229 = vmatpush1.bf16.msra.mxu0 0
        %2230 = vmatprep.subr.bf16.mxu0 0
        %2231 = vmatpush1.bf16.msra.mxu0 0
        %2232 = vmatprep.subr.bf16.mxu0 0
        %2233 = vmatpush1.bf16.msra.mxu0 0
        %2234 = vmatprep.subr.bf16.mxu0 0
        %2235 = vmatpush1.bf16.msra.mxu0 0
        %2236 = vmatprep.mubr.bf16.mxu0 0
        %2237 = vmatmul.mubr.bf16.gmra.mrb[0].mxu0 %v2076
        %v2238 = vpop.f32.mrb[0].mxu0
        %v2239 = vadd.f32 %v1183, %v2238
        %v2240 = vpop.f32.mrb[0].mxu0
        %v2241 = vpop.f32.mrb[0].mxu0
        %v2242 = vadd.f32 %v1188, %v2241
        %v2243 = vpop.f32.mrb[0].mxu0
        %2244 = vmatprep.mubr.bf16.mxu0 0
        %2245 = vmatmul.mubr.bf16.gmra.mrb[0].mxu0 %v2077
        %v2246 = vpop.f32.mrb[0].mxu0
        %v2247 = vadd.f32 %v1193, %v2246
        %v2248 = vpop.f32.mrb[0].mxu0
        %v2249 = vpop.f32.mrb[0].mxu0
        %v2250 = vadd.f32 %v1198, %v2249
        %v2251 = vpop.f32.mrb[0].mxu0
        %2252 = vmatprep.mubr.bf16.mxu0 0
        %2253 = vmatmul.mubr.bf16.gmra.mrb[0].mxu0 %v2078
        %v2254 = vpop.f32.mrb[0].mxu0
        %v2255 = vadd.f32 %v1203, %v2254
        %v2256 = vpop.f32.mrb[0].mxu0
        %v2257 = vpop.f32.mrb[0].mxu0
        %v2258 = vadd.f32 %v1208, %v2257
        %v2259 = vpop.f32.mrb[0].mxu0
        %2260 = vmatprep.mubr.bf16.mxu0 0
        %2261 = vmatmul.mubr.bf16.gmra.mrb[0].mxu0 %v2079
        %v2262 = vpop.f32.mrb[0].mxu0
        %v2263 = vadd.f32 %v1213, %v2262
        %v2264 = vpop.f32.mrb[0].mxu0
        %v2265 = vpop.f32.mrb[0].mxu0
        %v2266 = vadd.f32 %v1218, %v2265
        %v2267 = vpop.f32.mrb[0].mxu0
        %2268 = vmatprep.mubr.bf16.mxu0 0
        %2269 = vmatmul.mubr.bf16.gmra.mrb[0].mxu0 %v2080
        %v2270 = vpop.f32.mrb[0].mxu0
        %v2271 = vadd.f32 %v1223, %v2270
        %v2272 = vpop.f32.mrb[0].mxu0
        %v2273 = vpop.f32.mrb[0].mxu0
        %v2274 = vadd.f32 %v1228, %v2273
        %v2275 = vpop.f32.mrb[0].mxu0
        %2276 = vmatprep.mubr.bf16.mxu0 0
        %2277 = vmatmul.mubr.bf16.gmra.mrb[0].mxu0 %v2081
        %v2278 = vpop.f32.mrb[0].mxu0
        %v2279 = vadd.f32 %v1233, %v2278
        %v2280 = vpop.f32.mrb[0].mxu0
        %v2281 = vpop.f32.mrb[0].mxu0
        %v2282 = vadd.f32 %v1238, %v2281
        %v2283 = vpop.f32.mrb[0].mxu0
        %2284 = vmatprep.mubr.bf16.mxu0 0
        %2285 = vmatmul.mubr.bf16.gmra.mrb[0].mxu0 %v2082
        %v2286 = vpop.f32.mrb[0].mxu0
        %v2287 = vadd.f32 %v1243, %v2286
        %v2288 = vpop.f32.mrb[0].mxu0
        %v2289 = vpop.f32.mrb[0].mxu0
        %v2290 = vadd.f32 %v1248, %v2289
        %v2291 = vpop.f32.mrb[0].mxu0
        %2292 = vmatprep.mubr.bf16.mxu0 0
        %2293 = vmatmul.mubr.bf16.gmra.mrb[0].mxu0 %v2083
        %v2294 = vpop.f32.mrb[0].mxu0
        %v2295 = vadd.f32 %v1253, %v2294
        %v2296 = vpop.f32.mrb[0].mxu0
        %v2297 = vpop.f32.mrb[0].mxu0
        %v2298 = vadd.f32 %v1258, %v2297
        %v2299 = vpop.f32.mrb[0].mxu0
        %2300 = vmatprep.mubr.bf16.mxu0 0
        %2301 = vmatmul.mubr.bf16.gmra.mrb[0].mxu0 %v2084
        %v2302 = vpop.f32.mrb[0].mxu0
        %v2303 = vadd.f32 %v1263, %v2302
        %v2304 = vpop.f32.mrb[0].mxu0
        %v2305 = vpop.f32.mrb[0].mxu0
        %v2306 = vadd.f32 %v1268, %v2305
        %v2307 = vpop.f32.mrb[0].mxu0
        %2308 = vmatprep.mubr.bf16.mxu0 0
        %2309 = vmatmul.mubr.bf16.gmra.mrb[0].mxu0 %v2085
        %v2310 = vpop.f32.mrb[0].mxu0
        %v2311 = vadd.f32 %v1273, %v2310
        %v2312 = vpop.f32.mrb[0].mxu0
        %v2313 = vpop.f32.mrb[0].mxu0
        %v2314 = vadd.f32 %v1278, %v2313
        %v2315 = vpop.f32.mrb[0].mxu0
        %2316 = vmatprep.mubr.bf16.mxu0 0
        %2317 = vmatmul.mubr.bf16.gmra.mrb[0].mxu0 %v2086
        %v2318 = vpop.f32.mrb[0].mxu0
        %v2319 = vadd.f32 %v1283, %v2318
        %v2320 = vpop.f32.mrb[0].mxu0
        %v2321 = vpop.f32.mrb[0].mxu0
        %v2322 = vadd.f32 %v1288, %v2321
        %v2323 = vpop.f32.mrb[0].mxu0
        %2324 = vmatprep.mubr.bf16.mxu0 0
        %2325 = vmatmul.mubr.bf16.gmra.mrb[0].mxu0 %v2087
        %v2326 = vpop.f32.mrb[0].mxu0
        %v2327 = vadd.f32 %v1293, %v2326
        %v2328 = vpop.f32.mrb[0].mxu0
        %v2329 = vpop.f32.mrb[0].mxu0
        %v2330 = vadd.f32 %v1298, %v2329
        %v2331 = vpop.f32.mrb[0].mxu0
        %2332 = vmatprep.mubr.bf16.mxu0 0
        %2333 = vmatmul.mubr.bf16.gmra.mrb[0].mxu0 %v2088
        %v2334 = vpop.f32.mrb[0].mxu0
        %v2335 = vadd.f32 %v1303, %v2334
        %v2336 = vpop.f32.mrb[0].mxu0
        %v2337 = vpop.f32.mrb[0].mxu0
        %v2338 = vadd.f32 %v1308, %v2337
        %v2339 = vpop.f32.mrb[0].mxu0
        %2340 = vmatprep.mubr.bf16.mxu0 0
        %2341 = vmatmul.mubr.bf16.gmra.mrb[0].mxu0 %v2089
        %v2342 = vpop.f32.mrb[0].mxu0
        %v2343 = vadd.f32 %v1313, %v2342
        %v2344 = vpop.f32.mrb[0].mxu0
        %v2345 = vpop.f32.mrb[0].mxu0
        %v2346 = vadd.f32 %v1318, %v2345
        %v2347 = vpop.f32.mrb[0].mxu0
        %2348 = vmatprep.mubr.bf16.mxu0 0
        %2349 = vmatmul.mubr.bf16.gmra.mrb[0].mxu0 %v2090
        %v2350 = vpop.f32.mrb[0].mxu0
        %v2351 = vadd.f32 %v1323, %v2350
        %v2352 = vpop.f32.mrb[0].mxu0
        %v2353 = vpop.f32.mrb[0].mxu0
        %v2354 = vadd.f32 %v1328, %v2353
        %v2355 = vpop.f32.mrb[0].mxu0
        %2356 = vmatprep.mubr.bf16.mxu0 0
        %2357 = vmatmul.mubr.bf16.gmra.mrb[0].mxu0 %v2091
        %v2358 = vpop.f32.mrb[0].mxu0
        %v2359 = vadd.f32 %v1333, %v2358
        %v2360 = vpop.f32.mrb[0].mxu0
        %v2361 = vpop.f32.mrb[0].mxu0
        %v2362 = vadd.f32 %v1338, %v2361
        %v2363 = vpop.f32.mrb[0].mxu0
        %2364 = vmatprep.mubr.bf16.mxu0 0
        %2365 = vmatmul.mubr.bf16.gmra.mrb[0].mxu0 %v2092
        %v2366 = vpop.f32.mrb[0].mxu0
        %v2367 = vadd.f32 %v1343, %v2366
        %v2368 = vpop.f32.mrb[0].mxu0
        %v2369 = vpop.f32.mrb[0].mxu0
        %v2370 = vadd.f32 %v1348, %v2369
        %v2371 = vpop.f32.mrb[0].mxu0
        %2372 = vmatprep.mubr.bf16.mxu0 0
        %2373 = vmatmul.mubr.bf16.gmra.mrb[0].mxu0 %v2093
        %v2374 = vpop.f32.mrb[0].mxu0
        %v2375 = vadd.f32 %v1353, %v2374
        %v2376 = vpop.f32.mrb[0].mxu0
        %v2377 = vpop.f32.mrb[0].mxu0
        %v2378 = vadd.f32 %v1358, %v2377
        %v2379 = vpop.f32.mrb[0].mxu0
        %2380 = vmatprep.mubr.bf16.mxu0 0
        %2381 = vmatmul.mubr.bf16.gmra.mrb[0].mxu0 %v2094
        %v2382 = vpop.f32.mrb[0].mxu0
        %v2383 = vadd.f32 %v1363, %v2382
        %v2384 = vpop.f32.mrb[0].mxu0
        %v2385 = vpop.f32.mrb[0].mxu0
        %v2386 = vadd.f32 %v1368, %v2385
        %v2387 = vpop.f32.mrb[0].mxu0
        %2388 = vmatprep.mubr.bf16.mxu0 0
        %2389 = vmatmul.mubr.bf16.gmra.mrb[0].mxu0 %v2095
        %v2390 = vpop.f32.mrb[0].mxu0
        %v2391 = vadd.f32 %v1373, %v2390
        %v2392 = vpop.f32.mrb[0].mxu0
        %v2393 = vpop.f32.mrb[0].mxu0
        %v2394 = vadd.f32 %v1378, %v2393
        %v2395 = vpop.f32.mrb[0].mxu0
        %2396 = vmatprep.mubr.bf16.mxu0 0
        %2397 = vmatmul.mubr.bf16.gmra.mrb[0].mxu0 %v2096
        %v2398 = vpop.f32.mrb[0].mxu0
        %v2399 = vadd.f32 %v1383, %v2398
        %v2400 = vpop.f32.mrb[0].mxu0
        %v2401 = vpop.f32.mrb[0].mxu0
        %v2402 = vadd.f32 %v1388, %v2401
        %v2403 = vpop.f32.mrb[0].mxu0
        %2404 = vmatprep.mubr.bf16.mxu0 0
        %2405 = vmatmul.mubr.bf16.gmra.mrb[0].mxu0 %v2097
        %v2406 = vpop.f32.mrb[0].mxu0
        %v2407 = vadd.f32 %v1393, %v2406
        %v2408 = vpop.f32.mrb[0].mxu0
        %v2409 = vpop.f32.mrb[0].mxu0
        %v2410 = vadd.f32 %v1398, %v2409
        %v2411 = vpop.f32.mrb[0].mxu0
        %2412 = vmatprep.mubr.bf16.mxu0 0
        %2413 = vmatmul.mubr.bf16.gmra.mrb[0].mxu0 %v2098
        %v2414 = vpop.f32.mrb[0].mxu0
        %v2415 = vadd.f32 %v1403, %v2414
        %v2416 = vpop.f32.mrb[0].mxu0
        %v2417 = vpop.f32.mrb[0].mxu0
        %v2418 = vadd.f32 %v1408, %v2417
        %v2419 = vpop.f32.mrb[0].mxu0
        %2420 = vmatprep.mubr.bf16.mxu0 0
        %2421 = vmatmul.mubr.bf16.gmra.mrb[0].mxu0 %v2099
        %v2422 = vpop.f32.mrb[0].mxu0
        %v2423 = vadd.f32 %v1413, %v2422
        %v2424 = vpop.f32.mrb[0].mxu0
        %v2425 = vpop.f32.mrb[0].mxu0
        %v2426 = vadd.f32 %v1418, %v2425
        %v2427 = vpop.f32.mrb[0].mxu0
        %2428 = vmatprep.mubr.bf16.mxu0 0
        %2429 = vmatmul.mubr.bf16.gmra.mrb[0].mxu0 %v2100
        %v2430 = vpop.f32.mrb[0].mxu0
        %v2431 = vadd.f32 %v1423, %v2430
        %v2432 = vpop.f32.mrb[0].mxu0
        %v2433 = vpop.f32.mrb[0].mxu0
        %v2434 = vadd.f32 %v1428, %v2433
        %v2435 = vpop.f32.mrb[0].mxu0
        %2436 = vmatprep.mubr.bf16.mxu0 0
        %2437 = vmatmul.mubr.bf16.gmra.mrb[0].mxu0 %v2101
        %v2438 = vpop.f32.mrb[0].mxu0
        %v2439 = vadd.f32 %v1433, %v2438
        %v2440 = vpop.f32.mrb[0].mxu0
        %v2441 = vpop.f32.mrb[0].mxu0
        %v2442 = vadd.f32 %v1438, %v2441
        %v2443 = vpop.f32.mrb[0].mxu0
        %2444 = vmatprep.mubr.bf16.mxu0 0
        %2445 = vmatmul.mubr.bf16.gmra.mrb[0].mxu0 %v2102
        %v2446 = vpop.f32.mrb[0].mxu0
        %v2447 = vadd.f32 %v1443, %v2446
        %v2448 = vpop.f32.mrb[0].mxu0
        %v2449 = vpop.f32.mrb[0].mxu0
        %v2450 = vadd.f32 %v1448, %v2449
        %v2451 = vpop.f32.mrb[0].mxu0
        %2452 = vmatprep.mubr.bf16.mxu0 0
        %2453 = vmatmul.mubr.bf16.gmra.mrb[0].mxu0 %v2103
        %v2454 = vpop.f32.mrb[0].mxu0
        %v2455 = vadd.f32 %v1453, %v2454
        %v2456 = vpop.f32.mrb[0].mxu0
        %v2457 = vpop.f32.mrb[0].mxu0
        %v2458 = vadd.f32 %v1458, %v2457
        %v2459 = vpop.f32.mrb[0].mxu0
        %2460 = vmatprep.mubr.bf16.mxu0 0
        %2461 = vmatmul.mubr.bf16.gmra.mrb[0].mxu0 %v2104
        %v2462 = vpop.f32.mrb[0].mxu0
        %v2463 = vadd.f32 %v1463, %v2462
        %v2464 = vpop.f32.mrb[0].mxu0
        %v2465 = vpop.f32.mrb[0].mxu0
        %v2466 = vadd.f32 %v1468, %v2465
        %v2467 = vpop.f32.mrb[0].mxu0
        %2468 = vmatprep.mubr.bf16.mxu0 0
        %2469 = vmatmul.mubr.bf16.gmra.mrb[0].mxu0 %v2105
        %v2470 = vpop.f32.mrb[0].mxu0
        %v2471 = vadd.f32 %v1473, %v2470
        %v2472 = vpop.f32.mrb[0].mxu0
        %v2473 = vpop.f32.mrb[0].mxu0
        %v2474 = vadd.f32 %v1478, %v2473
        %v2475 = vpop.f32.mrb[0].mxu0
        %2476 = vmatprep.mubr.bf16.mxu0 0
        %2477 = vmatmul.mubr.bf16.gmra.mrb[0].mxu0 %v2106
        %v2478 = vpop.f32.mrb[0].mxu0
        %v2479 = vadd.f32 %v1483, %v2478
        %v2480 = vpop.f32.mrb[0].mxu0
        %v2481 = vpop.f32.mrb[0].mxu0
        %v2482 = vadd.f32 %v1488, %v2481
        %v2483 = vpop.f32.mrb[0].mxu0
        %2484 = vmatprep.mubr.bf16.mxu0 0
        %2485 = vmatmul.mubr.bf16.gmra.mrb[0].mxu0 %v2107
        %v2486 = vpop.f32.mrb[0].mxu0
        %v2487 = vadd.f32 %v1493, %v2486
        %v2488 = vpop.f32.mrb[0].mxu0
        %v2489 = vpop.f32.mrb[0].mxu0
        %v2490 = vadd.f32 %v1498, %v2489
        %v2491 = vpop.f32.mrb[0].mxu0
        %2492 = vmatprep.mubr.bf16.mxu0 0
        %2493 = vmatmul.mubr.bf16.gmra.mrb[0].mxu0 %v2108
        %v2494 = vpop.f32.mrb[0].mxu0
        %v2495 = vadd.f32 %v1503, %v2494
        %v2496 = vpop.f32.mrb[0].mxu0
        %v2497 = vpop.f32.mrb[0].mxu0
        %v2498 = vadd.f32 %v1508, %v2497
        %v2499 = vpop.f32.mrb[0].mxu0
        %2500 = vmatprep.mubr.bf16.mxu0 0
        %2501 = vmatmul.mubr.bf16.gmra.mrb[0].mxu0 %v2109
        %v2502 = vpop.f32.mrb[0].mxu0
        %v2503 = vadd.f32 %v1513, %v2502
        %v2504 = vpop.f32.mrb[0].mxu0
        %v2505 = vpop.f32.mrb[0].mxu0
        %v2506 = vadd.f32 %v1518, %v2505
        %v2507 = vpop.f32.mrb[0].mxu0
        %2508 = vmatprep.mubr.bf16.mxu0 0
        %2509 = vmatmul.mubr.bf16.gmra.mrb[0].mxu0 %v2110
        %v2510 = vpop.f32.mrb[0].mxu0
        %v2511 = vadd.f32 %v1523, %v2510
        %v2512 = vpop.f32.mrb[0].mxu0
        %v2513 = vpop.f32.mrb[0].mxu0
        %v2514 = vadd.f32 %v1528, %v2513
        %v2515 = vpop.f32.mrb[0].mxu0
        %2516 = vmatprep.mubr.bf16.mxu0 0
        %2517 = vmatmul.mubr.bf16.gmra.mrb[0].mxu0 %v2111
        %v2518 = vpop.f32.mrb[0].mxu0
        %v2519 = vadd.f32 %v1533, %v2518
        %v2520 = vpop.f32.mrb[0].mxu0
        %v2521 = vpop.f32.mrb[0].mxu0
        %v2522 = vadd.f32 %v1538, %v2521
        %v2523 = vpop.f32.mrb[0].mxu0
        %2524 = vmatprep.mubr.bf16.mxu0 0
        %2525 = vmatmul.mubr.bf16.gmra.mrb[0].mxu0 %v2112
        %v2526 = vpop.f32.mrb[0].mxu0
        %v2527 = vadd.f32 %v1543, %v2526
        %v2528 = vpop.f32.mrb[0].mxu0
        %v2529 = vpop.f32.mrb[0].mxu0
        %v2530 = vadd.f32 %v1548, %v2529
        %v2531 = vpop.f32.mrb[0].mxu0
        %2532 = vmatprep.mubr.bf16.mxu0 0
        %2533 = vmatmul.mubr.bf16.gmra.mrb[0].mxu0 %v2113
        %v2534 = vpop.f32.mrb[0].mxu0
        %v2535 = vadd.f32 %v1553, %v2534
        %v2536 = vpop.f32.mrb[0].mxu0
        %v2537 = vpop.f32.mrb[0].mxu0
        %v2538 = vadd.f32 %v1558, %v2537
        %v2539 = vpop.f32.mrb[0].mxu0
        %2540 = vmatprep.mubr.bf16.mxu0 0
        %2541 = vmatmul.mubr.bf16.gmra.mrb[0].mxu0 %v2114
        %v2542 = vpop.f32.mrb[0].mxu0
        %v2543 = vadd.f32 %v1563, %v2542
        %v2544 = vpop.f32.mrb[0].mxu0
        %v2545 = vpop.f32.mrb[0].mxu0
        %v2546 = vadd.f32 %v1568, %v2545
        %v2547 = vpop.f32.mrb[0].mxu0
        %2548 = vmatprep.mubr.bf16.mxu0 0
        %2549 = vmatmul.mubr.bf16.gmra.mrb[0].mxu0 %v2115
        %v2550 = vpop.f32.mrb[0].mxu0
        %v2551 = vadd.f32 %v1573, %v2550
        %v2552 = vpop.f32.mrb[0].mxu0
        %v2553 = vpop.f32.mrb[0].mxu0
        %v2554 = vadd.f32 %v1578, %v2553
        %v2555 = vpop.f32.mrb[0].mxu0
        %2556 = vmatprep.mubr.bf16.mxu0 0
        %2557 = vmatmul.mubr.bf16.gmra.mrb[0].mxu0 %v2116
        %v2558 = vpop.f32.mrb[0].mxu0
        %v2559 = vadd.f32 %v1583, %v2558
        %v2560 = vpop.f32.mrb[0].mxu0
        %v2561 = vpop.f32.mrb[0].mxu0
        %v2562 = vadd.f32 %v1588, %v2561
        %v2563 = vpop.f32.mrb[0].mxu0
        %2564 = vmatprep.mubr.bf16.mxu0 0
        %2565 = vmatmul.mubr.bf16.gmra.mrb[0].mxu0 %v2117
        %v2566 = vpop.f32.mrb[0].mxu0
        %v2567 = vadd.f32 %v1593, %v2566
        %v2568 = vpop.f32.mrb[0].mxu0
        %v2569 = vpop.f32.mrb[0].mxu0
        %v2570 = vadd.f32 %v1598, %v2569
        %v2571 = vpop.f32.mrb[0].mxu0
        %2572 = vmatprep.mubr.bf16.mxu0 0
        %2573 = vmatmul.mubr.bf16.gmra.mrb[0].mxu0 %v2118
        %v2574 = vpop.f32.mrb[0].mxu0
        %v2575 = vadd.f32 %v1603, %v2574
        %v2576 = vpop.f32.mrb[0].mxu0
        %v2577 = vpop.f32.mrb[0].mxu0
        %v2578 = vadd.f32 %v1608, %v2577
        %v2579 = vpop.f32.mrb[0].mxu0
        %2580 = vmatprep.mubr.bf16.mxu0 0
        %2581 = vmatmul.mubr.bf16.gmra.mrb[0].mxu0 %v2119
        %v2582 = vpop.f32.mrb[0].mxu0
        %v2583 = vadd.f32 %v1613, %v2582
        %v2584 = vpop.f32.mrb[0].mxu0
        %v2585 = vpop.f32.mrb[0].mxu0
        %v2586 = vadd.f32 %v1618, %v2585
        %v2587 = vpop.f32.mrb[0].mxu0
        %2588 = vmatprep.mubr.bf16.mxu0 0
        %2589 = vmatmul.mubr.bf16.gmra.mrb[0].mxu0 %v2120
        %v2590 = vpop.f32.mrb[0].mxu0
        %v2591 = vadd.f32 %v1623, %v2590
        %v2592 = vpop.f32.mrb[0].mxu0
        %v2593 = vpop.f32.mrb[0].mxu0
        %v2594 = vadd.f32 %v1628, %v2593
        %v2595 = vpop.f32.mrb[0].mxu0
        %2596 = vmatprep.mubr.bf16.mxu0 0
        %2597 = vmatmul.mubr.bf16.gmra.mrb[0].mxu0 %v2121
        %v2598 = vpop.f32.mrb[0].mxu0
        %v2599 = vadd.f32 %v1633, %v2598
        %v2600 = vpop.f32.mrb[0].mxu0
        %v2601 = vpop.f32.mrb[0].mxu0
        %v2602 = vadd.f32 %v1638, %v2601
        %v2603 = vpop.f32.mrb[0].mxu0
        %2604 = vmatprep.mubr.bf16.mxu0 0
        %2605 = vmatmul.mubr.bf16.gmra.mrb[0].mxu0 %v2122
        %v2606 = vpop.f32.mrb[0].mxu0
        %v2607 = vadd.f32 %v1643, %v2606
        %v2608 = vpop.f32.mrb[0].mxu0
        %v2609 = vpop.f32.mrb[0].mxu0
        %v2610 = vadd.f32 %v1648, %v2609
        %v2611 = vpop.f32.mrb[0].mxu0
        %2612 = vmatprep.mubr.bf16.mxu0 0
        %2613 = vmatmul.mubr.bf16.gmra.mrb[0].mxu0 %v2123
        %v2614 = vpop.f32.mrb[0].mxu0
        %v2615 = vadd.f32 %v1653, %v2614
        %v2616 = vpop.f32.mrb[0].mxu0
        %v2617 = vpop.f32.mrb[0].mxu0
        %v2618 = vadd.f32 %v1658, %v2617
        %v2619 = vpop.f32.mrb[0].mxu0
        %2620 = vmatprep.mubr.bf16.mxu0 0
        %2621 = vmatmul.mubr.bf16.gmra.mrb[0].mxu0 %v2124
        %v2622 = vpop.f32.mrb[0].mxu0
        %v2623 = vadd.f32 %v1663, %v2622
        %v2624 = vpop.f32.mrb[0].mxu0
        %v2625 = vpop.f32.mrb[0].mxu0
        %v2626 = vadd.f32 %v1668, %v2625
        %v2627 = vpop.f32.mrb[0].mxu0
        %2628 = vmatprep.mubr.bf16.mxu0 0
        %2629 = vmatmul.mubr.bf16.gmra.mrb[0].mxu0 %v2125
        %v2630 = vpop.f32.mrb[0].mxu0
        %v2631 = vadd.f32 %v1673, %v2630
        %v2632 = vpop.f32.mrb[0].mxu0
        %v2633 = vpop.f32.mrb[0].mxu0
        %v2634 = vadd.f32 %v1678, %v2633
        %v2635 = vpop.f32.mrb[0].mxu0
        %2636 = vmatprep.mubr.bf16.mxu0 0
        %2637 = vmatmul.mubr.bf16.gmra.mrb[0].mxu0 %v2126
        %v2638 = vpop.f32.mrb[0].mxu0
        %v2639 = vadd.f32 %v1683, %v2638
        %v2640 = vpop.f32.mrb[0].mxu0
        %v2641 = vpop.f32.mrb[0].mxu0
        %v2642 = vadd.f32 %v1688, %v2641
        %v2643 = vpop.f32.mrb[0].mxu0
        %2644 = vmatprep.mubr.bf16.mxu0 0
        %2645 = vmatmul.mubr.bf16.gmra.mrb[0].mxu0 %v2127
        %v2646 = vpop.f32.mrb[0].mxu0
        %v2647 = vadd.f32 %v1693, %v2646
        %v2648 = vpop.f32.mrb[0].mxu0
        %v2649 = vpop.f32.mrb[0].mxu0
        %v2650 = vadd.f32 %v1698, %v2649
        %v2651 = vpop.f32.mrb[0].mxu0
        %2652 = vmatprep.mubr.bf16.mxu0 0
        %2653 = vmatmul.mubr.bf16.gmra.mrb[0].mxu0 %v2128
        %v2654 = vpop.f32.mrb[0].mxu0
        %v2655 = vadd.f32 %v1703, %v2654
        %v2656 = vpop.f32.mrb[0].mxu0
        %v2657 = vpop.f32.mrb[0].mxu0
        %v2658 = vadd.f32 %v1708, %v2657
        %v2659 = vpop.f32.mrb[0].mxu0
        %2660 = vmatprep.mubr.bf16.mxu0 0
        %2661 = vmatmul.mubr.bf16.gmra.mrb[0].mxu0 %v2129
        %v2662 = vpop.f32.mrb[0].mxu0
        %v2663 = vadd.f32 %v1713, %v2662
        %v2664 = vpop.f32.mrb[0].mxu0
        %v2665 = vpop.f32.mrb[0].mxu0
        %v2666 = vadd.f32 %v1718, %v2665
        %v2667 = vpop.f32.mrb[0].mxu0
        %2668 = vmatprep.mubr.bf16.mxu0 0
        %2669 = vmatmul.mubr.bf16.gmra.mrb[0].mxu0 %v2130
        %v2670 = vpop.f32.mrb[0].mxu0
        %v2671 = vadd.f32 %v1723, %v2670
        %v2672 = vpop.f32.mrb[0].mxu0
        %v2673 = vpop.f32.mrb[0].mxu0
        %v2674 = vadd.f32 %v1728, %v2673
        %v2675 = vpop.f32.mrb[0].mxu0
        %2676 = vmatprep.mubr.bf16.mxu0 0
        %2677 = vmatmul.mubr.bf16.gmra.mrb[0].mxu0 %v2131
        %v2678 = vpop.f32.mrb[0].mxu0
        %v2679 = vadd.f32 %v1733, %v2678
        %v2680 = vpop.f32.mrb[0].mxu0
        %v2681 = vpop.f32.mrb[0].mxu0
        %v2682 = vadd.f32 %v1738, %v2681
        %v2683 = vpop.f32.mrb[0].mxu0
        %2684 = vmatprep.mubr.bf16.mxu0 0
        %2685 = vmatmul.mubr.bf16.gmra.mrb[0].mxu0 %v2132
        %v2686 = vpop.f32.mrb[0].mxu0
        %v2687 = vadd.f32 %v1743, %v2686
        %v2688 = vpop.f32.mrb[0].mxu0
        %v2689 = vpop.f32.mrb[0].mxu0
        %v2690 = vadd.f32 %v1748, %v2689
        %v2691 = vpop.f32.mrb[0].mxu0
        %2692 = vmatprep.mubr.bf16.mxu0 0
        %2693 = vmatmul.mubr.bf16.gmra.mrb[0].mxu0 %v2133
        %v2694 = vpop.f32.mrb[0].mxu0
        %v2695 = vadd.f32 %v1753, %v2694
        %v2696 = vpop.f32.mrb[0].mxu0
        %v2697 = vpop.f32.mrb[0].mxu0
        %v2698 = vadd.f32 %v1758, %v2697
        %v2699 = vpop.f32.mrb[0].mxu0
        %2700 = vmatprep.mubr.bf16.mxu0 0
        %2701 = vmatmul.mubr.bf16.gmra.mrb[0].mxu0 %v2134
        %v2702 = vpop.f32.mrb[0].mxu0
        %v2703 = vadd.f32 %v1763, %v2702
        %v2704 = vpop.f32.mrb[0].mxu0
        %v2705 = vpop.f32.mrb[0].mxu0
        %v2706 = vadd.f32 %v1768, %v2705
        %v2707 = vpop.f32.mrb[0].mxu0
        %2708 = vmatprep.mubr.bf16.mxu0 0
        %2709 = vmatmul.mubr.bf16.gmra.mrb[0].mxu0 %v2135
        %v2710 = vpop.f32.mrb[0].mxu0
        %v2711 = vadd.f32 %v1773, %v2710
        %v2712 = vpop.f32.mrb[0].mxu0
        %v2713 = vpop.f32.mrb[0].mxu0
        %v2714 = vadd.f32 %v1778, %v2713
        %v2715 = vpop.f32.mrb[0].mxu0
        %2716 = vmatprep.mubr.bf16.mxu0 0
        %2717 = vmatmul.mubr.bf16.gmra.mrb[0].mxu0 %v2136
        %v2718 = vpop.f32.mrb[0].mxu0
        %v2719 = vadd.f32 %v1783, %v2718
        %v2720 = vpop.f32.mrb[0].mxu0
        %v2721 = vpop.f32.mrb[0].mxu0
        %v2722 = vadd.f32 %v1788, %v2721
        %v2723 = vpop.f32.mrb[0].mxu0
        %2724 = vmatprep.mubr.bf16.mxu0 0
        %2725 = vmatmul.mubr.bf16.gmra.mrb[0].mxu0 %v2137
        %v2726 = vpop.f32.mrb[0].mxu0
        %v2727 = vadd.f32 %v1793, %v2726
        %v2728 = vpop.f32.mrb[0].mxu0
        %v2729 = vpop.f32.mrb[0].mxu0
        %v2730 = vadd.f32 %v1798, %v2729
        %v2731 = vpop.f32.mrb[0].mxu0
        %2732 = vmatprep.mubr.bf16.mxu0 0
        %2733 = vmatmul.mubr.bf16.gmra.mrb[0].mxu0 %v2138
        %v2734 = vpop.f32.mrb[0].mxu0
        %v2735 = vadd.f32 %v1803, %v2734
        %v2736 = vpop.f32.mrb[0].mxu0
        %v2737 = vpop.f32.mrb[0].mxu0
        %v2738 = vadd.f32 %v1808, %v2737
        %v2739 = vpop.f32.mrb[0].mxu0
        %2740 = vmatprep.mubr.bf16.mxu0 0
        %2741 = vmatmul.mubr.bf16.gmra.mrb[0].mxu0 %v2139
        %v2742 = vpop.f32.mrb[0].mxu0
        %v2743 = vadd.f32 %v1813, %v2742
        %v2744 = vpop.f32.mrb[0].mxu0
        %v2745 = vpop.f32.mrb[0].mxu0
        %v2746 = vadd.f32 %v1818, %v2745
        %v2747 = vpop.f32.mrb[0].mxu0
        %2748 = vdwg.mxu0
        %v2749 = vmax.f32 %v2239, 0.0
        %v2750 = vmax.f32 %v2242, 0.0
        %v2751 = vmax.f32 %v2247, 0.0
        %v2752 = vmax.f32 %v2250, 0.0
        %v2753 = vmax.f32 %v2255, 0.0
        %v2754 = vmax.f32 %v2258, 0.0
        %v2755 = vmax.f32 %v2263, 0.0
        %v2756 = vmax.f32 %v2266, 0.0
        %v2757 = vmax.f32 %v2271, 0.0
        %v2758 = vmax.f32 %v2274, 0.0
        %v2759 = vmax.f32 %v2279, 0.0
        %v2760 = vmax.f32 %v2282, 0.0
        %v2761 = vmax.f32 %v2287, 0.0
        %v2762 = vmax.f32 %v2290, 0.0
        %v2763 = vmax.f32 %v2295, 0.0
        %v2764 = vmax.f32 %v2298, 0.0
        %v2765 = vmax.f32 %v2303, 0.0
        %v2766 = vmax.f32 %v2306, 0.0
        %v2767 = vmax.f32 %v2311, 0.0
        %v2768 = vmax.f32 %v2314, 0.0
        %v2769 = vmax.f32 %v2319, 0.0
        %v2770 = vmax.f32 %v2322, 0.0
        %v2771 = vmax.f32 %v2327, 0.0
        %v2772 = vmax.f32 %v2330, 0.0
        %v2773 = vmax.f32 %v2335, 0.0
        %v2774 = vmax.f32 %v2338, 0.0
        %v2775 = vmax.f32 %v2343, 0.0
        %v2776 = vmax.f32 %v2346, 0.0
        %v2777 = vmax.f32 %v2351, 0.0
        %v2778 = vmax.f32 %v2354, 0.0
        %v2779 = vmax.f32 %v2359, 0.0
        %v2780 = vmax.f32 %v2362, 0.0
        %v2781 = vmax.f32 %v2367, 0.0
        %v2782 = vmax.f32 %v2370, 0.0
        %v2783 = vmax.f32 %v2375, 0.0
        %v2784 = vmax.f32 %v2378, 0.0
        %v2785 = vmax.f32 %v2383, 0.0
        %v2786 = vmax.f32 %v2386, 0.0
        %v2787 = vmax.f32 %v2391, 0.0
        %v2788 = vmax.f32 %v2394, 0.0
        %v2789 = vmax.f32 %v2399, 0.0
        %v2790 = vmax.f32 %v2402, 0.0
        %v2791 = vmax.f32 %v2407, 0.0
        %v2792 = vmax.f32 %v2410, 0.0
        %v2793 = vmax.f32 %v2415, 0.0
        %v2794 = vmax.f32 %v2418, 0.0
        %v2795 = vmax.f32 %v2423, 0.0
        %v2796 = vmax.f32 %v2426, 0.0
        %v2797 = vmax.f32 %v2431, 0.0
        %v2798 = vmax.f32 %v2434, 0.0
        %v2799 = vmax.f32 %v2439, 0.0
        %v2800 = vmax.f32 %v2442, 0.0
        %v2801 = vmax.f32 %v2447, 0.0
        %v2802 = vmax.f32 %v2450, 0.0
        %v2803 = vmax.f32 %v2455, 0.0
        %v2804 = vmax.f32 %v2458, 0.0
        %v2805 = vmax.f32 %v2463, 0.0
        %v2806 = vmax.f32 %v2466, 0.0
        %v2807 = vmax.f32 %v2471, 0.0
        %v2808 = vmax.f32 %v2474, 0.0
        %v2809 = vmax.f32 %v2479, 0.0
        %v2810 = vmax.f32 %v2482, 0.0
        %v2811 = vmax.f32 %v2487, 0.0
        %v2812 = vmax.f32 %v2490, 0.0
        %v2813 = vmax.f32 %v2495, 0.0
        %v2814 = vmax.f32 %v2498, 0.0
        %v2815 = vmax.f32 %v2503, 0.0
        %v2816 = vmax.f32 %v2506, 0.0
        %v2817 = vmax.f32 %v2511, 0.0
        %v2818 = vmax.f32 %v2514, 0.0
        %v2819 = vmax.f32 %v2519, 0.0
        %v2820 = vmax.f32 %v2522, 0.0
        %v2821 = vmax.f32 %v2527, 0.0
        %v2822 = vmax.f32 %v2530, 0.0
        %v2823 = vmax.f32 %v2535, 0.0
        %v2824 = vmax.f32 %v2538, 0.0
        %v2825 = vmax.f32 %v2543, 0.0
        %v2826 = vmax.f32 %v2546, 0.0
        %v2827 = vmax.f32 %v2551, 0.0
        %v2828 = vmax.f32 %v2554, 0.0
        %v2829 = vmax.f32 %v2559, 0.0
        %v2830 = vmax.f32 %v2562, 0.0
        %v2831 = vmax.f32 %v2567, 0.0
        %v2832 = vmax.f32 %v2570, 0.0
        %v2833 = vmax.f32 %v2575, 0.0
        %v2834 = vmax.f32 %v2578, 0.0
        %v2835 = vmax.f32 %v2583, 0.0
        %v2836 = vmax.f32 %v2586, 0.0
        %v2837 = vmax.f32 %v2591, 0.0
        %v2838 = vmax.f32 %v2594, 0.0
        %v2839 = vmax.f32 %v2599, 0.0
        %v2840 = vmax.f32 %v2602, 0.0
        %v2841 = vmax.f32 %v2607, 0.0
        %v2842 = vmax.f32 %v2610, 0.0
        %v2843 = vmax.f32 %v2615, 0.0
        %v2844 = vmax.f32 %v2618, 0.0
        %v2845 = vmax.f32 %v2623, 0.0
        %v2846 = vmax.f32 %v2626, 0.0
        %v2847 = vmax.f32 %v2631, 0.0
        %v2848 = vmax.f32 %v2634, 0.0
        %v2849 = vmax.f32 %v2639, 0.0
        %v2850 = vmax.f32 %v2642, 0.0
        %v2851 = vmax.f32 %v2647, 0.0
        %v2852 = vmax.f32 %v2650, 0.0
        %v2853 = vmax.f32 %v2655, 0.0
        %v2854 = vmax.f32 %v2658, 0.0
        %v2855 = vmax.f32 %v2663, 0.0
        %v2856 = vmax.f32 %v2666, 0.0
        %v2857 = vmax.f32 %v2671, 0.0
        %v2858 = vmax.f32 %v2674, 0.0
        %v2859 = vmax.f32 %v2679, 0.0
        %v2860 = vmax.f32 %v2682, 0.0
        %v2861 = vmax.f32 %v2687, 0.0
        %v2862 = vmax.f32 %v2690, 0.0
        %v2863 = vmax.f32 %v2695, 0.0
        %v2864 = vmax.f32 %v2698, 0.0
        %v2865 = vmax.f32 %v2703, 0.0
        %v2866 = vmax.f32 %v2706, 0.0
        %v2867 = vmax.f32 %v2711, 0.0
        %v2868 = vmax.f32 %v2714, 0.0
        %v2869 = vmax.f32 %v2719, 0.0
        %v2870 = vmax.f32 %v2722, 0.0
        %v2871 = vmax.f32 %v2727, 0.0
        %v2872 = vmax.f32 %v2730, 0.0
        %v2873 = vmax.f32 %v2735, 0.0
        %v2874 = vmax.f32 %v2738, 0.0
        %v2875 = vmax.f32 %v2743, 0.0
        %v2876 = vmax.f32 %v2746, 0.0
        %v2877 = vld [vmem:[%s316] sm:$0xff]
        %v2878 = vld [vmem:[%s316 + $0x8] sm:$0xff]
        %v2879 = vld [vmem:[%s316 + $0x10] sm:$0xff]
        %v2880 = vld [vmem:[%s316 + $0x18] sm:$0xff]
        %v2881 = vld [vmem:[%s316 + $0x20] sm:$0xff]
        %v2882 = vld [vmem:[%s316 + $0x28] sm:$0xff]
        %v2883 = vld [vmem:[%s316 + $0x30] sm:$0xff]
        %v2884 = vld [vmem:[%s316 + $0x38] sm:$0xff]
        %v2885 = vld [vmem:[%s316 + $0x40] sm:$0xff]
        %v2886 = vld [vmem:[%s316 + $0x48] sm:$0xff]
        %v2887 = vld [vmem:[%s316 + $0x50] sm:$0xff]
        %v2888 = vld [vmem:[%s316 + $0x58] sm:$0xff]
        %v2889 = vld [vmem:[%s316 + $0x60] sm:$0xff]
        %v2890 = vld [vmem:[%s316 + $0x68] sm:$0xff]
        %v2891 = vld [vmem:[%s316 + $0x70] sm:$0xff]
        %v2892 = vld [vmem:[%s316 + $0x78] sm:$0xff]
        %v2893 = vld [vmem:[%s316 + $0x80] sm:$0xff]
        %v2894 = vld [vmem:[%s316 + $0x88] sm:$0xff]
        %v2895 = vld [vmem:[%s316 + $0x90] sm:$0xff]
        %v2896 = vld [vmem:[%s316 + $0x98] sm:$0xff]
        %v2897 = vld [vmem:[%s316 + $0xa0] sm:$0xff]
        %v2898 = vld [vmem:[%s316 + $0xa8] sm:$0xff]
        %v2899 = vld [vmem:[%s316 + $0xb0] sm:$0xff]
        %v2900 = vld [vmem:[%s316 + $0xb8] sm:$0xff]
        %v2901 = vld [vmem:[%s316 + $0xc0] sm:$0xff]
        %v2902 = vld [vmem:[%s316 + $0xc8] sm:$0xff]
        %v2903 = vld [vmem:[%s316 + $0xd0] sm:$0xff]
        %v2904 = vld [vmem:[%s316 + $0xd8] sm:$0xff]
        %v2905 = vld [vmem:[%s316 + $0xe0] sm:$0xff]
        %v2906 = vld [vmem:[%s316 + $0xe8] sm:$0xff]
        %v2907 = vld [vmem:[%s316 + $0xf0] sm:$0xff]
        %v2908 = vld [vmem:[%s316 + $0xf8] sm:$0xff]
        %v2909 = vld [vmem:[%s316 + $0x100] sm:$0xff]
        %v2910 = vld [vmem:[%s316 + $0x108] sm:$0xff]
        %v2911 = vld [vmem:[%s316 + $0x110] sm:$0xff]
        %v2912 = vld [vmem:[%s316 + $0x118] sm:$0xff]
        %v2913 = vld [vmem:[%s316 + $0x120] sm:$0xff]
        %v2914 = vld [vmem:[%s316 + $0x128] sm:$0xff]
        %v2915 = vld [vmem:[%s316 + $0x130] sm:$0xff]
        %v2916 = vld [vmem:[%s316 + $0x138] sm:$0xff]
        %v2917 = vld [vmem:[%s316 + $0x140] sm:$0xff]
        %v2918 = vld [vmem:[%s316 + $0x148] sm:$0xff]
        %v2919 = vld [vmem:[%s316 + $0x150] sm:$0xff]
        %v2920 = vld [vmem:[%s316 + $0x158] sm:$0xff]
        %v2921 = vld [vmem:[%s316 + $0x160] sm:$0xff]
        %v2922 = vld [vmem:[%s316 + $0x168] sm:$0xff]
        %v2923 = vld [vmem:[%s316 + $0x170] sm:$0xff]
        %v2924 = vld [vmem:[%s316 + $0x178] sm:$0xff]
        %v2925 = vld [vmem:[%s316 + $0x180] sm:$0xff]
        %v2926 = vld [vmem:[%s316 + $0x188] sm:$0xff]
        %v2927 = vld [vmem:[%s316 + $0x190] sm:$0xff]
        %v2928 = vld [vmem:[%s316 + $0x198] sm:$0xff]
        %v2929 = vld [vmem:[%s316 + $0x1a0] sm:$0xff]
        %v2930 = vld [vmem:[%s316 + $0x1a8] sm:$0xff]
        %v2931 = vld [vmem:[%s316 + $0x1b0] sm:$0xff]
        %v2932 = vld [vmem:[%s316 + $0x1b8] sm:$0xff]
        %v2933 = vld [vmem:[%s316 + $0x1c0] sm:$0xff]
        %v2934 = vld [vmem:[%s316 + $0x1c8] sm:$0xff]
        %v2935 = vld [vmem:[%s316 + $0x1d0] sm:$0xff]
        %v2936 = vld [vmem:[%s316 + $0x1d8] sm:$0xff]
        %v2937 = vld [vmem:[%s316 + $0x1e0] sm:$0xff]
        %v2938 = vld [vmem:[%s316 + $0x1e8] sm:$0xff]
        %v2939 = vld [vmem:[%s316 + $0x1f0] sm:$0xff]
        %v2940 = vld [vmem:[%s316 + $0x1f8] sm:$0xff]
        %v2941 = vld [vmem:[%s316 + $0x200] sm:$0xff]
        %v2942 = vld [vmem:[%s316 + $0x208] sm:$0xff]
        %v2943 = vld [vmem:[%s316 + $0x210] sm:$0xff]
        %v2944 = vld [vmem:[%s316 + $0x218] sm:$0xff]
        %v2945 = vld [vmem:[%s316 + $0x220] sm:$0xff]
        %v2946 = vld [vmem:[%s316 + $0x228] sm:$0xff]
        %v2947 = vld [vmem:[%s316 + $0x230] sm:$0xff]
        %v2948 = vld [vmem:[%s316 + $0x238] sm:$0xff]
        %v2949 = vld [vmem:[%s316 + $0x240] sm:$0xff]
        %v2950 = vld [vmem:[%s316 + $0x248] sm:$0xff]
        %v2951 = vld [vmem:[%s316 + $0x250] sm:$0xff]
        %v2952 = vld [vmem:[%s316 + $0x258] sm:$0xff]
        %v2953 = vld [vmem:[%s316 + $0x260] sm:$0xff]
        %v2954 = vld [vmem:[%s316 + $0x268] sm:$0xff]
        %v2955 = vld [vmem:[%s316 + $0x270] sm:$0xff]
        %v2956 = vld [vmem:[%s316 + $0x278] sm:$0xff]
        %v2957 = vld [vmem:[%s316 + $0x280] sm:$0xff]
        %v2958 = vld [vmem:[%s316 + $0x288] sm:$0xff]
        %v2959 = vld [vmem:[%s316 + $0x290] sm:$0xff]
        %v2960 = vld [vmem:[%s316 + $0x298] sm:$0xff]
        %v2961 = vld [vmem:[%s316 + $0x2a0] sm:$0xff]
        %v2962 = vld [vmem:[%s316 + $0x2a8] sm:$0xff]
        %v2963 = vld [vmem:[%s316 + $0x2b0] sm:$0xff]
        %v2964 = vld [vmem:[%s316 + $0x2b8] sm:$0xff]
        %v2965 = vld [vmem:[%s316 + $0x2c0] sm:$0xff]
        %v2966 = vld [vmem:[%s316 + $0x2c8] sm:$0xff]
        %v2967 = vld [vmem:[%s316 + $0x2d0] sm:$0xff]
        %v2968 = vld [vmem:[%s316 + $0x2d8] sm:$0xff]
        %v2969 = vld [vmem:[%s316 + $0x2e0] sm:$0xff]
        %v2970 = vld [vmem:[%s316 + $0x2e8] sm:$0xff]
        %v2971 = vld [vmem:[%s316 + $0x2f0] sm:$0xff]
        %v2972 = vld [vmem:[%s316 + $0x2f8] sm:$0xff]
        %v2973 = vld [vmem:[%s316 + $0x300] sm:$0xff]
        %v2974 = vld [vmem:[%s316 + $0x308] sm:$0xff]
        %v2975 = vld [vmem:[%s316 + $0x310] sm:$0xff]
        %v2976 = vld [vmem:[%s316 + $0x318] sm:$0xff]
        %v2977 = vld [vmem:[%s316 + $0x320] sm:$0xff]
        %v2978 = vld [vmem:[%s316 + $0x328] sm:$0xff]
        %v2979 = vld [vmem:[%s316 + $0x330] sm:$0xff]
        %v2980 = vld [vmem:[%s316 + $0x338] sm:$0xff]
        %v2981 = vld [vmem:[%s316 + $0x340] sm:$0xff]
        %v2982 = vld [vmem:[%s316 + $0x348] sm:$0xff]
        %v2983 = vld [vmem:[%s316 + $0x350] sm:$0xff]
        %v2984 = vld [vmem:[%s316 + $0x358] sm:$0xff]
        %v2985 = vld [vmem:[%s316 + $0x360] sm:$0xff]
        %v2986 = vld [vmem:[%s316 + $0x368] sm:$0xff]
        %v2987 = vld [vmem:[%s316 + $0x370] sm:$0xff]
        %v2988 = vld [vmem:[%s316 + $0x378] sm:$0xff]
        %v2989 = vld [vmem:[%s316 + $0x380] sm:$0xff]
        %v2990 = vld [vmem:[%s316 + $0x388] sm:$0xff]
        %v2991 = vld [vmem:[%s316 + $0x390] sm:$0xff]
        %v2992 = vld [vmem:[%s316 + $0x398] sm:$0xff]
        %v2993 = vld [vmem:[%s316 + $0x3a0] sm:$0xff]
        %v2994 = vld [vmem:[%s316 + $0x3a8] sm:$0xff]
        %v2995 = vld [vmem:[%s316 + $0x3b0] sm:$0xff]
        %v2996 = vld [vmem:[%s316 + $0x3b8] sm:$0xff]
        %v2997 = vld [vmem:[%s316 + $0x3c0] sm:$0xff]
        %v2998 = vld [vmem:[%s316 + $0x3c8] sm:$0xff]
        %v2999 = vld [vmem:[%s316 + $0x3d0] sm:$0xff]
        %v3000 = vld [vmem:[%s316 + $0x3d8] sm:$0xff]
        %v3001 = vld [vmem:[%s316 + $0x3e0] sm:$0xff]
        %v3002 = vld [vmem:[%s316 + $0x3e8] sm:$0xff]
        %v3003 = vld [vmem:[%s316 + $0x3f0] sm:$0xff]
        %v3004 = vld [vmem:[%s316 + $0x3f8] sm:$0xff]
        %3005 = vmax.xlane.f32.xlu0 %v2749
        %v3006 = vpop.xlane.xlu0 %3005
        %3007 = vmax.xlane.f32.xlu0 %v2750
        %v3008 = vpop.xlane.xlu0 %3007
        %3009 = vmax.xlane.f32.xlu0 %v2751
        %v3010 = vpop.xlane.xlu0 %3009
        %3011 = vmax.xlane.f32.xlu0 %v2752
        %v3012 = vpop.xlane.xlu0 %3011
        %3013 = vmax.xlane.f32.xlu0 %v2753
        %v3014 = vpop.xlane.xlu0 %3013
        %3015 = vmax.xlane.f32.xlu0 %v2754
        %v3016 = vpop.xlane.xlu0 %3015
        %3017 = vmax.xlane.f32.xlu0 %v2755
        %v3018 = vpop.xlane.xlu0 %3017
        %3019 = vmax.xlane.f32.xlu0 %v2756
        %v3020 = vpop.xlane.xlu0 %3019
        %3021 = vmax.xlane.f32.xlu0 %v2757
        %v3022 = vpop.xlane.xlu0 %3021
        %3023 = vmax.xlane.f32.xlu0 %v2758
        %v3024 = vpop.xlane.xlu0 %3023
        %3025 = vmax.xlane.f32.xlu0 %v2759
        %v3026 = vpop.xlane.xlu0 %3025
        %3027 = vmax.xlane.f32.xlu0 %v2760
        %v3028 = vpop.xlane.xlu0 %3027
        %3029 = vmax.xlane.f32.xlu0 %v2761
        %v3030 = vpop.xlane.xlu0 %3029
        %3031 = vmax.xlane.f32.xlu0 %v2762
        %v3032 = vpop.xlane.xlu0 %3031
        %3033 = vmax.xlane.f32.xlu0 %v2763
        %v3034 = vpop.xlane.xlu0 %3033
        %3035 = vmax.xlane.f32.xlu0 %v2764
        %v3036 = vpop.xlane.xlu0 %3035
        %3037 = vmax.xlane.f32.xlu0 %v2765
        %v3038 = vpop.xlane.xlu0 %3037
        %3039 = vmax.xlane.f32.xlu0 %v2766
        %v3040 = vpop.xlane.xlu0 %3039
        %3041 = vmax.xlane.f32.xlu0 %v2767
        %v3042 = vpop.xlane.xlu0 %3041
        %3043 = vmax.xlane.f32.xlu0 %v2768
        %v3044 = vpop.xlane.xlu0 %3043
        %3045 = vmax.xlane.f32.xlu0 %v2769
        %v3046 = vpop.xlane.xlu0 %3045
        %3047 = vmax.xlane.f32.xlu0 %v2770
        %v3048 = vpop.xlane.xlu0 %3047
        %3049 = vmax.xlane.f32.xlu0 %v2771
        %v3050 = vpop.xlane.xlu0 %3049
        %3051 = vmax.xlane.f32.xlu0 %v2772
        %v3052 = vpop.xlane.xlu0 %3051
        %3053 = vmax.xlane.f32.xlu0 %v2773
        %v3054 = vpop.xlane.xlu0 %3053
        %3055 = vmax.xlane.f32.xlu0 %v2774
        %v3056 = vpop.xlane.xlu0 %3055
        %3057 = vmax.xlane.f32.xlu0 %v2775
        %v3058 = vpop.xlane.xlu0 %3057
        %3059 = vmax.xlane.f32.xlu0 %v2776
        %v3060 = vpop.xlane.xlu0 %3059
        %3061 = vmax.xlane.f32.xlu0 %v2777
        %v3062 = vpop.xlane.xlu0 %3061
        %3063 = vmax.xlane.f32.xlu0 %v2778
        %v3064 = vpop.xlane.xlu0 %3063
        %3065 = vmax.xlane.f32.xlu0 %v2779
        %v3066 = vpop.xlane.xlu0 %3065
        %3067 = vmax.xlane.f32.xlu0 %v2780
        %v3068 = vpop.xlane.xlu0 %3067
        %3069 = vmax.xlane.f32.xlu0 %v2781
        %v3070 = vpop.xlane.xlu0 %3069
        %3071 = vmax.xlane.f32.xlu0 %v2782
        %v3072 = vpop.xlane.xlu0 %3071
        %3073 = vmax.xlane.f32.xlu0 %v2783
        %v3074 = vpop.xlane.xlu0 %3073
        %3075 = vmax.xlane.f32.xlu0 %v2784
        %v3076 = vpop.xlane.xlu0 %3075
        %3077 = vmax.xlane.f32.xlu0 %v2785
        %v3078 = vpop.xlane.xlu0 %3077
        %3079 = vmax.xlane.f32.xlu0 %v2786
        %v3080 = vpop.xlane.xlu0 %3079
        %3081 = vmax.xlane.f32.xlu0 %v2787
        %v3082 = vpop.xlane.xlu0 %3081
        %3083 = vmax.xlane.f32.xlu0 %v2788
        %v3084 = vpop.xlane.xlu0 %3083
        %3085 = vmax.xlane.f32.xlu0 %v2789
        %v3086 = vpop.xlane.xlu0 %3085
        %3087 = vmax.xlane.f32.xlu0 %v2790
        %v3088 = vpop.xlane.xlu0 %3087
        %3089 = vmax.xlane.f32.xlu0 %v2791
        %v3090 = vpop.xlane.xlu0 %3089
        %3091 = vmax.xlane.f32.xlu0 %v2792
        %v3092 = vpop.xlane.xlu0 %3091
        %3093 = vmax.xlane.f32.xlu0 %v2793
        %v3094 = vpop.xlane.xlu0 %3093
        %3095 = vmax.xlane.f32.xlu0 %v2794
        %v3096 = vpop.xlane.xlu0 %3095
        %3097 = vmax.xlane.f32.xlu0 %v2795
        %v3098 = vpop.xlane.xlu0 %3097
        %3099 = vmax.xlane.f32.xlu0 %v2796
        %v3100 = vpop.xlane.xlu0 %3099
        %3101 = vmax.xlane.f32.xlu0 %v2797
        %v3102 = vpop.xlane.xlu0 %3101
        %3103 = vmax.xlane.f32.xlu0 %v2798
        %v3104 = vpop.xlane.xlu0 %3103
        %3105 = vmax.xlane.f32.xlu0 %v2799
        %v3106 = vpop.xlane.xlu0 %3105
        %3107 = vmax.xlane.f32.xlu0 %v2800
        %v3108 = vpop.xlane.xlu0 %3107
        %3109 = vmax.xlane.f32.xlu0 %v2801
        %v3110 = vpop.xlane.xlu0 %3109
        %3111 = vmax.xlane.f32.xlu0 %v2802
        %v3112 = vpop.xlane.xlu0 %3111
        %3113 = vmax.xlane.f32.xlu0 %v2803
        %v3114 = vpop.xlane.xlu0 %3113
        %3115 = vmax.xlane.f32.xlu0 %v2804
        %v3116 = vpop.xlane.xlu0 %3115
        %3117 = vmax.xlane.f32.xlu0 %v2805
        %v3118 = vpop.xlane.xlu0 %3117
        %3119 = vmax.xlane.f32.xlu0 %v2806
        %v3120 = vpop.xlane.xlu0 %3119
        %3121 = vmax.xlane.f32.xlu0 %v2807
        %v3122 = vpop.xlane.xlu0 %3121
        %3123 = vmax.xlane.f32.xlu0 %v2808
        %v3124 = vpop.xlane.xlu0 %3123
        %3125 = vmax.xlane.f32.xlu0 %v2809
        %v3126 = vpop.xlane.xlu0 %3125
        %3127 = vmax.xlane.f32.xlu0 %v2810
        %v3128 = vpop.xlane.xlu0 %3127
        %3129 = vmax.xlane.f32.xlu0 %v2811
        %v3130 = vpop.xlane.xlu0 %3129
        %3131 = vmax.xlane.f32.xlu0 %v2812
        %v3132 = vpop.xlane.xlu0 %3131
        %3133 = vmax.xlane.f32.xlu0 %v2813
        %v3134 = vpop.xlane.xlu0 %3133
        %3135 = vmax.xlane.f32.xlu0 %v2814
        %v3136 = vpop.xlane.xlu0 %3135
        %3137 = vmax.xlane.f32.xlu0 %v2815
        %v3138 = vpop.xlane.xlu0 %3137
        %3139 = vmax.xlane.f32.xlu0 %v2816
        %v3140 = vpop.xlane.xlu0 %3139
        %3141 = vmax.xlane.f32.xlu0 %v2817
        %v3142 = vpop.xlane.xlu0 %3141
        %3143 = vmax.xlane.f32.xlu0 %v2818
        %v3144 = vpop.xlane.xlu0 %3143
        %3145 = vmax.xlane.f32.xlu0 %v2819
        %v3146 = vpop.xlane.xlu0 %3145
        %3147 = vmax.xlane.f32.xlu0 %v2820
        %v3148 = vpop.xlane.xlu0 %3147
        %3149 = vmax.xlane.f32.xlu0 %v2821
        %v3150 = vpop.xlane.xlu0 %3149
        %3151 = vmax.xlane.f32.xlu0 %v2822
        %v3152 = vpop.xlane.xlu0 %3151
        %3153 = vmax.xlane.f32.xlu0 %v2823
        %v3154 = vpop.xlane.xlu0 %3153
        %3155 = vmax.xlane.f32.xlu0 %v2824
        %v3156 = vpop.xlane.xlu0 %3155
        %3157 = vmax.xlane.f32.xlu0 %v2825
        %v3158 = vpop.xlane.xlu0 %3157
        %3159 = vmax.xlane.f32.xlu0 %v2826
        %v3160 = vpop.xlane.xlu0 %3159
        %3161 = vmax.xlane.f32.xlu0 %v2827
        %v3162 = vpop.xlane.xlu0 %3161
        %3163 = vmax.xlane.f32.xlu0 %v2828
        %v3164 = vpop.xlane.xlu0 %3163
        %3165 = vmax.xlane.f32.xlu0 %v2829
        %v3166 = vpop.xlane.xlu0 %3165
        %3167 = vmax.xlane.f32.xlu0 %v2830
        %v3168 = vpop.xlane.xlu0 %3167
        %3169 = vmax.xlane.f32.xlu0 %v2831
        %v3170 = vpop.xlane.xlu0 %3169
        %3171 = vmax.xlane.f32.xlu0 %v2832
        %v3172 = vpop.xlane.xlu0 %3171
        %3173 = vmax.xlane.f32.xlu0 %v2833
        %v3174 = vpop.xlane.xlu0 %3173
        %3175 = vmax.xlane.f32.xlu0 %v2834
        %v3176 = vpop.xlane.xlu0 %3175
        %3177 = vmax.xlane.f32.xlu0 %v2835
        %v3178 = vpop.xlane.xlu0 %3177
        %3179 = vmax.xlane.f32.xlu0 %v2836
        %v3180 = vpop.xlane.xlu0 %3179
        %3181 = vmax.xlane.f32.xlu0 %v2837
        %v3182 = vpop.xlane.xlu0 %3181
        %3183 = vmax.xlane.f32.xlu0 %v2838
        %v3184 = vpop.xlane.xlu0 %3183
        %3185 = vmax.xlane.f32.xlu0 %v2839
        %v3186 = vpop.xlane.xlu0 %3185
        %3187 = vmax.xlane.f32.xlu0 %v2840
        %v3188 = vpop.xlane.xlu0 %3187
        %3189 = vmax.xlane.f32.xlu0 %v2841
        %v3190 = vpop.xlane.xlu0 %3189
        %3191 = vmax.xlane.f32.xlu0 %v2842
        %v3192 = vpop.xlane.xlu0 %3191
        %3193 = vmax.xlane.f32.xlu0 %v2843
        %v3194 = vpop.xlane.xlu0 %3193
        %3195 = vmax.xlane.f32.xlu0 %v2844
        %v3196 = vpop.xlane.xlu0 %3195
        %3197 = vmax.xlane.f32.xlu0 %v2845
        %v3198 = vpop.xlane.xlu0 %3197
        %3199 = vmax.xlane.f32.xlu0 %v2846
        %v3200 = vpop.xlane.xlu0 %3199
        %3201 = vmax.xlane.f32.xlu0 %v2847
        %v3202 = vpop.xlane.xlu0 %3201
        %3203 = vmax.xlane.f32.xlu0 %v2848
        %v3204 = vpop.xlane.xlu0 %3203
        %3205 = vmax.xlane.f32.xlu0 %v2849
        %v3206 = vpop.xlane.xlu0 %3205
        %3207 = vmax.xlane.f32.xlu0 %v2850
        %v3208 = vpop.xlane.xlu0 %3207
        %3209 = vmax.xlane.f32.xlu0 %v2851
        %v3210 = vpop.xlane.xlu0 %3209
        %3211 = vmax.xlane.f32.xlu0 %v2852
        %v3212 = vpop.xlane.xlu0 %3211
        %3213 = vmax.xlane.f32.xlu0 %v2853
        %v3214 = vpop.xlane.xlu0 %3213
        %3215 = vmax.xlane.f32.xlu0 %v2854
        %v3216 = vpop.xlane.xlu0 %3215
        %3217 = vmax.xlane.f32.xlu0 %v2855
        %v3218 = vpop.xlane.xlu0 %3217
        %3219 = vmax.xlane.f32.xlu0 %v2856
        %v3220 = vpop.xlane.xlu0 %3219
        %3221 = vmax.xlane.f32.xlu0 %v2857
        %v3222 = vpop.xlane.xlu0 %3221
        %3223 = vmax.xlane.f32.xlu0 %v2858
        %v3224 = vpop.xlane.xlu0 %3223
        %3225 = vmax.xlane.f32.xlu0 %v2859
        %v3226 = vpop.xlane.xlu0 %3225
        %3227 = vmax.xlane.f32.xlu0 %v2860
        %v3228 = vpop.xlane.xlu0 %3227
        %3229 = vmax.xlane.f32.xlu0 %v2861
        %v3230 = vpop.xlane.xlu0 %3229
        %3231 = vmax.xlane.f32.xlu0 %v2862
        %v3232 = vpop.xlane.xlu0 %3231
        %3233 = vmax.xlane.f32.xlu0 %v2863
        %v3234 = vpop.xlane.xlu0 %3233
        %3235 = vmax.xlane.f32.xlu0 %v2864
        %v3236 = vpop.xlane.xlu0 %3235
        %3237 = vmax.xlane.f32.xlu0 %v2865
        %v3238 = vpop.xlane.xlu0 %3237
        %3239 = vmax.xlane.f32.xlu0 %v2866
        %v3240 = vpop.xlane.xlu0 %3239
        %3241 = vmax.xlane.f32.xlu0 %v2867
        %v3242 = vpop.xlane.xlu0 %3241
        %3243 = vmax.xlane.f32.xlu0 %v2868
        %v3244 = vpop.xlane.xlu0 %3243
        %3245 = vmax.xlane.f32.xlu0 %v2869
        %v3246 = vpop.xlane.xlu0 %3245
        %3247 = vmax.xlane.f32.xlu0 %v2870
        %v3248 = vpop.xlane.xlu0 %3247
        %3249 = vmax.xlane.f32.xlu0 %v2871
        %v3250 = vpop.xlane.xlu0 %3249
        %3251 = vmax.xlane.f32.xlu0 %v2872
        %v3252 = vpop.xlane.xlu0 %3251
        %3253 = vmax.xlane.f32.xlu0 %v2873
        %v3254 = vpop.xlane.xlu0 %3253
        %3255 = vmax.xlane.f32.xlu0 %v2874
        %v3256 = vpop.xlane.xlu0 %3255
        %3257 = vmax.xlane.f32.xlu0 %v2875
        %v3258 = vpop.xlane.xlu0 %3257
        %3259 = vmax.xlane.f32.xlu0 %v2876
        %v3260 = vpop.xlane.xlu0 %3259
        %v3261 = vmax.f32 %v2877, %v3006
        %v3262 = vmax.f32 %v2878, %v3008
        %v3263 = vmax.f32 %v2879, %v3010
        %v3264 = vmax.f32 %v2880, %v3012
        %v3265 = vmax.f32 %v2881, %v3014
        %v3266 = vmax.f32 %v2882, %v3016
        %v3267 = vmax.f32 %v2883, %v3018
        %v3268 = vmax.f32 %v2884, %v3020
        %v3269 = vmax.f32 %v2885, %v3022
        %v3270 = vmax.f32 %v2886, %v3024
        %v3271 = vmax.f32 %v2887, %v3026
        %v3272 = vmax.f32 %v2888, %v3028
        %v3273 = vmax.f32 %v2889, %v3030
        %v3274 = vmax.f32 %v2890, %v3032
        %v3275 = vmax.f32 %v2891, %v3034
        %v3276 = vmax.f32 %v2892, %v3036
        %v3277 = vmax.f32 %v2893, %v3038
        %v3278 = vmax.f32 %v2894, %v3040
        %v3279 = vmax.f32 %v2895, %v3042
        %v3280 = vmax.f32 %v2896, %v3044
        %v3281 = vmax.f32 %v2897, %v3046
        %v3282 = vmax.f32 %v2898, %v3048
        %v3283 = vmax.f32 %v2899, %v3050
        %v3284 = vmax.f32 %v2900, %v3052
        %v3285 = vmax.f32 %v2901, %v3054
        %v3286 = vmax.f32 %v2902, %v3056
        %v3287 = vmax.f32 %v2903, %v3058
        %v3288 = vmax.f32 %v2904, %v3060
        %v3289 = vmax.f32 %v2905, %v3062
        %v3290 = vmax.f32 %v2906, %v3064
        %v3291 = vmax.f32 %v2907, %v3066
        %v3292 = vmax.f32 %v2908, %v3068
        %v3293 = vmax.f32 %v2909, %v3070
        %v3294 = vmax.f32 %v2910, %v3072
        %v3295 = vmax.f32 %v2911, %v3074
        %v3296 = vmax.f32 %v2912, %v3076
        %v3297 = vmax.f32 %v2913, %v3078
        %v3298 = vmax.f32 %v2914, %v3080
        %v3299 = vmax.f32 %v2915, %v3082
        %v3300 = vmax.f32 %v2916, %v3084
        %v3301 = vmax.f32 %v2917, %v3086
        %v3302 = vmax.f32 %v2918, %v3088
        %v3303 = vmax.f32 %v2919, %v3090
        %v3304 = vmax.f32 %v2920, %v3092
        %v3305 = vmax.f32 %v2921, %v3094
        %v3306 = vmax.f32 %v2922, %v3096
        %v3307 = vmax.f32 %v2923, %v3098
        %v3308 = vmax.f32 %v2924, %v3100
        %v3309 = vmax.f32 %v2925, %v3102
        %v3310 = vmax.f32 %v2926, %v3104
        %v3311 = vmax.f32 %v2927, %v3106
        %v3312 = vmax.f32 %v2928, %v3108
        %v3313 = vmax.f32 %v2929, %v3110
        %v3314 = vmax.f32 %v2930, %v3112
        %v3315 = vmax.f32 %v2931, %v3114
        %v3316 = vmax.f32 %v2932, %v3116
        %v3317 = vmax.f32 %v2933, %v3118
        %v3318 = vmax.f32 %v2934, %v3120
        %v3319 = vmax.f32 %v2935, %v3122
        %v3320 = vmax.f32 %v2936, %v3124
        %v3321 = vmax.f32 %v2937, %v3126
        %v3322 = vmax.f32 %v2938, %v3128
        %v3323 = vmax.f32 %v2939, %v3130
        %v3324 = vmax.f32 %v2940, %v3132
        %v3325 = vmax.f32 %v2941, %v3134
        %v3326 = vmax.f32 %v2942, %v3136
        %v3327 = vmax.f32 %v2943, %v3138
        %v3328 = vmax.f32 %v2944, %v3140
        %v3329 = vmax.f32 %v2945, %v3142
        %v3330 = vmax.f32 %v2946, %v3144
        %v3331 = vmax.f32 %v2947, %v3146
        %v3332 = vmax.f32 %v2948, %v3148
        %v3333 = vmax.f32 %v2949, %v3150
        %v3334 = vmax.f32 %v2950, %v3152
        %v3335 = vmax.f32 %v2951, %v3154
        %v3336 = vmax.f32 %v2952, %v3156
        %v3337 = vmax.f32 %v2953, %v3158
        %v3338 = vmax.f32 %v2954, %v3160
        %v3339 = vmax.f32 %v2955, %v3162
        %v3340 = vmax.f32 %v2956, %v3164
        %v3341 = vmax.f32 %v2957, %v3166
        %v3342 = vmax.f32 %v2958, %v3168
        %v3343 = vmax.f32 %v2959, %v3170
        %v3344 = vmax.f32 %v2960, %v3172
        %v3345 = vmax.f32 %v2961, %v3174
        %v3346 = vmax.f32 %v2962, %v3176
        %v3347 = vmax.f32 %v2963, %v3178
        %v3348 = vmax.f32 %v2964, %v3180
        %v3349 = vmax.f32 %v2965, %v3182
        %v3350 = vmax.f32 %v2966, %v3184
        %v3351 = vmax.f32 %v2967, %v3186
        %v3352 = vmax.f32 %v2968, %v3188
        %v3353 = vmax.f32 %v2969, %v3190
        %v3354 = vmax.f32 %v2970, %v3192
        %v3355 = vmax.f32 %v2971, %v3194
        %v3356 = vmax.f32 %v2972, %v3196
        %v3357 = vmax.f32 %v2973, %v3198
        %v3358 = vmax.f32 %v2974, %v3200
        %v3359 = vmax.f32 %v2975, %v3202
        %v3360 = vmax.f32 %v2976, %v3204
        %v3361 = vmax.f32 %v2977, %v3206
        %v3362 = vmax.f32 %v2978, %v3208
        %v3363 = vmax.f32 %v2979, %v3210
        %v3364 = vmax.f32 %v2980, %v3212
        %v3365 = vmax.f32 %v2981, %v3214
        %v3366 = vmax.f32 %v2982, %v3216
        %v3367 = vmax.f32 %v2983, %v3218
        %v3368 = vmax.f32 %v2984, %v3220
        %v3369 = vmax.f32 %v2985, %v3222
        %v3370 = vmax.f32 %v2986, %v3224
        %v3371 = vmax.f32 %v2987, %v3226
        %v3372 = vmax.f32 %v2988, %v3228
        %v3373 = vmax.f32 %v2989, %v3230
        %v3374 = vmax.f32 %v2990, %v3232
        %v3375 = vmax.f32 %v2991, %v3234
        %v3376 = vmax.f32 %v2992, %v3236
        %v3377 = vmax.f32 %v2993, %v3238
        %v3378 = vmax.f32 %v2994, %v3240
        %v3379 = vmax.f32 %v2995, %v3242
        %v3380 = vmax.f32 %v2996, %v3244
        %v3381 = vmax.f32 %v2997, %v3246
        %v3382 = vmax.f32 %v2998, %v3248
        %v3383 = vmax.f32 %v2999, %v3250
        %v3384 = vmax.f32 %v3000, %v3252
        %v3385 = vmax.f32 %v3001, %v3254
        %v3386 = vmax.f32 %v3002, %v3256
        %v3387 = vmax.f32 %v3003, %v3258
        %v3388 = vmax.f32 %v3004, %v3260
        %vm3389 = vcmask 7168
        %3390 = vst.msk [vmem:[%s316] sm:$0xff] %vm3389, %v3261
        %3391 = vst.msk [vmem:[%s316 + $0x8] sm:$0xff] %vm3389, %v3262
        %3392 = vst.msk [vmem:[%s316 + $0x10] sm:$0xff] %vm3389, %v3263
        %3393 = vst.msk [vmem:[%s316 + $0x18] sm:$0xff] %vm3389, %v3264
        %3394 = vst.msk [vmem:[%s316 + $0x20] sm:$0xff] %vm3389, %v3265
        %3395 = vst.msk [vmem:[%s316 + $0x28] sm:$0xff] %vm3389, %v3266
        %3396 = vst.msk [vmem:[%s316 + $0x30] sm:$0xff] %vm3389, %v3267
        %3397 = vst.msk [vmem:[%s316 + $0x38] sm:$0xff] %vm3389, %v3268
        %3398 = vst.msk [vmem:[%s316 + $0x40] sm:$0xff] %vm3389, %v3269
        %3399 = vst.msk [vmem:[%s316 + $0x48] sm:$0xff] %vm3389, %v3270
        %3400 = vst.msk [vmem:[%s316 + $0x50] sm:$0xff] %vm3389, %v3271
        %3401 = vst.msk [vmem:[%s316 + $0x58] sm:$0xff] %vm3389, %v3272
        %3402 = vst.msk [vmem:[%s316 + $0x60] sm:$0xff] %vm3389, %v3273
        %3403 = vst.msk [vmem:[%s316 + $0x68] sm:$0xff] %vm3389, %v3274
        %3404 = vst.msk [vmem:[%s316 + $0x70] sm:$0xff] %vm3389, %v3275
        %3405 = vst.msk [vmem:[%s316 + $0x78] sm:$0xff] %vm3389, %v3276
        %3406 = vst.msk [vmem:[%s316 + $0x80] sm:$0xff] %vm3389, %v3277
        %3407 = vst.msk [vmem:[%s316 + $0x88] sm:$0xff] %vm3389, %v3278
        %3408 = vst.msk [vmem:[%s316 + $0x90] sm:$0xff] %vm3389, %v3279
        %3409 = vst.msk [vmem:[%s316 + $0x98] sm:$0xff] %vm3389, %v3280
        %3410 = vst.msk [vmem:[%s316 + $0xa0] sm:$0xff] %vm3389, %v3281
        %3411 = vst.msk [vmem:[%s316 + $0xa8] sm:$0xff] %vm3389, %v3282
        %3412 = vst.msk [vmem:[%s316 + $0xb0] sm:$0xff] %vm3389, %v3283
        %3413 = vst.msk [vmem:[%s316 + $0xb8] sm:$0xff] %vm3389, %v3284
        %3414 = vst.msk [vmem:[%s316 + $0xc0] sm:$0xff] %vm3389, %v3285
        %3415 = vst.msk [vmem:[%s316 + $0xc8] sm:$0xff] %vm3389, %v3286
        %3416 = vst.msk [vmem:[%s316 + $0xd0] sm:$0xff] %vm3389, %v3287
        %3417 = vst.msk [vmem:[%s316 + $0xd8] sm:$0xff] %vm3389, %v3288
        %3418 = vst.msk [vmem:[%s316 + $0xe0] sm:$0xff] %vm3389, %v3289
        %3419 = vst.msk [vmem:[%s316 + $0xe8] sm:$0xff] %vm3389, %v3290
        %3420 = vst.msk [vmem:[%s316 + $0xf0] sm:$0xff] %vm3389, %v3291
        %3421 = vst.msk [vmem:[%s316 + $0xf8] sm:$0xff] %vm3389, %v3292
        %3422 = vst.msk [vmem:[%s316 + $0x100] sm:$0xff] %vm3389, %v3293
        %3423 = vst.msk [vmem:[%s316 + $0x108] sm:$0xff] %vm3389, %v3294
        %3424 = vst.msk [vmem:[%s316 + $0x110] sm:$0xff] %vm3389, %v3295
        %3425 = vst.msk [vmem:[%s316 + $0x118] sm:$0xff] %vm3389, %v3296
        %3426 = vst.msk [vmem:[%s316 + $0x120] sm:$0xff] %vm3389, %v3297
        %3427 = vst.msk [vmem:[%s316 + $0x128] sm:$0xff] %vm3389, %v3298
        %3428 = vst.msk [vmem:[%s316 + $0x130] sm:$0xff] %vm3389, %v3299
        %3429 = vst.msk [vmem:[%s316 + $0x138] sm:$0xff] %vm3389, %v3300
        %3430 = vst.msk [vmem:[%s316 + $0x140] sm:$0xff] %vm3389, %v3301
        %3431 = vst.msk [vmem:[%s316 + $0x148] sm:$0xff] %vm3389, %v3302
        %3432 = vst.msk [vmem:[%s316 + $0x150] sm:$0xff] %vm3389, %v3303
        %3433 = vst.msk [vmem:[%s316 + $0x158] sm:$0xff] %vm3389, %v3304
        %3434 = vst.msk [vmem:[%s316 + $0x160] sm:$0xff] %vm3389, %v3305
        %3435 = vst.msk [vmem:[%s316 + $0x168] sm:$0xff] %vm3389, %v3306
        %3436 = vst.msk [vmem:[%s316 + $0x170] sm:$0xff] %vm3389, %v3307
        %3437 = vst.msk [vmem:[%s316 + $0x178] sm:$0xff] %vm3389, %v3308
        %3438 = vst.msk [vmem:[%s316 + $0x180] sm:$0xff] %vm3389, %v3309
        %3439 = vst.msk [vmem:[%s316 + $0x188] sm:$0xff] %vm3389, %v3310
        %3440 = vst.msk [vmem:[%s316 + $0x190] sm:$0xff] %vm3389, %v3311
        %3441 = vst.msk [vmem:[%s316 + $0x198] sm:$0xff] %vm3389, %v3312
        %3442 = vst.msk [vmem:[%s316 + $0x1a0] sm:$0xff] %vm3389, %v3313
        %3443 = vst.msk [vmem:[%s316 + $0x1a8] sm:$0xff] %vm3389, %v3314
        %3444 = vst.msk [vmem:[%s316 + $0x1b0] sm:$0xff] %vm3389, %v3315
        %3445 = vst.msk [vmem:[%s316 + $0x1b8] sm:$0xff] %vm3389, %v3316
        %3446 = vst.msk [vmem:[%s316 + $0x1c0] sm:$0xff] %vm3389, %v3317
        %3447 = vst.msk [vmem:[%s316 + $0x1c8] sm:$0xff] %vm3389, %v3318
        %3448 = vst.msk [vmem:[%s316 + $0x1d0] sm:$0xff] %vm3389, %v3319
        %3449 = vst.msk [vmem:[%s316 + $0x1d8] sm:$0xff] %vm3389, %v3320
        %3450 = vst.msk [vmem:[%s316 + $0x1e0] sm:$0xff] %vm3389, %v3321
        %3451 = vst.msk [vmem:[%s316 + $0x1e8] sm:$0xff] %vm3389, %v3322
        %3452 = vst.msk [vmem:[%s316 + $0x1f0] sm:$0xff] %vm3389, %v3323
        %3453 = vst.msk [vmem:[%s316 + $0x1f8] sm:$0xff] %vm3389, %v3324
        %3454 = vst.msk [vmem:[%s316 + $0x200] sm:$0xff] %vm3389, %v3325
        %3455 = vst.msk [vmem:[%s316 + $0x208] sm:$0xff] %vm3389, %v3326
        %3456 = vst.msk [vmem:[%s316 + $0x210] sm:$0xff] %vm3389, %v3327
        %3457 = vst.msk [vmem:[%s316 + $0x218] sm:$0xff] %vm3389, %v3328
        %3458 = vst.msk [vmem:[%s316 + $0x220] sm:$0xff] %vm3389, %v3329
        %3459 = vst.msk [vmem:[%s316 + $0x228] sm:$0xff] %vm3389, %v3330
        %3460 = vst.msk [vmem:[%s316 + $0x230] sm:$0xff] %vm3389, %v3331
        %3461 = vst.msk [vmem:[%s316 + $0x238] sm:$0xff] %vm3389, %v3332
        %3462 = vst.msk [vmem:[%s316 + $0x240] sm:$0xff] %vm3389, %v3333
        %3463 = vst.msk [vmem:[%s316 + $0x248] sm:$0xff] %vm3389, %v3334
        %3464 = vst.msk [vmem:[%s316 + $0x250] sm:$0xff] %vm3389, %v3335
        %3465 = vst.msk [vmem:[%s316 + $0x258] sm:$0xff] %vm3389, %v3336
        %3466 = vst.msk [vmem:[%s316 + $0x260] sm:$0xff] %vm3389, %v3337
        %3467 = vst.msk [vmem:[%s316 + $0x268] sm:$0xff] %vm3389, %v3338
        %3468 = vst.msk [vmem:[%s316 + $0x270] sm:$0xff] %vm3389, %v3339
        %3469 = vst.msk [vmem:[%s316 + $0x278] sm:$0xff] %vm3389, %v3340
        %3470 = vst.msk [vmem:[%s316 + $0x280] sm:$0xff] %vm3389, %v3341
        %3471 = vst.msk [vmem:[%s316 + $0x288] sm:$0xff] %vm3389, %v3342
        %3472 = vst.msk [vmem:[%s316 + $0x290] sm:$0xff] %vm3389, %v3343
        %3473 = vst.msk [vmem:[%s316 + $0x298] sm:$0xff] %vm3389, %v3344
        %3474 = vst.msk [vmem:[%s316 + $0x2a0] sm:$0xff] %vm3389, %v3345
        %3475 = vst.msk [vmem:[%s316 + $0x2a8] sm:$0xff] %vm3389, %v3346
        %3476 = vst.msk [vmem:[%s316 + $0x2b0] sm:$0xff] %vm3389, %v3347
        %3477 = vst.msk [vmem:[%s316 + $0x2b8] sm:$0xff] %vm3389, %v3348
        %3478 = vst.msk [vmem:[%s316 + $0x2c0] sm:$0xff] %vm3389, %v3349
        %3479 = vst.msk [vmem:[%s316 + $0x2c8] sm:$0xff] %vm3389, %v3350
        %3480 = vst.msk [vmem:[%s316 + $0x2d0] sm:$0xff] %vm3389, %v3351
        %3481 = vst.msk [vmem:[%s316 + $0x2d8] sm:$0xff] %vm3389, %v3352
        %3482 = vst.msk [vmem:[%s316 + $0x2e0] sm:$0xff] %vm3389, %v3353
        %3483 = vst.msk [vmem:[%s316 + $0x2e8] sm:$0xff] %vm3389, %v3354
        %3484 = vst.msk [vmem:[%s316 + $0x2f0] sm:$0xff] %vm3389, %v3355
        %3485 = vst.msk [vmem:[%s316 + $0x2f8] sm:$0xff] %vm3389, %v3356
        %3486 = vst.msk [vmem:[%s316 + $0x300] sm:$0xff] %vm3389, %v3357
        %3487 = vst.msk [vmem:[%s316 + $0x308] sm:$0xff] %vm3389, %v3358
        %3488 = vst.msk [vmem:[%s316 + $0x310] sm:$0xff] %vm3389, %v3359
        %3489 = vst.msk [vmem:[%s316 + $0x318] sm:$0xff] %vm3389, %v3360
        %3490 = vst.msk [vmem:[%s316 + $0x320] sm:$0xff] %vm3389, %v3361
        %3491 = vst.msk [vmem:[%s316 + $0x328] sm:$0xff] %vm3389, %v3362
        %3492 = vst.msk [vmem:[%s316 + $0x330] sm:$0xff] %vm3389, %v3363
        %3493 = vst.msk [vmem:[%s316 + $0x338] sm:$0xff] %vm3389, %v3364
        %3494 = vst.msk [vmem:[%s316 + $0x340] sm:$0xff] %vm3389, %v3365
        %3495 = vst.msk [vmem:[%s316 + $0x348] sm:$0xff] %vm3389, %v3366
        %3496 = vst.msk [vmem:[%s316 + $0x350] sm:$0xff] %vm3389, %v3367
        %3497 = vst.msk [vmem:[%s316 + $0x358] sm:$0xff] %vm3389, %v3368
        %3498 = vst.msk [vmem:[%s316 + $0x360] sm:$0xff] %vm3389, %v3369
        %3499 = vst.msk [vmem:[%s316 + $0x368] sm:$0xff] %vm3389, %v3370
        %3500 = vst.msk [vmem:[%s316 + $0x370] sm:$0xff] %vm3389, %v3371
        %3501 = vst.msk [vmem:[%s316 + $0x378] sm:$0xff] %vm3389, %v3372
        %3502 = vst.msk [vmem:[%s316 + $0x380] sm:$0xff] %vm3389, %v3373
        %3503 = vst.msk [vmem:[%s316 + $0x388] sm:$0xff] %vm3389, %v3374
        %3504 = vst.msk [vmem:[%s316 + $0x390] sm:$0xff] %vm3389, %v3375
        %3505 = vst.msk [vmem:[%s316 + $0x398] sm:$0xff] %vm3389, %v3376
        %3506 = vst.msk [vmem:[%s316 + $0x3a0] sm:$0xff] %vm3389, %v3377
        %3507 = vst.msk [vmem:[%s316 + $0x3a8] sm:$0xff] %vm3389, %v3378
        %3508 = vst.msk [vmem:[%s316 + $0x3b0] sm:$0xff] %vm3389, %v3379
        %3509 = vst.msk [vmem:[%s316 + $0x3b8] sm:$0xff] %vm3389, %v3380
        %3510 = vst.msk [vmem:[%s316 + $0x3c0] sm:$0xff] %vm3389, %v3381
        %3511 = vst.msk [vmem:[%s316 + $0x3c8] sm:$0xff] %vm3389, %v3382
        %3512 = vst.msk [vmem:[%s316 + $0x3d0] sm:$0xff] %vm3389, %v3383
        %3513 = vst.msk [vmem:[%s316 + $0x3d8] sm:$0xff] %vm3389, %v3384
        %3514 = vst.msk [vmem:[%s316 + $0x3e0] sm:$0xff] %vm3389, %v3385
        %3515 = vst.msk [vmem:[%s316 + $0x3e8] sm:$0xff] %vm3389, %v3386
        %3516 = vst.msk [vmem:[%s316 + $0x3f0] sm:$0xff] %vm3389, %v3387
        %3517 = vst.msk [vmem:[%s316 + $0x3f8] sm:$0xff] %vm3389, %v3388
        %p3518 = scmp.lt.s32.totalorder %s23, 1
        %s3519 = scalar_select %p3518, %s23, 1
        %s3520 = smul.addr %s3519, 128
        %s3521 = smul.addr %s3520, 8
        %s3522 = scalar_lea.vmem %s7, %s3521
        // Predicated region
        $region57: #{pointnet_seg_forward.2} parent=47 // pred_check
          %p3523 = pneg %p203
        $region58: #{pointnet_seg_forward.2} parent=47 // pred_check_branch
          %3525 = sbr.rel (%p3523) target = $region60
        $region59: #{pointnet_seg_forward.2} parent=47 // pred_region
          _
        $region60: #{pointnet_seg_forward.2} parent=47 // pred_fallthru
          _
      $region48: #{pointnet_seg_forward.2} parent=5 // pred_fallthru
        _
      %p3526 = scmp.le.s32.totalorder 2, %s14
      // Predicated region
      $region61: #{pointnet_seg_forward.2} parent=5 // pred_check
        %p3527 = pneg %p3526
      $region62: #{pointnet_seg_forward.2} parent=5 // pred_check_branch
        %3529 = sbr.rel (%p3527) target = $region64
      $region63: #{pointnet_seg_forward.2} parent=5 // pred_region
        %s3530 = ssub.s32 %s14, 2
        // Predicated region
        $region65: #{pointnet_seg_forward.2} parent=63 // pred_check
          %p3531 = pneg %p209
        $region66: #{pointnet_seg_forward.2} parent=63 // pred_check_branch
          %3533 = sbr.rel (%p3531) target = $region68
        $region67: #{pointnet_seg_forward.2} parent=63 // pred_region
          %p3534 = scmp.lt.s32.totalorder %s25, 1
          %s3535 = scalar_select %p3534, %s25, 1
          %s3536 = smul.addr %s3535, 128
          %s3537 = smul.addr %s3536, 8
          %s3538 = scalar_lea.vmem %s7, %s3537
        $region68: #{pointnet_seg_forward.2} parent=63 // pred_fallthru
          _
      $region64: #{pointnet_seg_forward.2} parent=5 // pred_fallthru
        _
    $region6: #{pointnet_seg_forward.2} parent=1 // loop_footer
      %s18 = sadd.s32 1, %s14
    $region7: #{pointnet_seg_forward.2} parent=1 // loop_footer_branch
      %13 = sbr.rel target = $region3
    $region8: #{pointnet_seg_forward.2} parent=1 // loop_exit
      _
    %3539 = vsyncpa [#allocation3], 1
    %s3540 = scalar_lea.sflag [#allocation3], 1
    %3541 = vsyncpa %s3540, 1

</llo_original>
